<compile_context>
chip_gen: v7x
topology: tpu7x:2x2x1
jax: 0.10.0
libtpu: 0.0.40
codegen_flags: <defaults>
</compile_context>

<pallas_src>
import functools

import jax
import jax.numpy as jnp
from jax import lax
from jax.experimental import pallas as pl
from jax.experimental.pallas import tpu as pltpu


HP = 128   # per-gate lane-padded width (one full vreg lane group per gate)
BP = 8     # sublane-padded batch (one full vreg sublane group per timestep)


def lstm_attn_kernel(
    x_ref,        # (T*BP, D)    bf16  time-major, rows t*BP..t*BP+BP-1 are step t
    wx_ref,       # (D, 4*HP)    bf16  fused+padded input->gate weights (i|f|g|o)
    u_ref,        # (HP, 4*HP)   bf16  fused+padded hidden->gate weights
    b_ref,        # (1, 4*HP)    f32   fused combined bias (b_ih + b_hh)
    wdec_ref,     # (HP, O)      f32   decoder weight (rows >= H are zero)
    bdec_ref,     # (1, O)       f32
    out_ref,      # (BP, O)      f32
    *, T, BP, HP,
):
    # --- hoisted input projection: one big MXU matmul, off the serial chain ---
    xg = jnp.dot(x_ref[...], wx_ref[...],
                 preferred_element_type=jnp.float32) + b_ref[...]     # (T*BP, 4*HP)

    u = u_ref[...]                                                    # (HP, 4*HP) bf16

    h = jnp.zeros((BP, HP), jnp.float32)
    c = jnp.zeros((BP, HP), jnp.float32)
    attx = jnp.zeros((BP, HP), jnp.float32)

    # --- serial LSTM recurrence, statically unrolled (T is small & static) ---
    for t in range(T):
        # (BP, 4*HP) lane-dense gate pre-activations for this timestep.
        g = xg[t * BP:(t + 1) * BP, :] + jnp.dot(
            h.astype(jnp.bfloat16), u, preferred_element_type=jnp.float32)
        # Single EUP launch over all four gates; g-gate columns were pre-scaled
        # by 2 on the host so tanh(x) = 2*sigmoid(2x) - 1 is recovered exactly.
        s = jax.nn.sigmoid(g)
        i = s[:, 0 * HP:1 * HP]
        f = s[:, 1 * HP:2 * HP]
        gg = 2.0 * s[:, 2 * HP:3 * HP] - 1.0
        o = s[:, 3 * HP:4 * HP]
        c = f * c + i * gg
        h = o * jnp.tanh(c)
        attx = attx + h          # softmax over size-1 dim == 1  =>  attX = sum_t h_t

    # --- decoder ---
    dec = jnp.dot(attx, wdec_ref[...],
                  preferred_element_type=jnp.float32) + bdec_ref[...]
    out_ref[...] = jax.nn.sigmoid(dec)


def init_params(key, D, H, O):
    ks = jax.random.split(key, 8)
    k = 1.0 / jnp.sqrt(jnp.float32(H))

    def u(kk, shape, bound):
        return jax.random.uniform(kk, shape, jnp.float32, -bound, bound)

    return dict(
        hidden_dim=H, output_dim=O,
        weight_ih=u(ks[0], (4 * H, D), k),   # nn.LSTM weight_ih_l0 (i|f|g|o)
        weight_hh=u(ks[1], (4 * H, H), k),   # nn.LSTM weight_hh_l0
        bias_ih=u(ks[2], (4 * H,), k),
        bias_hh=u(ks[3], (4 * H,), k),
        fc1_w=u(ks[4], (1, H), k),           # nn.Linear(H, 1)  (dead path, kept for ref)
        fc1_b=u(ks[5], (1,), k),
        dec_w=u(ks[6], (O, H), k),           # nn.Linear(H, O)
        dec_b=u(ks[7], (O,), k),
    )


def prepare_kernel_params(params):
    """One-time weight prep: gate fusion, lane padding, bf16 casts, tanh pre-scale.

    Hoisted out of the per-call path so the jitted forward does no weight work.
    """
    H = params["hidden_dim"]
    O = params["output_dim"]
    assert H <= HP, (H, HP)
    # The mask/softmax path is dropped only because fc1's output dim is 1
    # (softmax over a size-1 axis is identically 1).  Guard against changes.
    assert params["fc1_w"].shape[0] == 1, (
        "fc1 output dim != 1: fc1/mask/softmax path is no longer degenerate")

    w_ih = params["weight_ih"]                       # (4H, D), gate order i|f|g|o
    w_hh = params["weight_hh"]                       # (4H, H)
    bias = params["bias_ih"] + params["bias_hh"]     # (4H,)
    D = w_ih.shape[1]

    # tanh(x) = 2*sigmoid(2x) - 1  =>  pre-scale the g-gate (index 2) by 2.
    gate_scale = (1.0, 1.0, 2.0, 1.0)

    def fuse_pad(blocks_by_gate, rows):
        """blocks_by_gate[k]: (rows, H) -> concat of 4 (rows, HP) zero-padded blocks."""
        out = []
        for k, blk in enumerate(blocks_by_gate):
            padded = jnp.zeros((rows, HP), jnp.float32).at[:, :H].set(
                blk * gate_scale[k])
            out.append(padded)
        return jnp.concatenate(out, axis=1)          # (rows, 4*HP)

    wx = fuse_pad([w_ih[k * H:(k + 1) * H, :].T for k in range(4)], D)
    wx = wx.astype(jnp.bfloat16)                                     # (D, 4*HP)

    u = fuse_pad([w_hh[k * H:(k + 1) * H, :].T for k in range(4)], H)
    u = jnp.zeros((HP, 4 * HP), jnp.float32).at[:H, :].set(u)
    u = u.astype(jnp.bfloat16)                                       # (HP, 4*HP)

    b = fuse_pad([bias[k * H:(k + 1) * H].reshape(1, H) for k in range(4)], 1)
    b = b.astype(jnp.float32)                                        # (1, 4*HP)

    wdec = jnp.zeros((HP, O), jnp.float32).at[:H, :].set(
        params["dec_w"].T.astype(jnp.float32))                       # (HP, O)
    bdec = params["dec_b"].reshape(1, O).astype(jnp.float32)         # (1, O)

    return dict(wx=wx, u=u, b=b, wdec=wdec, bdec=bdec)


@jax.jit
def lstm_forward(x, mask, kparams):
    """x: (B, T, D), mask: (B, T, 1) — PyTorch batch-first layout.

    `mask` is accepted for API parity but mathematically cancels out
    (softmax over a size-1 axis is identically 1), so it is not used.
    """
    del mask
    B, T, D = x.shape
    O = kparams["bdec"].shape[1]
    assert B <= BP, (B, BP)

    # Time-major, batch zero-padded to a full sublane group, bf16, flattened to
    # (T*BP, D): the hoisted input projection is one matmul and every per-step
    # slice in the kernel is whole-vreg.  Fuses with the pallas_call under jit.
    xt = jnp.zeros((T, BP, D), jnp.bfloat16).at[:, :B, :].set(
        jnp.transpose(x, (1, 0, 2)).astype(jnp.bfloat16)).reshape(T * BP, D)

    inputs = (xt, kparams["wx"], kparams["u"], kparams["b"],
              kparams["wdec"], kparams["bdec"])

    def full_spec(a):
        return pl.BlockSpec(a.shape, lambda i: (0,) * a.ndim)

    kernel = functools.partial(lstm_attn_kernel, T=T, BP=BP, HP=HP)

    out = pl.pallas_call(
        kernel,
        out_shape=jax.ShapeDtypeStruct((BP, O), jnp.float32),
        grid_spec=pltpu.PrefetchScalarGridSpec(
            num_scalar_prefetch=0,
            grid=(1,),
            in_specs=[full_spec(a) for a in inputs],
            out_specs=pl.BlockSpec((BP, O), lambda i: (0, 0)),
        ),
        compiler_params=pltpu.CompilerParams(dimension_semantics=("arbitrary",)),
    )(*inputs)
    return out[:B]


def reference_forward(x, mask, params):
    """Pure-JAX reference matching the full PyTorch forward semantics
    (including the mathematically-dead fc1 / mask / softmax path)."""
    B, T, D = x.shape
    H = params["hidden_dim"]
    w_ih, w_hh = params["weight_ih"], params["weight_hh"]
    b = params["bias_ih"] + params["bias_hh"]

    def cell(carry, x_t):
        h, c = carry
        g = x_t @ w_ih.T + h @ w_hh.T + b
        i = jax.nn.sigmoid(g[:, 0:H])
        f = jax.nn.sigmoid(g[:, H:2 * H])
        gg = jnp.tanh(g[:, 2 * H:3 * H])
        o = jax.nn.sigmoid(g[:, 3 * H:4 * H])
        c = f * c + i * gg
        h = o * jnp.tanh(c)
        return (h, c), h

    init = (jnp.zeros((B, H), jnp.float32), jnp.zeros((B, H), jnp.float32))
    _, hs = lax.scan(cell, init, jnp.transpose(x, (1, 0, 2)))
    out = jnp.transpose(hs, (1, 0, 2))                                 # (B, T, H)
    hidden = out @ params["fc1_w"].T + params["fc1_b"]                 # (B, T, 1)
    hidden = hidden * mask
    att = jax.nn.softmax(hidden, axis=2)                               # ones (size-1 dim)
    attX = jnp.squeeze(jnp.matmul(jnp.transpose(out, (0, 2, 1)), att), axis=-1)
    return jax.nn.sigmoid(attX @ params["dec_w"].T + params["dec_b"])


if __name__ == "__main__":
    B, T, D, H, O = 2, 8, 1024, 20, 5    # input_dim=1024, hidden_dim=20, output_dim=5
    key = jax.random.PRNGKey(0)
    kparam, kx, km = jax.random.split(key, 3)
    params = init_params(kparam, D, H, O)
    kernel_params = prepare_kernel_params(params)   # one-time weight prep
    x = jax.random.normal(kx, (B, T, D), jnp.float32)
    mask = (jax.random.uniform(km, (B, T, 1)) > 0.3).astype(jnp.float32)

    out = lstm_forward(x, mask, kernel_params)
    out = jax.block_until_ready(out)
    assert out.shape == (B, O), out.shape

    ref = reference_forward(x, mask, params)
    # 2e-2 tolerance absorbs bf16 rounding of the hoisted input projection and
    # the bf16 recurrent operands (f32 MXU accumulation keeps the output error
    # well below 1e-2).
    assert jnp.allclose(out, ref, atol=2e-2, rtol=2e-2), (out, ref)

    print("KERNEL_OK")
</pallas_src>

<mosaic_0001>
module attributes {stable_mosaic.version = 11 : i64} {
  func.func @lstm_attn_kernel(%arg0: i32, %arg1: memref<64x1024xbf16, #tpu.memory_space<vmem>>, %arg2: memref<1024x512xbf16, #tpu.memory_space<vmem>>, %arg3: memref<128x512xbf16, #tpu.memory_space<vmem>>, %arg4: memref<1x512xf32, #tpu.memory_space<vmem>>, %arg5: memref<128x5xf32, #tpu.memory_space<vmem>>, %arg6: memref<1x5xf32, #tpu.memory_space<vmem>>, %arg7: memref<8x5xf32, #tpu.memory_space<vmem>>) attributes {dimension_semantics = [#tpu.dimension_semantics<arbitrary>], iteration_bounds = array<i64: 1>, scalar_prefetch = 0 : i64, scratch_operands = 0 : i64, tpu.core_type = #tpu.core_type<tc>, window_params = [{pipeline_mode = #tpu.pipeline_mode<synchronous>, transform_indices = @transform_0, window_bounds = array<i64: 64, 1024>}, {pipeline_mode = #tpu.pipeline_mode<synchronous>, transform_indices = @transform_1, window_bounds = array<i64: 1024, 512>}, {pipeline_mode = #tpu.pipeline_mode<synchronous>, transform_indices = @transform_2, window_bounds = array<i64: 128, 512>}, {pipeline_mode = #tpu.pipeline_mode<synchronous>, transform_indices = @transform_3, window_bounds = array<i64: 1, 512>}, {pipeline_mode = #tpu.pipeline_mode<synchronous>, transform_indices = @transform_4, window_bounds = array<i64: 128, 5>}, {pipeline_mode = #tpu.pipeline_mode<synchronous>, transform_indices = @transform_5, window_bounds = array<i64: 1, 5>}, {pipeline_mode = #tpu.pipeline_mode<synchronous>, transform_indices = @transform_6, window_bounds = array<i64: 8, 5>}]} {
    %c0 = arith.constant 0 : index
    %c0_0 = arith.constant 0 : index
    %0 = vector.load %arg1[%c0, %c0_0] : memref<64x1024xbf16, #tpu.memory_space<vmem>>, vector<64x1024xbf16>
    %c0_1 = arith.constant 0 : index
    %c0_2 = arith.constant 0 : index
    %1 = vector.load %arg2[%c0_1, %c0_2] : memref<1024x512xbf16, #tpu.memory_space<vmem>>, vector<1024x512xbf16>
    %cst = arith.constant dense<0.000000e+00> : vector<64x512xf32>
    %2 = tpu.matmul %0, %1, %cst {dimension_numbers = #tpu.dot_dimension_numbers<[1], [0], [0], [1], [0, 0, 1, 1], [], []>} : vector<64x1024xbf16>, vector<1024x512xbf16>, vector<64x512xf32> -> vector<64x512xf32>
    %c0_3 = arith.constant 0 : index
    %c0_4 = arith.constant 0 : index
    %3 = vector.load %arg4[%c0_3, %c0_4] : memref<1x512xf32, #tpu.memory_space<vmem>>, vector<1x512xf32>
    %4 = vector.broadcast %3 : vector<1x512xf32> to vector<64x512xf32>
    %5 = arith.addf %2, %4 : vector<64x512xf32>
    %c0_5 = arith.constant 0 : index
    %c0_6 = arith.constant 0 : index
    %6 = vector.load %arg3[%c0_5, %c0_6] : memref<128x512xbf16, #tpu.memory_space<vmem>>, vector<128x512xbf16>
    %cst_7 = arith.constant 0.000000e+00 : f32
    %7 = vector.broadcast %cst_7 : f32 to vector<8x128xf32>
    %cst_8 = arith.constant 0.000000e+00 : f32
    %8 = vector.broadcast %cst_8 : f32 to vector<8x128xf32>
    %cst_9 = arith.constant 0.000000e+00 : f32
    %9 = vector.broadcast %cst_9 : f32 to vector<8x128xf32>
    %10 = vector.extract_strided_slice %5 {offsets = [0, 0], sizes = [8, 512], strides = [1, 1]} : vector<64x512xf32> to vector<8x512xf32>
    %11 = arith.truncf %7 : vector<8x128xf32> to vector<8x128xbf16>
    %cst_10 = arith.constant dense<0.000000e+00> : vector<8x512xf32>
    %12 = tpu.matmul %11, %6, %cst_10 {dimension_numbers = #tpu.dot_dimension_numbers<[1], [0], [0], [1], [0, 0, 1, 1], [], []>} : vector<8x128xbf16>, vector<128x512xbf16>, vector<8x512xf32> -> vector<8x512xf32>
    %13 = arith.addf %10, %12 : vector<8x512xf32>
    %14 = arith.negf %13 : vector<8x512xf32>
    %15 = math.exp %14 : vector<8x512xf32>
    %cst_11 = arith.constant 1.000000e+00 : f32
    %16 = vector.broadcast %cst_11 : f32 to vector<8x512xf32>
    %17 = arith.addf %16, %15 : vector<8x512xf32>
    %18 = arith.divf %16, %17 : vector<8x512xf32>
    %19 = vector.extract_strided_slice %18 {offsets = [0, 0], sizes = [8, 128], strides = [1, 1]} : vector<8x512xf32> to vector<8x128xf32>
    %20 = vector.extract_strided_slice %18 {offsets = [0, 128], sizes = [8, 128], strides = [1, 1]} : vector<8x512xf32> to vector<8x128xf32>
    %21 = vector.extract_strided_slice %18 {offsets = [0, 256], sizes = [8, 128], strides = [1, 1]} : vector<8x512xf32> to vector<8x128xf32>
    %cst_12 = arith.constant 2.000000e+00 : f32
    %22 = vector.broadcast %cst_12 : f32 to vector<8x128xf32>
    %23 = arith.mulf %22, %21 : vector<8x128xf32>
    %cst_13 = arith.constant 1.000000e+00 : f32
    %24 = vector.broadcast %cst_13 : f32 to vector<8x128xf32>
    %25 = arith.subf %23, %24 : vector<8x128xf32>
    %26 = vector.extract_strided_slice %18 {offsets = [0, 384], sizes = [8, 128], strides = [1, 1]} : vector<8x512xf32> to vector<8x128xf32>
    %27 = arith.mulf %20, %8 : vector<8x128xf32>
    %28 = arith.mulf %19, %25 : vector<8x128xf32>
    %29 = arith.addf %27, %28 : vector<8x128xf32>
    %30 = math.tanh %29 : vector<8x128xf32>
    %31 = arith.mulf %26, %30 : vector<8x128xf32>
    %32 = arith.addf %9, %31 : vector<8x128xf32>
    %33 = vector.extract_strided_slice %5 {offsets = [8, 0], sizes = [8, 512], strides = [1, 1]} : vector<64x512xf32> to vector<8x512xf32>
    %34 = arith.truncf %31 : vector<8x128xf32> to vector<8x128xbf16>
    %cst_14 = arith.constant dense<0.000000e+00> : vector<8x512xf32>
    %35 = tpu.matmul %34, %6, %cst_14 {dimension_numbers = #tpu.dot_dimension_numbers<[1], [0], [0], [1], [0, 0, 1, 1], [], []>} : vector<8x128xbf16>, vector<128x512xbf16>, vector<8x512xf32> -> vector<8x512xf32>
    %36 = arith.addf %33, %35 : vector<8x512xf32>
    %37 = arith.negf %36 : vector<8x512xf32>
    %38 = math.exp %37 : vector<8x512xf32>
    %cst_15 = arith.constant 1.000000e+00 : f32
    %39 = vector.broadcast %cst_15 : f32 to vector<8x512xf32>
    %40 = arith.addf %39, %38 : vector<8x512xf32>
    %41 = arith.divf %39, %40 : vector<8x512xf32>
    %42 = vector.extract_strided_slice %41 {offsets = [0, 0], sizes = [8, 128], strides = [1, 1]} : vector<8x512xf32> to vector<8x128xf32>
    %43 = vector.extract_strided_slice %41 {offsets = [0, 128], sizes = [8, 128], strides = [1, 1]} : vector<8x512xf32> to vector<8x128xf32>
    %44 = vector.extract_strided_slice %41 {offsets = [0, 256], sizes = [8, 128], strides = [1, 1]} : vector<8x512xf32> to vector<8x128xf32>
    %cst_16 = arith.constant 2.000000e+00 : f32
    %45 = vector.broadcast %cst_16 : f32 to vector<8x128xf32>
    %46 = arith.mulf %45, %44 : vector<8x128xf32>
    %cst_17 = arith.constant 1.000000e+00 : f32
    %47 = vector.broadcast %cst_17 : f32 to vector<8x128xf32>
    %48 = arith.subf %46, %47 : vector<8x128xf32>
    %49 = vector.extract_strided_slice %41 {offsets = [0, 384], sizes = [8, 128], strides = [1, 1]} : vector<8x512xf32> to vector<8x128xf32>
    %50 = arith.mulf %43, %29 : vector<8x128xf32>
    %51 = arith.mulf %42, %48 : vector<8x128xf32>
    %52 = arith.addf %50, %51 : vector<8x128xf32>
    %53 = math.tanh %52 : vector<8x128xf32>
    %54 = arith.mulf %49, %53 : vector<8x128xf32>
    %55 = arith.addf %32, %54 : vector<8x128xf32>
    %56 = vector.extract_strided_slice %5 {offsets = [16, 0], sizes = [8, 512], strides = [1, 1]} : vector<64x512xf32> to vector<8x512xf32>
    %57 = arith.truncf %54 : vector<8x128xf32> to vector<8x128xbf16>
    %cst_18 = arith.constant dense<0.000000e+00> : vector<8x512xf32>
    %58 = tpu.matmul %57, %6, %cst_18 {dimension_numbers = #tpu.dot_dimension_numbers<[1], [0], [0], [1], [0, 0, 1, 1], [], []>} : vector<8x128xbf16>, vector<128x512xbf16>, vector<8x512xf32> -> vector<8x512xf32>
    %59 = arith.addf %56, %58 : vector<8x512xf32>
    %60 = arith.negf %59 : vector<8x512xf32>
    %61 = math.exp %60 : vector<8x512xf32>
    %cst_19 = arith.constant 1.000000e+00 : f32
    %62 = vector.broadcast %cst_19 : f32 to vector<8x512xf32>
    %63 = arith.addf %62, %61 : vector<8x512xf32>
    %64 = arith.divf %62, %63 : vector<8x512xf32>
    %65 = vector.extract_strided_slice %64 {offsets = [0, 0], sizes = [8, 128], strides = [1, 1]} : vector<8x512xf32> to vector<8x128xf32>
    %66 = vector.extract_strided_slice %64 {offsets = [0, 128], sizes = [8, 128], strides = [1, 1]} : vector<8x512xf32> to vector<8x128xf32>
    %67 = vector.extract_strided_slice %64 {offsets = [0, 256], sizes = [8, 128], strides = [1, 1]} : vector<8x512xf32> to vector<8x128xf32>
    %cst_20 = arith.constant 2.000000e+00 : f32
    %68 = vector.broadcast %cst_20 : f32 to vector<8x128xf32>
    %69 = arith.mulf %68, %67 : vector<8x128xf32>
    %cst_21 = arith.constant 1.000000e+00 : f32
    %70 = vector.broadcast %cst_21 : f32 to vector<8x128xf32>
    %71 = arith.subf %69, %70 : vector<8x128xf32>
    %72 = vector.extract_strided_slice %64 {offsets = [0, 384], sizes = [8, 128], strides = [1, 1]} : vector<8x512xf32> to vector<8x128xf32>
    %73 = arith.mulf %66, %52 : vector<8x128xf32>
    %74 = arith.mulf %65, %71 : vector<8x128xf32>
    %75 = arith.addf %73, %74 : vector<8x128xf32>
    %76 = math.tanh %75 : vector<8x128xf32>
    %77 = arith.mulf %72, %76 : vector<8x128xf32>
    %78 = arith.addf %55, %77 : vector<8x128xf32>
    %79 = vector.extract_strided_slice %5 {offsets = [24, 0], sizes = [8, 512], strides = [1, 1]} : vector<64x512xf32> to vector<8x512xf32>
    %80 = arith.truncf %77 : vector<8x128xf32> to vector<8x128xbf16>
    %cst_22 = arith.constant dense<0.000000e+00> : vector<8x512xf32>
    %81 = tpu.matmul %80, %6, %cst_22 {dimension_numbers = #tpu.dot_dimension_numbers<[1], [0], [0], [1], [0, 0, 1, 1], [], []>} : vector<8x128xbf16>, vector<128x512xbf16>, vector<8x512xf32> -> vector<8x512xf32>
    %82 = arith.addf %79, %81 : vector<8x512xf32>
    %83 = arith.negf %82 : vector<8x512xf32>
    %84 = math.exp %83 : vector<8x512xf32>
    %cst_23 = arith.constant 1.000000e+00 : f32
    %85 = vector.broadcast %cst_23 : f32 to vector<8x512xf32>
    %86 = arith.addf %85, %84 : vector<8x512xf32>
    %87 = arith.divf %85, %86 : vector<8x512xf32>
    %88 = vector.extract_strided_slice %87 {offsets = [0, 0], sizes = [8, 128], strides = [1, 1]} : vector<8x512xf32> to vector<8x128xf32>
    %89 = vector.extract_strided_slice %87 {offsets = [0, 128], sizes = [8, 128], strides = [1, 1]} : vector<8x512xf32> to vector<8x128xf32>
    %90 = vector.extract_strided_slice %87 {offsets = [0, 256], sizes = [8, 128], strides = [1, 1]} : vector<8x512xf32> to vector<8x128xf32>
    %cst_24 = arith.constant 2.000000e+00 : f32
    %91 = vector.broadcast %cst_24 : f32 to vector<8x128xf32>
    %92 = arith.mulf %91, %90 : vector<8x128xf32>
    %cst_25 = arith.constant 1.000000e+00 : f32
    %93 = vector.broadcast %cst_25 : f32 to vector<8x128xf32>
    %94 = arith.subf %92, %93 : vector<8x128xf32>
    %95 = vector.extract_strided_slice %87 {offsets = [0, 384], sizes = [8, 128], strides = [1, 1]} : vector<8x512xf32> to vector<8x128xf32>
    %96 = arith.mulf %89, %75 : vector<8x128xf32>
    %97 = arith.mulf %88, %94 : vector<8x128xf32>
    %98 = arith.addf %96, %97 : vector<8x128xf32>
    %99 = math.tanh %98 : vector<8x128xf32>
    %100 = arith.mulf %95, %99 : vector<8x128xf32>
    %101 = arith.addf %78, %100 : vector<8x128xf32>
    %102 = vector.extract_strided_slice %5 {offsets = [32, 0], sizes = [8, 512], strides = [1, 1]} : vector<64x512xf32> to vector<8x512xf32>
    %103 = arith.truncf %100 : vector<8x128xf32> to vector<8x128xbf16>
    %cst_26 = arith.constant dense<0.000000e+00> : vector<8x512xf32>
    %104 = tpu.matmul %103, %6, %cst_26 {dimension_numbers = #tpu.dot_dimension_numbers<[1], [0], [0], [1], [0, 0, 1, 1], [], []>} : vector<8x128xbf16>, vector<128x512xbf16>, vector<8x512xf32> -> vector<8x512xf32>
    %105 = arith.addf %102, %104 : vector<8x512xf32>
    %106 = arith.negf %105 : vector<8x512xf32>
    %107 = math.exp %106 : vector<8x512xf32>
    %cst_27 = arith.constant 1.000000e+00 : f32
    %108 = vector.broadcast %cst_27 : f32 to vector<8x512xf32>
    %109 = arith.addf %108, %107 : vector<8x512xf32>
    %110 = arith.divf %108, %109 : vector<8x512xf32>
    %111 = vector.extract_strided_slice %110 {offsets = [0, 0], sizes = [8, 128], strides = [1, 1]} : vector<8x512xf32> to vector<8x128xf32>
    %112 = vector.extract_strided_slice %110 {offsets = [0, 128], sizes = [8, 128], strides = [1, 1]} : vector<8x512xf32> to vector<8x128xf32>
    %113 = vector.extract_strided_slice %110 {offsets = [0, 256], sizes = [8, 128], strides = [1, 1]} : vector<8x512xf32> to vector<8x128xf32>
    %cst_28 = arith.constant 2.000000e+00 : f32
    %114 = vector.broadcast %cst_28 : f32 to vector<8x128xf32>
    %115 = arith.mulf %114, %113 : vector<8x128xf32>
    %cst_29 = arith.constant 1.000000e+00 : f32
    %116 = vector.broadcast %cst_29 : f32 to vector<8x128xf32>
    %117 = arith.subf %115, %116 : vector<8x128xf32>
    %118 = vector.extract_strided_slice %110 {offsets = [0, 384], sizes = [8, 128], strides = [1, 1]} : vector<8x512xf32> to vector<8x128xf32>
    %119 = arith.mulf %112, %98 : vector<8x128xf32>
    %120 = arith.mulf %111, %117 : vector<8x128xf32>
    %121 = arith.addf %119, %120 : vector<8x128xf32>
    %122 = math.tanh %121 : vector<8x128xf32>
    %123 = arith.mulf %118, %122 : vector<8x128xf32>
    %124 = arith.addf %101, %123 : vector<8x128xf32>
    %125 = vector.extract_strided_slice %5 {offsets = [40, 0], sizes = [8, 512], strides = [1, 1]} : vector<64x512xf32> to vector<8x512xf32>
    %126 = arith.truncf %123 : vector<8x128xf32> to vector<8x128xbf16>
    %cst_30 = arith.constant dense<0.000000e+00> : vector<8x512xf32>
    %127 = tpu.matmul %126, %6, %cst_30 {dimension_numbers = #tpu.dot_dimension_numbers<[1], [0], [0], [1], [0, 0, 1, 1], [], []>} : vector<8x128xbf16>, vector<128x512xbf16>, vector<8x512xf32> -> vector<8x512xf32>
    %128 = arith.addf %125, %127 : vector<8x512xf32>
    %129 = arith.negf %128 : vector<8x512xf32>
    %130 = math.exp %129 : vector<8x512xf32>
    %cst_31 = arith.constant 1.000000e+00 : f32
    %131 = vector.broadcast %cst_31 : f32 to vector<8x512xf32>
    %132 = arith.addf %131, %130 : vector<8x512xf32>
    %133 = arith.divf %131, %132 : vector<8x512xf32>
    %134 = vector.extract_strided_slice %133 {offsets = [0, 0], sizes = [8, 128], strides = [1, 1]} : vector<8x512xf32> to vector<8x128xf32>
    %135 = vector.extract_strided_slice %133 {offsets = [0, 128], sizes = [8, 128], strides = [1, 1]} : vector<8x512xf32> to vector<8x128xf32>
    %136 = vector.extract_strided_slice %133 {offsets = [0, 256], sizes = [8, 128], strides = [1, 1]} : vector<8x512xf32> to vector<8x128xf32>
    %cst_32 = arith.constant 2.000000e+00 : f32
    %137 = vector.broadcast %cst_32 : f32 to vector<8x128xf32>
    %138 = arith.mulf %137, %136 : vector<8x128xf32>
    %cst_33 = arith.constant 1.000000e+00 : f32
    %139 = vector.broadcast %cst_33 : f32 to vector<8x128xf32>
    %140 = arith.subf %138, %139 : vector<8x128xf32>
    %141 = vector.extract_strided_slice %133 {offsets = [0, 384], sizes = [8, 128], strides = [1, 1]} : vector<8x512xf32> to vector<8x128xf32>
    %142 = arith.mulf %135, %121 : vector<8x128xf32>
    %143 = arith.mulf %134, %140 : vector<8x128xf32>
    %144 = arith.addf %142, %143 : vector<8x128xf32>
    %145 = math.tanh %144 : vector<8x128xf32>
    %146 = arith.mulf %141, %145 : vector<8x128xf32>
    %147 = arith.addf %124, %146 : vector<8x128xf32>
    %148 = vector.extract_strided_slice %5 {offsets = [48, 0], sizes = [8, 512], strides = [1, 1]} : vector<64x512xf32> to vector<8x512xf32>
    %149 = arith.truncf %146 : vector<8x128xf32> to vector<8x128xbf16>
    %cst_34 = arith.constant dense<0.000000e+00> : vector<8x512xf32>
    %150 = tpu.matmul %149, %6, %cst_34 {dimension_numbers = #tpu.dot_dimension_numbers<[1], [0], [0], [1], [0, 0, 1, 1], [], []>} : vector<8x128xbf16>, vector<128x512xbf16>, vector<8x512xf32> -> vector<8x512xf32>
    %151 = arith.addf %148, %150 : vector<8x512xf32>
    %152 = arith.negf %151 : vector<8x512xf32>
    %153 = math.exp %152 : vector<8x512xf32>
    %cst_35 = arith.constant 1.000000e+00 : f32
    %154 = vector.broadcast %cst_35 : f32 to vector<8x512xf32>
    %155 = arith.addf %154, %153 : vector<8x512xf32>
    %156 = arith.divf %154, %155 : vector<8x512xf32>
    %157 = vector.extract_strided_slice %156 {offsets = [0, 0], sizes = [8, 128], strides = [1, 1]} : vector<8x512xf32> to vector<8x128xf32>
    %158 = vector.extract_strided_slice %156 {offsets = [0, 128], sizes = [8, 128], strides = [1, 1]} : vector<8x512xf32> to vector<8x128xf32>
    %159 = vector.extract_strided_slice %156 {offsets = [0, 256], sizes = [8, 128], strides = [1, 1]} : vector<8x512xf32> to vector<8x128xf32>
    %cst_36 = arith.constant 2.000000e+00 : f32
    %160 = vector.broadcast %cst_36 : f32 to vector<8x128xf32>
    %161 = arith.mulf %160, %159 : vector<8x128xf32>
    %cst_37 = arith.constant 1.000000e+00 : f32
    %162 = vector.broadcast %cst_37 : f32 to vector<8x128xf32>
    %163 = arith.subf %161, %162 : vector<8x128xf32>
    %164 = vector.extract_strided_slice %156 {offsets = [0, 384], sizes = [8, 128], strides = [1, 1]} : vector<8x512xf32> to vector<8x128xf32>
    %165 = arith.mulf %158, %144 : vector<8x128xf32>
    %166 = arith.mulf %157, %163 : vector<8x128xf32>
    %167 = arith.addf %165, %166 : vector<8x128xf32>
    %168 = math.tanh %167 : vector<8x128xf32>
    %169 = arith.mulf %164, %168 : vector<8x128xf32>
    %170 = arith.addf %147, %169 : vector<8x128xf32>
    %171 = vector.extract_strided_slice %5 {offsets = [56, 0], sizes = [8, 512], strides = [1, 1]} : vector<64x512xf32> to vector<8x512xf32>
    %172 = arith.truncf %169 : vector<8x128xf32> to vector<8x128xbf16>
    %cst_38 = arith.constant dense<0.000000e+00> : vector<8x512xf32>
    %173 = tpu.matmul %172, %6, %cst_38 {dimension_numbers = #tpu.dot_dimension_numbers<[1], [0], [0], [1], [0, 0, 1, 1], [], []>} : vector<8x128xbf16>, vector<128x512xbf16>, vector<8x512xf32> -> vector<8x512xf32>
    %174 = arith.addf %171, %173 : vector<8x512xf32>
    %175 = arith.negf %174 : vector<8x512xf32>
    %176 = math.exp %175 : vector<8x512xf32>
    %cst_39 = arith.constant 1.000000e+00 : f32
    %177 = vector.broadcast %cst_39 : f32 to vector<8x512xf32>
    %178 = arith.addf %177, %176 : vector<8x512xf32>
    %179 = arith.divf %177, %178 : vector<8x512xf32>
    %180 = vector.extract_strided_slice %179 {offsets = [0, 0], sizes = [8, 128], strides = [1, 1]} : vector<8x512xf32> to vector<8x128xf32>
    %181 = vector.extract_strided_slice %179 {offsets = [0, 128], sizes = [8, 128], strides = [1, 1]} : vector<8x512xf32> to vector<8x128xf32>
    %182 = vector.extract_strided_slice %179 {offsets = [0, 256], sizes = [8, 128], strides = [1, 1]} : vector<8x512xf32> to vector<8x128xf32>
    %cst_40 = arith.constant 2.000000e+00 : f32
    %183 = vector.broadcast %cst_40 : f32 to vector<8x128xf32>
    %184 = arith.mulf %183, %182 : vector<8x128xf32>
    %cst_41 = arith.constant 1.000000e+00 : f32
    %185 = vector.broadcast %cst_41 : f32 to vector<8x128xf32>
    %186 = arith.subf %184, %185 : vector<8x128xf32>
    %187 = vector.extract_strided_slice %179 {offsets = [0, 384], sizes = [8, 128], strides = [1, 1]} : vector<8x512xf32> to vector<8x128xf32>
    %188 = arith.mulf %181, %167 : vector<8x128xf32>
    %189 = arith.mulf %180, %186 : vector<8x128xf32>
    %190 = arith.addf %188, %189 : vector<8x128xf32>
    %191 = math.tanh %190 : vector<8x128xf32>
    %192 = arith.mulf %187, %191 : vector<8x128xf32>
    %193 = arith.addf %170, %192 : vector<8x128xf32>
    %c0_42 = arith.constant 0 : index
    %c0_43 = arith.constant 0 : index
    %194 = vector.load %arg5[%c0_42, %c0_43] : memref<128x5xf32, #tpu.memory_space<vmem>>, vector<128x5xf32>
    %cst_44 = arith.constant dense<0.000000e+00> : vector<8x5xf32>
    %195 = tpu.matmul %193, %194, %cst_44 {dimension_numbers = #tpu.dot_dimension_numbers<[1], [0], [0], [1], [0, 0, 1, 1], [], []>} : vector<8x128xf32>, vector<128x5xf32>, vector<8x5xf32> -> vector<8x5xf32>
    %c0_45 = arith.constant 0 : index
    %c0_46 = arith.constant 0 : index
    %196 = vector.load %arg6[%c0_45, %c0_46] : memref<1x5xf32, #tpu.memory_space<vmem>>, vector<1x5xf32>
    %197 = vector.broadcast %196 : vector<1x5xf32> to vector<8x5xf32>
    %198 = arith.addf %195, %197 : vector<8x5xf32>
    %199 = arith.negf %198 : vector<8x5xf32>
    %200 = math.exp %199 : vector<8x5xf32>
    %cst_47 = arith.constant 1.000000e+00 : f32
    %201 = vector.broadcast %cst_47 : f32 to vector<8x5xf32>
    %202 = arith.addf %201, %200 : vector<8x5xf32>
    %203 = arith.divf %201, %202 : vector<8x5xf32>
    %c0_48 = arith.constant 0 : index
    %c0_49 = arith.constant 0 : index
    %204 = vector.load %arg7[%c0_48, %c0_49] : memref<8x5xf32, #tpu.memory_space<vmem>>, vector<8x5xf32>
    tpu.vector_store %arg7[%c0_48, %c0_49], %203 {strides = array<i32>} : memref<8x5xf32, #tpu.memory_space<vmem>>, vector<8x5xf32>,
    return
  }
  func.func @transform_0(%arg0: i32) -> (i32, i32) {
    %c0_i32 = arith.constant 0 : i32
    %c0_i32_0 = arith.constant 0 : i32
    %c0_i32_1 = arith.constant 0 : i32
    return %c0_i32, %c0_i32_0 : i32, i32
  }
  func.func @transform_1(%arg0: i32) -> (i32, i32) {
    %c0_i32 = arith.constant 0 : i32
    %c0_i32_0 = arith.constant 0 : i32
    %c0_i32_1 = arith.constant 0 : i32
    return %c0_i32, %c0_i32_0 : i32, i32
  }
  func.func @transform_2(%arg0: i32) -> (i32, i32) {
    %c0_i32 = arith.constant 0 : i32
    %c0_i32_0 = arith.constant 0 : i32
    %c0_i32_1 = arith.constant 0 : i32
    return %c0_i32, %c0_i32_0 : i32, i32
  }
  func.func @transform_3(%arg0: i32) -> (i32, i32) {
    %c0_i32 = arith.constant 0 : i32
    %c0_i32_0 = arith.constant 0 : i32
    %c0_i32_1 = arith.constant 0 : i32
    return %c0_i32, %c0_i32_0 : i32, i32
  }
  func.func @transform_4(%arg0: i32) -> (i32, i32) {
    %c0_i32 = arith.constant 0 : i32
    %c0_i32_0 = arith.constant 0 : i32
    %c0_i32_1 = arith.constant 0 : i32
    return %c0_i32, %c0_i32_0 : i32, i32
  }
  func.func @transform_5(%arg0: i32) -> (i32, i32) {
    %c0_i32 = arith.constant 0 : i32
    %c0_i32_0 = arith.constant 0 : i32
    %c0_i32_1 = arith.constant 0 : i32
    return %c0_i32, %c0_i32_0 : i32, i32
  }
  func.func @transform_6(%arg0: i32) -> (i32, i32) {
    %c0_i32 = arith.constant 0 : i32
    %c0_i32_0 = arith.constant 0 : i32
    %c0_i32_1 = arith.constant 0 : i32
    return %c0_i32, %c0_i32_0 : i32, i32
  }
}

</mosaic_0001>

<llo_original>
// kernel: lstm_forward.1
$region0: #{lstm_forward.1}
  #allocation0 [shape = 'u32[]', space=smem, size = 0x4, offset = 0x4, fixed_abs, tag = 'smem constant byte address 0x4 - core index']
  #allocation1 [shape = 'u32[144,128]{1,0:T(1,128)}', space=vmem, size = 0x12000, scoped, tag = 'internal scratch']
  %s0 = inlined_call_operand.vmem [shape: bf16[64,1024], index: 0, kind: input, shape index: {}]
  %s1 = inlined_call_operand.hbm [shape: bf16[1024,512], index: 1, kind: input, shape index: {}]
  %s2 = inlined_call_operand.vmem [shape: bf16[128,512], index: 2, kind: input, shape index: {}]
  %s3 = inlined_call_operand.vmem [shape: f32[1,512], index: 3, kind: input, shape index: {}]
  %s4 = inlined_call_operand.vmem [shape: f32[128,5], index: 4, kind: input, shape index: {}]
  %s5 = inlined_call_operand.vmem [shape: f32[1,5], index: 5, kind: input, shape index: {}]
  %s6 = inlined_call_operand.vmem [shape: f32[8,5], index: 6, kind: output, shape index: {}]
  %s7 = sld [smem:[#allocation0]]
  $region38: #{lstm_forward.1} parent=0
    _
  %s9 = ssub.s32 1, %s7
  %s10 = scalar_select 0, %s9, %s7
  $region1: #{lstm_forward.1} parent=0
    #allocation2 [shape = 'u8[1048576]{0}', space=vmem, size = 0x100000, scoped, tag = 'input window, operand 1, single buffered']
    #allocation3 [shape = 's32[1]{0}', space=sflag, size = 0x4, scoped, tag = 'scoped memory for lstm_forward.1']
    %11 = vsyncpa [#allocation3], 0
    // Predicated region
    $region2: #{lstm_forward.1} parent=1 // pred_check
      _
    $region3: #{lstm_forward.1} parent=1 // pred_check_branch
      %13 = sbr.rel (0) target = $region5
    $region4: #{lstm_forward.1} parent=1 // pred_region
      _
    $region5: #{lstm_forward.1} parent=1 // pred_fallthru
      _
    // Predicated region
    $region6: #{lstm_forward.1} parent=1 // pred_check
      _
    $region7: #{lstm_forward.1} parent=1 // pred_check_branch
      %15 = sbr.rel (0) target = $region9
    $region8: #{lstm_forward.1} parent=1 // pred_region
      %s17 = ssub.s32 32768, 32768
      %18 = vsyncadd [#allocation3], %s17
      %s19 = sshll.u32 [#allocation2], 4
      %s20 = int_to_ptr.vmem [resolvable:$true] %s19
      %25 = dma.hbm_to_vmem [thread:$0]  %s1, 32768, %s20, [#allocation3], 256, 256, 16
    $region9: #{lstm_forward.1} parent=1 // pred_fallthru
      _
    // Predicated region
    $region10: #{lstm_forward.1} parent=1 // pred_check
      _
    $region11: #{lstm_forward.1} parent=1 // pred_check_branch
      %27 = sbr.rel (0) target = $region13
    $region12: #{lstm_forward.1} parent=1 // pred_region
      _
    $region13: #{lstm_forward.1} parent=1 // pred_fallthru
      _
    // Predicated region
    $region14: #{lstm_forward.1} parent=1 // pred_check
      _
    $region15: #{lstm_forward.1} parent=1 // pred_check_branch
      %29 = sbr.rel (0) target = $region17
    $region16: #{lstm_forward.1} parent=1 // pred_region
      _
    $region17: #{lstm_forward.1} parent=1 // pred_fallthru
      _
    // Predicated region
    $region18: #{lstm_forward.1} parent=1 // pred_check
      _
    $region19: #{lstm_forward.1} parent=1 // pred_check_branch
      %31 = sbr.rel (0) target = $region21
    $region20: #{lstm_forward.1} parent=1 // pred_region
      _
    $region21: #{lstm_forward.1} parent=1 // pred_fallthru
      _
    // Predicated region
    $region22: #{lstm_forward.1} parent=1 // pred_check
      _
    $region23: #{lstm_forward.1} parent=1 // pred_check_branch
      %33 = sbr.rel (0) target = $region25
    $region24: #{lstm_forward.1} parent=1 // pred_region
      _
    $region25: #{lstm_forward.1} parent=1 // pred_fallthru
      _
    // Predicated region
    $region26: #{lstm_forward.1} parent=1 // pred_check
      _
    $region27: #{lstm_forward.1} parent=1 // pred_check_branch
      %35 = sbr.rel (0) target = $region29
    $region28: #{lstm_forward.1} parent=1 // pred_region
      %36 = dma.done [#allocation3], 32768
    $region29: #{lstm_forward.1} parent=1 // pred_fallthru
      _
    %v38 = vld [vmem:[%s0] sm:$0xff]
    %v39 = vld [vmem:[%s0 + $0x8] sm:$0xff]
    %v40 = vld [vmem:[%s0 + $0x10] sm:$0xff]
    %v41 = vld [vmem:[%s0 + $0x18] sm:$0xff]
    %v42 = vld [vmem:[%s0 + $0x20] sm:$0xff]
    %v43 = vld [vmem:[%s0 + $0x28] sm:$0xff]
    %v44 = vld [vmem:[%s0 + $0x30] sm:$0xff]
    %v45 = vld [vmem:[%s0 + $0x38] sm:$0xff]
    %v46 = vld [vmem:[%s0 + $0x40] sm:$0xff]
    %v47 = vld [vmem:[%s0 + $0x48] sm:$0xff]
    %v48 = vld [vmem:[%s0 + $0x50] sm:$0xff]
    %v49 = vld [vmem:[%s0 + $0x58] sm:$0xff]
    %v50 = vld [vmem:[%s0 + $0x60] sm:$0xff]
    %v51 = vld [vmem:[%s0 + $0x68] sm:$0xff]
    %v52 = vld [vmem:[%s0 + $0x70] sm:$0xff]
    %v53 = vld [vmem:[%s0 + $0x78] sm:$0xff]
    %v54 = vld [vmem:[%s0 + $0x80] sm:$0xff]
    %v55 = vld [vmem:[%s0 + $0x88] sm:$0xff]
    %v56 = vld [vmem:[%s0 + $0x90] sm:$0xff]
    %v57 = vld [vmem:[%s0 + $0x98] sm:$0xff]
    %v58 = vld [vmem:[%s0 + $0xa0] sm:$0xff]
    %v59 = vld [vmem:[%s0 + $0xa8] sm:$0xff]
    %v60 = vld [vmem:[%s0 + $0xb0] sm:$0xff]
    %v61 = vld [vmem:[%s0 + $0xb8] sm:$0xff]
    %v62 = vld [vmem:[%s0 + $0xc0] sm:$0xff]
    %v63 = vld [vmem:[%s0 + $0xc8] sm:$0xff]
    %v64 = vld [vmem:[%s0 + $0xd0] sm:$0xff]
    %v65 = vld [vmem:[%s0 + $0xd8] sm:$0xff]
    %v66 = vld [vmem:[%s0 + $0xe0] sm:$0xff]
    %v67 = vld [vmem:[%s0 + $0xe8] sm:$0xff]
    %v68 = vld [vmem:[%s0 + $0xf0] sm:$0xff]
    %v69 = vld [vmem:[%s0 + $0xf8] sm:$0xff]
    %v70 = vld [vmem:[#allocation2] sm:$0xff]
    %v71 = vld [vmem:[#allocation2 + $0x8] sm:$0xff]
    %v72 = vld [vmem:[#allocation2 + $0x10] sm:$0xff]
    %v73 = vld [vmem:[#allocation2 + $0x18] sm:$0xff]
    %v74 = vld [vmem:[#allocation2 + $0x20] sm:$0xff]
    %v75 = vld [vmem:[#allocation2 + $0x28] sm:$0xff]
    %v76 = vld [vmem:[#allocation2 + $0x30] sm:$0xff]
    %v77 = vld [vmem:[#allocation2 + $0x38] sm:$0xff]
    %v78 = vld [vmem:[#allocation2 + $0x40] sm:$0xff]
    %v79 = vld [vmem:[#allocation2 + $0x48] sm:$0xff]
    %v80 = vld [vmem:[#allocation2 + $0x50] sm:$0xff]
    %v81 = vld [vmem:[#allocation2 + $0x58] sm:$0xff]
    %v82 = vld [vmem:[#allocation2 + $0x60] sm:$0xff]
    %v83 = vld [vmem:[#allocation2 + $0x68] sm:$0xff]
    %v84 = vld [vmem:[#allocation2 + $0x70] sm:$0xff]
    %v85 = vld [vmem:[#allocation2 + $0x78] sm:$0xff]
    %v86 = vld [vmem:[#allocation2 + $0x80] sm:$0xff]
    %v87 = vld [vmem:[#allocation2 + $0x88] sm:$0xff]
    %v88 = vld [vmem:[#allocation2 + $0x90] sm:$0xff]
    %v89 = vld [vmem:[#allocation2 + $0x98] sm:$0xff]
    %v90 = vld [vmem:[#allocation2 + $0xa0] sm:$0xff]
    %v91 = vld [vmem:[#allocation2 + $0xa8] sm:$0xff]
    %v92 = vld [vmem:[#allocation2 + $0xb0] sm:$0xff]
    %v93 = vld [vmem:[#allocation2 + $0xb8] sm:$0xff]
    %v94 = vld [vmem:[#allocation2 + $0xc0] sm:$0xff]
    %v95 = vld [vmem:[#allocation2 + $0xc8] sm:$0xff]
    %v96 = vld [vmem:[#allocation2 + $0xd0] sm:$0xff]
    %v97 = vld [vmem:[#allocation2 + $0xd8] sm:$0xff]
    %v98 = vld [vmem:[#allocation2 + $0xe0] sm:$0xff]
    %v99 = vld [vmem:[#allocation2 + $0xe8] sm:$0xff]
    %v100 = vld [vmem:[#allocation2 + $0xf0] sm:$0xff]
    %v101 = vld [vmem:[#allocation2 + $0xf8] sm:$0xff]
    %v102 = vld [vmem:[#allocation2 + $0x100] sm:$0xff]
    %v103 = vld [vmem:[#allocation2 + $0x108] sm:$0xff]
    %v104 = vld [vmem:[#allocation2 + $0x110] sm:$0xff]
    %v105 = vld [vmem:[#allocation2 + $0x118] sm:$0xff]
    %v106 = vld [vmem:[#allocation2 + $0x120] sm:$0xff]
    %v107 = vld [vmem:[#allocation2 + $0x128] sm:$0xff]
    %v108 = vld [vmem:[#allocation2 + $0x130] sm:$0xff]
    %v109 = vld [vmem:[#allocation2 + $0x138] sm:$0xff]
    %v110 = vld [vmem:[#allocation2 + $0x140] sm:$0xff]
    %v111 = vld [vmem:[#allocation2 + $0x148] sm:$0xff]
    %v112 = vld [vmem:[#allocation2 + $0x150] sm:$0xff]
    %v113 = vld [vmem:[#allocation2 + $0x158] sm:$0xff]
    %v114 = vld [vmem:[#allocation2 + $0x160] sm:$0xff]
    %v115 = vld [vmem:[#allocation2 + $0x168] sm:$0xff]
    %v116 = vld [vmem:[#allocation2 + $0x170] sm:$0xff]
    %v117 = vld [vmem:[#allocation2 + $0x178] sm:$0xff]
    %v118 = vld [vmem:[#allocation2 + $0x180] sm:$0xff]
    %v119 = vld [vmem:[#allocation2 + $0x188] sm:$0xff]
    %v120 = vld [vmem:[#allocation2 + $0x190] sm:$0xff]
    %v121 = vld [vmem:[#allocation2 + $0x198] sm:$0xff]
    %v122 = vld [vmem:[#allocation2 + $0x1a0] sm:$0xff]
    %v123 = vld [vmem:[#allocation2 + $0x1a8] sm:$0xff]
    %v124 = vld [vmem:[#allocation2 + $0x1b0] sm:$0xff]
    %v125 = vld [vmem:[#allocation2 + $0x1b8] sm:$0xff]
    %v126 = vld [vmem:[#allocation2 + $0x1c0] sm:$0xff]
    %v127 = vld [vmem:[#allocation2 + $0x1c8] sm:$0xff]
    %v128 = vld [vmem:[#allocation2 + $0x1d0] sm:$0xff]
    %v129 = vld [vmem:[#allocation2 + $0x1d8] sm:$0xff]
    %v130 = vld [vmem:[#allocation2 + $0x1e0] sm:$0xff]
    %v131 = vld [vmem:[#allocation2 + $0x1e8] sm:$0xff]
    %v132 = vld [vmem:[#allocation2 + $0x1f0] sm:$0xff]
    %v133 = vld [vmem:[#allocation2 + $0x1f8] sm:$0xff]
    %v134 = vld [vmem:[#allocation2 + $0x200] sm:$0xff]
    %v135 = vld [vmem:[#allocation2 + $0x208] sm:$0xff]
    %v136 = vld [vmem:[#allocation2 + $0x210] sm:$0xff]
    %v137 = vld [vmem:[#allocation2 + $0x218] sm:$0xff]
    %v138 = vld [vmem:[#allocation2 + $0x220] sm:$0xff]
    %v139 = vld [vmem:[#allocation2 + $0x228] sm:$0xff]
    %v140 = vld [vmem:[#allocation2 + $0x230] sm:$0xff]
    %v141 = vld [vmem:[#allocation2 + $0x238] sm:$0xff]
    %v142 = vld [vmem:[#allocation2 + $0x240] sm:$0xff]
    %v143 = vld [vmem:[#allocation2 + $0x248] sm:$0xff]
    %v144 = vld [vmem:[#allocation2 + $0x250] sm:$0xff]
    %v145 = vld [vmem:[#allocation2 + $0x258] sm:$0xff]
    %v146 = vld [vmem:[#allocation2 + $0x260] sm:$0xff]
    %v147 = vld [vmem:[#allocation2 + $0x268] sm:$0xff]
    %v148 = vld [vmem:[#allocation2 + $0x270] sm:$0xff]
    %v149 = vld [vmem:[#allocation2 + $0x278] sm:$0xff]
    %v150 = vld [vmem:[#allocation2 + $0x280] sm:$0xff]
    %v151 = vld [vmem:[#allocation2 + $0x288] sm:$0xff]
    %v152 = vld [vmem:[#allocation2 + $0x290] sm:$0xff]
    %v153 = vld [vmem:[#allocation2 + $0x298] sm:$0xff]
    %v154 = vld [vmem:[#allocation2 + $0x2a0] sm:$0xff]
    %v155 = vld [vmem:[#allocation2 + $0x2a8] sm:$0xff]
    %v156 = vld [vmem:[#allocation2 + $0x2b0] sm:$0xff]
    %v157 = vld [vmem:[#allocation2 + $0x2b8] sm:$0xff]
    %v158 = vld [vmem:[#allocation2 + $0x2c0] sm:$0xff]
    %v159 = vld [vmem:[#allocation2 + $0x2c8] sm:$0xff]
    %v160 = vld [vmem:[#allocation2 + $0x2d0] sm:$0xff]
    %v161 = vld [vmem:[#allocation2 + $0x2d8] sm:$0xff]
    %v162 = vld [vmem:[#allocation2 + $0x2e0] sm:$0xff]
    %v163 = vld [vmem:[#allocation2 + $0x2e8] sm:$0xff]
    %v164 = vld [vmem:[#allocation2 + $0x2f0] sm:$0xff]
    %v165 = vld [vmem:[#allocation2 + $0x2f8] sm:$0xff]
    %v166 = vld [vmem:[#allocation2 + $0x300] sm:$0xff]
    %v167 = vld [vmem:[#allocation2 + $0x308] sm:$0xff]
    %v168 = vld [vmem:[#allocation2 + $0x310] sm:$0xff]
    %v169 = vld [vmem:[#allocation2 + $0x318] sm:$0xff]
    %v170 = vld [vmem:[#allocation2 + $0x320] sm:$0xff]
    %v171 = vld [vmem:[#allocation2 + $0x328] sm:$0xff]
    %v172 = vld [vmem:[#allocation2 + $0x330] sm:$0xff]
    %v173 = vld [vmem:[#allocation2 + $0x338] sm:$0xff]
    %v174 = vld [vmem:[#allocation2 + $0x340] sm:$0xff]
    %v175 = vld [vmem:[#allocation2 + $0x348] sm:$0xff]
    %v176 = vld [vmem:[#allocation2 + $0x350] sm:$0xff]
    %v177 = vld [vmem:[#allocation2 + $0x358] sm:$0xff]
    %v178 = vld [vmem:[#allocation2 + $0x360] sm:$0xff]
    %v179 = vld [vmem:[#allocation2 + $0x368] sm:$0xff]
    %v180 = vld [vmem:[#allocation2 + $0x370] sm:$0xff]
    %v181 = vld [vmem:[#allocation2 + $0x378] sm:$0xff]
    %v182 = vld [vmem:[#allocation2 + $0x380] sm:$0xff]
    %v183 = vld [vmem:[#allocation2 + $0x388] sm:$0xff]
    %v184 = vld [vmem:[#allocation2 + $0x390] sm:$0xff]
    %v185 = vld [vmem:[#allocation2 + $0x398] sm:$0xff]
    %v186 = vld [vmem:[#allocation2 + $0x3a0] sm:$0xff]
    %v187 = vld [vmem:[#allocation2 + $0x3a8] sm:$0xff]
    %v188 = vld [vmem:[#allocation2 + $0x3b0] sm:$0xff]
    %v189 = vld [vmem:[#allocation2 + $0x3b8] sm:$0xff]
    %v190 = vld [vmem:[#allocation2 + $0x3c0] sm:$0xff]
    %v191 = vld [vmem:[#allocation2 + $0x3c8] sm:$0xff]
    %v192 = vld [vmem:[#allocation2 + $0x3d0] sm:$0xff]
    %v193 = vld [vmem:[#allocation2 + $0x3d8] sm:$0xff]
    %v194 = vld [vmem:[#allocation2 + $0x3e0] sm:$0xff]
    %v195 = vld [vmem:[#allocation2 + $0x3e8] sm:$0xff]
    %v196 = vld [vmem:[#allocation2 + $0x3f0] sm:$0xff]
    %v197 = vld [vmem:[#allocation2 + $0x3f8] sm:$0xff]
    %v198 = vld [vmem:[#allocation2 + $0x400] sm:$0xff]
    %v199 = vld [vmem:[#allocation2 + $0x408] sm:$0xff]
    %v200 = vld [vmem:[#allocation2 + $0x410] sm:$0xff]
    %v201 = vld [vmem:[#allocation2 + $0x418] sm:$0xff]
    %v202 = vld [vmem:[#allocation2 + $0x420] sm:$0xff]
    %v203 = vld [vmem:[#allocation2 + $0x428] sm:$0xff]
    %v204 = vld [vmem:[#allocation2 + $0x430] sm:$0xff]
    %v205 = vld [vmem:[#allocation2 + $0x438] sm:$0xff]
    %v206 = vld [vmem:[#allocation2 + $0x440] sm:$0xff]
    %v207 = vld [vmem:[#allocation2 + $0x448] sm:$0xff]
    %v208 = vld [vmem:[#allocation2 + $0x450] sm:$0xff]
    %v209 = vld [vmem:[#allocation2 + $0x458] sm:$0xff]
    %v210 = vld [vmem:[#allocation2 + $0x460] sm:$0xff]
    %v211 = vld [vmem:[#allocation2 + $0x468] sm:$0xff]
    %v212 = vld [vmem:[#allocation2 + $0x470] sm:$0xff]
    %v213 = vld [vmem:[#allocation2 + $0x478] sm:$0xff]
    %v214 = vld [vmem:[#allocation2 + $0x480] sm:$0xff]
    %v215 = vld [vmem:[#allocation2 + $0x488] sm:$0xff]
    %v216 = vld [vmem:[#allocation2 + $0x490] sm:$0xff]
    %v217 = vld [vmem:[#allocation2 + $0x498] sm:$0xff]
    %v218 = vld [vmem:[#allocation2 + $0x4a0] sm:$0xff]
    %v219 = vld [vmem:[#allocation2 + $0x4a8] sm:$0xff]
    %v220 = vld [vmem:[#allocation2 + $0x4b0] sm:$0xff]
    %v221 = vld [vmem:[#allocation2 + $0x4b8] sm:$0xff]
    %v222 = vld [vmem:[#allocation2 + $0x4c0] sm:$0xff]
    %v223 = vld [vmem:[#allocation2 + $0x4c8] sm:$0xff]
    %v224 = vld [vmem:[#allocation2 + $0x4d0] sm:$0xff]
    %v225 = vld [vmem:[#allocation2 + $0x4d8] sm:$0xff]
    %v226 = vld [vmem:[#allocation2 + $0x4e0] sm:$0xff]
    %v227 = vld [vmem:[#allocation2 + $0x4e8] sm:$0xff]
    %v228 = vld [vmem:[#allocation2 + $0x4f0] sm:$0xff]
    %v229 = vld [vmem:[#allocation2 + $0x4f8] sm:$0xff]
    %v230 = vld [vmem:[#allocation2 + $0x500] sm:$0xff]
    %v231 = vld [vmem:[#allocation2 + $0x508] sm:$0xff]
    %v232 = vld [vmem:[#allocation2 + $0x510] sm:$0xff]
    %v233 = vld [vmem:[#allocation2 + $0x518] sm:$0xff]
    %v234 = vld [vmem:[#allocation2 + $0x520] sm:$0xff]
    %v235 = vld [vmem:[#allocation2 + $0x528] sm:$0xff]
    %v236 = vld [vmem:[#allocation2 + $0x530] sm:$0xff]
    %v237 = vld [vmem:[#allocation2 + $0x538] sm:$0xff]
    %v238 = vld [vmem:[#allocation2 + $0x540] sm:$0xff]
    %v239 = vld [vmem:[#allocation2 + $0x548] sm:$0xff]
    %v240 = vld [vmem:[#allocation2 + $0x550] sm:$0xff]
    %v241 = vld [vmem:[#allocation2 + $0x558] sm:$0xff]
    %v242 = vld [vmem:[#allocation2 + $0x560] sm:$0xff]
    %v243 = vld [vmem:[#allocation2 + $0x568] sm:$0xff]
    %v244 = vld [vmem:[#allocation2 + $0x570] sm:$0xff]
    %v245 = vld [vmem:[#allocation2 + $0x578] sm:$0xff]
    %v246 = vld [vmem:[#allocation2 + $0x580] sm:$0xff]
    %v247 = vld [vmem:[#allocation2 + $0x588] sm:$0xff]
    %v248 = vld [vmem:[#allocation2 + $0x590] sm:$0xff]
    %v249 = vld [vmem:[#allocation2 + $0x598] sm:$0xff]
    %v250 = vld [vmem:[#allocation2 + $0x5a0] sm:$0xff]
    %v251 = vld [vmem:[#allocation2 + $0x5a8] sm:$0xff]
    %v252 = vld [vmem:[#allocation2 + $0x5b0] sm:$0xff]
    %v253 = vld [vmem:[#allocation2 + $0x5b8] sm:$0xff]
    %v254 = vld [vmem:[#allocation2 + $0x5c0] sm:$0xff]
    %v255 = vld [vmem:[#allocation2 + $0x5c8] sm:$0xff]
    %v256 = vld [vmem:[#allocation2 + $0x5d0] sm:$0xff]
    %v257 = vld [vmem:[#allocation2 + $0x5d8] sm:$0xff]
    %v258 = vld [vmem:[#allocation2 + $0x5e0] sm:$0xff]
    %v259 = vld [vmem:[#allocation2 + $0x5e8] sm:$0xff]
    %v260 = vld [vmem:[#allocation2 + $0x5f0] sm:$0xff]
    %v261 = vld [vmem:[#allocation2 + $0x5f8] sm:$0xff]
    %v262 = vld [vmem:[#allocation2 + $0x600] sm:$0xff]
    %v263 = vld [vmem:[#allocation2 + $0x608] sm:$0xff]
    %v264 = vld [vmem:[#allocation2 + $0x610] sm:$0xff]
    %v265 = vld [vmem:[#allocation2 + $0x618] sm:$0xff]
    %v266 = vld [vmem:[#allocation2 + $0x620] sm:$0xff]
    %v267 = vld [vmem:[#allocation2 + $0x628] sm:$0xff]
    %v268 = vld [vmem:[#allocation2 + $0x630] sm:$0xff]
    %v269 = vld [vmem:[#allocation2 + $0x638] sm:$0xff]
    %v270 = vld [vmem:[#allocation2 + $0x640] sm:$0xff]
    %v271 = vld [vmem:[#allocation2 + $0x648] sm:$0xff]
    %v272 = vld [vmem:[#allocation2 + $0x650] sm:$0xff]
    %v273 = vld [vmem:[#allocation2 + $0x658] sm:$0xff]
    %v274 = vld [vmem:[#allocation2 + $0x660] sm:$0xff]
    %v275 = vld [vmem:[#allocation2 + $0x668] sm:$0xff]
    %v276 = vld [vmem:[#allocation2 + $0x670] sm:$0xff]
    %v277 = vld [vmem:[#allocation2 + $0x678] sm:$0xff]
    %v278 = vld [vmem:[#allocation2 + $0x680] sm:$0xff]
    %v279 = vld [vmem:[#allocation2 + $0x688] sm:$0xff]
    %v280 = vld [vmem:[#allocation2 + $0x690] sm:$0xff]
    %v281 = vld [vmem:[#allocation2 + $0x698] sm:$0xff]
    %v282 = vld [vmem:[#allocation2 + $0x6a0] sm:$0xff]
    %v283 = vld [vmem:[#allocation2 + $0x6a8] sm:$0xff]
    %v284 = vld [vmem:[#allocation2 + $0x6b0] sm:$0xff]
    %v285 = vld [vmem:[#allocation2 + $0x6b8] sm:$0xff]
    %v286 = vld [vmem:[#allocation2 + $0x6c0] sm:$0xff]
    %v287 = vld [vmem:[#allocation2 + $0x6c8] sm:$0xff]
    %v288 = vld [vmem:[#allocation2 + $0x6d0] sm:$0xff]
    %v289 = vld [vmem:[#allocation2 + $0x6d8] sm:$0xff]
    %v290 = vld [vmem:[#allocation2 + $0x6e0] sm:$0xff]
    %v291 = vld [vmem:[#allocation2 + $0x6e8] sm:$0xff]
    %v292 = vld [vmem:[#allocation2 + $0x6f0] sm:$0xff]
    %v293 = vld [vmem:[#allocation2 + $0x6f8] sm:$0xff]
    %v294 = vld [vmem:[#allocation2 + $0x700] sm:$0xff]
    %v295 = vld [vmem:[#allocation2 + $0x708] sm:$0xff]
    %v296 = vld [vmem:[#allocation2 + $0x710] sm:$0xff]
    %v297 = vld [vmem:[#allocation2 + $0x718] sm:$0xff]
    %v298 = vld [vmem:[#allocation2 + $0x720] sm:$0xff]
    %v299 = vld [vmem:[#allocation2 + $0x728] sm:$0xff]
    %v300 = vld [vmem:[#allocation2 + $0x730] sm:$0xff]
    %v301 = vld [vmem:[#allocation2 + $0x738] sm:$0xff]
    %v302 = vld [vmem:[#allocation2 + $0x740] sm:$0xff]
    %v303 = vld [vmem:[#allocation2 + $0x748] sm:$0xff]
    %v304 = vld [vmem:[#allocation2 + $0x750] sm:$0xff]
    %v305 = vld [vmem:[#allocation2 + $0x758] sm:$0xff]
    %v306 = vld [vmem:[#allocation2 + $0x760] sm:$0xff]
    %v307 = vld [vmem:[#allocation2 + $0x768] sm:$0xff]
    %v308 = vld [vmem:[#allocation2 + $0x770] sm:$0xff]
    %v309 = vld [vmem:[#allocation2 + $0x778] sm:$0xff]
    %v310 = vld [vmem:[#allocation2 + $0x780] sm:$0xff]
    %v311 = vld [vmem:[#allocation2 + $0x788] sm:$0xff]
    %v312 = vld [vmem:[#allocation2 + $0x790] sm:$0xff]
    %v313 = vld [vmem:[#allocation2 + $0x798] sm:$0xff]
    %v314 = vld [vmem:[#allocation2 + $0x7a0] sm:$0xff]
    %v315 = vld [vmem:[#allocation2 + $0x7a8] sm:$0xff]
    %v316 = vld [vmem:[#allocation2 + $0x7b0] sm:$0xff]
    %v317 = vld [vmem:[#allocation2 + $0x7b8] sm:$0xff]
    %v318 = vld [vmem:[#allocation2 + $0x7c0] sm:$0xff]
    %v319 = vld [vmem:[#allocation2 + $0x7c8] sm:$0xff]
    %v320 = vld [vmem:[#allocation2 + $0x7d0] sm:$0xff]
    %v321 = vld [vmem:[#allocation2 + $0x7d8] sm:$0xff]
    %v322 = vld [vmem:[#allocation2 + $0x7e0] sm:$0xff]
    %v323 = vld [vmem:[#allocation2 + $0x7e8] sm:$0xff]
    %v324 = vld [vmem:[#allocation2 + $0x7f0] sm:$0xff]
    %v325 = vld [vmem:[#allocation2 + $0x7f8] sm:$0xff]
    %v326 = vld [vmem:[%s3] sm:$0xf]
    %v328 = vlaneseq
    %v329 = vshrl.u32 %v328, 7
    %v330 = vsub.s32 0, %v329
    %v331 = vrot.slane %v326, %v330
    %v332 = vlaneseq
    %v333 = vshrl.u32 %v332, 7
    %v334 = vsub.s32 1, %v333
    %v335 = vrot.slane %v326, %v334
    %v336 = vlaneseq
    %v337 = vshrl.u32 %v336, 7
    %v338 = vsub.s32 2, %v337
    %v339 = vrot.slane %v326, %v338
    %v340 = vlaneseq
    %v341 = vshrl.u32 %v340, 7
    %v342 = vsub.s32 3, %v341
    %v343 = vrot.slane %v326, %v342
    %v380 = vunpack.c.l.b16 %v38
    %v381 = vunpack.c.h.b16 %v38
    %v382 = vunpack.c.l.b16 %v39
    %v383 = vunpack.c.h.b16 %v39
    %v384 = vunpack.c.l.b16 %v40
    %v385 = vunpack.c.h.b16 %v40
    %v386 = vunpack.c.l.b16 %v41
    %v387 = vunpack.c.h.b16 %v41
    %v388 = vunpack.c.l.b16 %v42
    %v389 = vunpack.c.h.b16 %v42
    %v390 = vunpack.c.l.b16 %v43
    %v391 = vunpack.c.h.b16 %v43
    %v392 = vunpack.c.l.b16 %v44
    %v393 = vunpack.c.h.b16 %v44
    %v394 = vunpack.c.l.b16 %v45
    %v395 = vunpack.c.h.b16 %v45
    %v396 = vunpack.c.l.b16 %v46
    %v397 = vunpack.c.h.b16 %v46
    %v398 = vunpack.c.l.b16 %v47
    %v399 = vunpack.c.h.b16 %v47
    %v400 = vunpack.c.l.b16 %v48
    %v401 = vunpack.c.h.b16 %v48
    %v402 = vunpack.c.l.b16 %v49
    %v403 = vunpack.c.h.b16 %v49
    %v404 = vunpack.c.l.b16 %v50
    %v405 = vunpack.c.h.b16 %v50
    %v406 = vunpack.c.l.b16 %v51
    %v407 = vunpack.c.h.b16 %v51
    %v408 = vunpack.c.l.b16 %v52
    %v409 = vunpack.c.h.b16 %v52
    %v410 = vunpack.c.l.b16 %v53
    %v411 = vunpack.c.h.b16 %v53
    %v412 = vunpack.c.l.b16 %v54
    %v413 = vunpack.c.h.b16 %v54
    %v414 = vunpack.c.l.b16 %v55
    %v415 = vunpack.c.h.b16 %v55
    %v416 = vunpack.c.l.b16 %v56
    %v417 = vunpack.c.h.b16 %v56
    %v418 = vunpack.c.l.b16 %v57
    %v419 = vunpack.c.h.b16 %v57
    %v420 = vunpack.c.l.b16 %v58
    %v421 = vunpack.c.h.b16 %v58
    %v422 = vunpack.c.l.b16 %v59
    %v423 = vunpack.c.h.b16 %v59
    %v424 = vunpack.c.l.b16 %v60
    %v425 = vunpack.c.h.b16 %v60
    %v426 = vunpack.c.l.b16 %v61
    %v427 = vunpack.c.h.b16 %v61
    %v428 = vunpack.c.l.b16 %v62
    %v429 = vunpack.c.h.b16 %v62
    %v430 = vunpack.c.l.b16 %v63
    %v431 = vunpack.c.h.b16 %v63
    %v432 = vunpack.c.l.b16 %v64
    %v433 = vunpack.c.h.b16 %v64
    %v434 = vunpack.c.l.b16 %v65
    %v435 = vunpack.c.h.b16 %v65
    %v436 = vunpack.c.l.b16 %v66
    %v437 = vunpack.c.h.b16 %v66
    %v438 = vunpack.c.l.b16 %v67
    %v439 = vunpack.c.h.b16 %v67
    %v440 = vunpack.c.l.b16 %v68
    %v441 = vunpack.c.h.b16 %v68
    %v442 = vunpack.c.l.b16 %v69
    %v443 = vunpack.c.h.b16 %v69
    %v444 = vpack.c.b16 %v388, %v380
    %v445 = vpack.c.b16 %v389, %v381
    %v446 = vpack.c.b16 %v390, %v382
    %v447 = vpack.c.b16 %v391, %v383
    %v448 = vpack.c.b16 %v392, %v384
    %v449 = vpack.c.b16 %v393, %v385
    %v450 = vpack.c.b16 %v394, %v386
    %v451 = vpack.c.b16 %v395, %v387
    %v452 = vpack.c.b16 %v404, %v396
    %v453 = vpack.c.b16 %v405, %v397
    %v454 = vpack.c.b16 %v406, %v398
    %v455 = vpack.c.b16 %v407, %v399
    %v456 = vpack.c.b16 %v408, %v400
    %v457 = vpack.c.b16 %v409, %v401
    %v458 = vpack.c.b16 %v410, %v402
    %v459 = vpack.c.b16 %v411, %v403
    %v460 = vpack.c.b16 %v420, %v412
    %v461 = vpack.c.b16 %v421, %v413
    %v462 = vpack.c.b16 %v422, %v414
    %v463 = vpack.c.b16 %v423, %v415
    %v464 = vpack.c.b16 %v424, %v416
    %v465 = vpack.c.b16 %v425, %v417
    %v466 = vpack.c.b16 %v426, %v418
    %v467 = vpack.c.b16 %v427, %v419
    %v468 = vpack.c.b16 %v436, %v428
    %v469 = vpack.c.b16 %v437, %v429
    %v470 = vpack.c.b16 %v438, %v430
    %v471 = vpack.c.b16 %v439, %v431
    %v472 = vpack.c.b16 %v440, %v432
    %v473 = vpack.c.b16 %v441, %v433
    %v474 = vpack.c.b16 %v442, %v434
    %v475 = vpack.c.b16 %v443, %v435
    %v764 = vunpack.c.l.b16 %v70
    %v765 = vunpack.c.h.b16 %v70
    %v766 = vunpack.c.l.b16 %v71
    %v767 = vunpack.c.h.b16 %v71
    %v768 = vunpack.c.l.b16 %v72
    %v769 = vunpack.c.h.b16 %v72
    %v770 = vunpack.c.l.b16 %v73
    %v771 = vunpack.c.h.b16 %v73
    %v772 = vunpack.c.l.b16 %v74
    %v773 = vunpack.c.h.b16 %v74
    %v774 = vunpack.c.l.b16 %v75
    %v775 = vunpack.c.h.b16 %v75
    %v776 = vunpack.c.l.b16 %v76
    %v777 = vunpack.c.h.b16 %v76
    %v778 = vunpack.c.l.b16 %v77
    %v779 = vunpack.c.h.b16 %v77
    %v780 = vunpack.c.l.b16 %v78
    %v781 = vunpack.c.h.b16 %v78
    %v782 = vunpack.c.l.b16 %v79
    %v783 = vunpack.c.h.b16 %v79
    %v784 = vunpack.c.l.b16 %v80
    %v785 = vunpack.c.h.b16 %v80
    %v786 = vunpack.c.l.b16 %v81
    %v787 = vunpack.c.h.b16 %v81
    %v788 = vunpack.c.l.b16 %v82
    %v789 = vunpack.c.h.b16 %v82
    %v790 = vunpack.c.l.b16 %v83
    %v791 = vunpack.c.h.b16 %v83
    %v792 = vunpack.c.l.b16 %v84
    %v793 = vunpack.c.h.b16 %v84
    %v794 = vunpack.c.l.b16 %v85
    %v795 = vunpack.c.h.b16 %v85
    %v796 = vunpack.c.l.b16 %v86
    %v797 = vunpack.c.h.b16 %v86
    %v798 = vunpack.c.l.b16 %v87
    %v799 = vunpack.c.h.b16 %v87
    %v800 = vunpack.c.l.b16 %v88
    %v801 = vunpack.c.h.b16 %v88
    %v802 = vunpack.c.l.b16 %v89
    %v803 = vunpack.c.h.b16 %v89
    %v804 = vunpack.c.l.b16 %v90
    %v805 = vunpack.c.h.b16 %v90
    %v806 = vunpack.c.l.b16 %v91
    %v807 = vunpack.c.h.b16 %v91
    %v808 = vunpack.c.l.b16 %v92
    %v809 = vunpack.c.h.b16 %v92
    %v810 = vunpack.c.l.b16 %v93
    %v811 = vunpack.c.h.b16 %v93
    %v812 = vunpack.c.l.b16 %v94
    %v813 = vunpack.c.h.b16 %v94
    %v814 = vunpack.c.l.b16 %v95
    %v815 = vunpack.c.h.b16 %v95
    %v816 = vunpack.c.l.b16 %v96
    %v817 = vunpack.c.h.b16 %v96
    %v818 = vunpack.c.l.b16 %v97
    %v819 = vunpack.c.h.b16 %v97
    %v820 = vunpack.c.l.b16 %v98
    %v821 = vunpack.c.h.b16 %v98
    %v822 = vunpack.c.l.b16 %v99
    %v823 = vunpack.c.h.b16 %v99
    %v824 = vunpack.c.l.b16 %v100
    %v825 = vunpack.c.h.b16 %v100
    %v826 = vunpack.c.l.b16 %v101
    %v827 = vunpack.c.h.b16 %v101
    %v828 = vunpack.c.l.b16 %v102
    %v829 = vunpack.c.h.b16 %v102
    %v830 = vunpack.c.l.b16 %v103
    %v831 = vunpack.c.h.b16 %v103
    %v832 = vunpack.c.l.b16 %v104
    %v833 = vunpack.c.h.b16 %v104
    %v834 = vunpack.c.l.b16 %v105
    %v835 = vunpack.c.h.b16 %v105
    %v836 = vunpack.c.l.b16 %v106
    %v837 = vunpack.c.h.b16 %v106
    %v838 = vunpack.c.l.b16 %v107
    %v839 = vunpack.c.h.b16 %v107
    %v840 = vunpack.c.l.b16 %v108
    %v841 = vunpack.c.h.b16 %v108
    %v842 = vunpack.c.l.b16 %v109
    %v843 = vunpack.c.h.b16 %v109
    %v844 = vunpack.c.l.b16 %v110
    %v845 = vunpack.c.h.b16 %v110
    %v846 = vunpack.c.l.b16 %v111
    %v847 = vunpack.c.h.b16 %v111
    %v848 = vunpack.c.l.b16 %v112
    %v849 = vunpack.c.h.b16 %v112
    %v850 = vunpack.c.l.b16 %v113
    %v851 = vunpack.c.h.b16 %v113
    %v852 = vunpack.c.l.b16 %v114
    %v853 = vunpack.c.h.b16 %v114
    %v854 = vunpack.c.l.b16 %v115
    %v855 = vunpack.c.h.b16 %v115
    %v856 = vunpack.c.l.b16 %v116
    %v857 = vunpack.c.h.b16 %v116
    %v858 = vunpack.c.l.b16 %v117
    %v859 = vunpack.c.h.b16 %v117
    %v860 = vunpack.c.l.b16 %v118
    %v861 = vunpack.c.h.b16 %v118
    %v862 = vunpack.c.l.b16 %v119
    %v863 = vunpack.c.h.b16 %v119
    %v864 = vunpack.c.l.b16 %v120
    %v865 = vunpack.c.h.b16 %v120
    %v866 = vunpack.c.l.b16 %v121
    %v867 = vunpack.c.h.b16 %v121
    %v868 = vunpack.c.l.b16 %v122
    %v869 = vunpack.c.h.b16 %v122
    %v870 = vunpack.c.l.b16 %v123
    %v871 = vunpack.c.h.b16 %v123
    %v872 = vunpack.c.l.b16 %v124
    %v873 = vunpack.c.h.b16 %v124
    %v874 = vunpack.c.l.b16 %v125
    %v875 = vunpack.c.h.b16 %v125
    %v876 = vunpack.c.l.b16 %v126
    %v877 = vunpack.c.h.b16 %v126
    %v878 = vunpack.c.l.b16 %v127
    %v879 = vunpack.c.h.b16 %v127
    %v880 = vunpack.c.l.b16 %v128
    %v881 = vunpack.c.h.b16 %v128
    %v882 = vunpack.c.l.b16 %v129
    %v883 = vunpack.c.h.b16 %v129
    %v884 = vunpack.c.l.b16 %v130
    %v885 = vunpack.c.h.b16 %v130
    %v886 = vunpack.c.l.b16 %v131
    %v887 = vunpack.c.h.b16 %v131
    %v888 = vunpack.c.l.b16 %v132
    %v889 = vunpack.c.h.b16 %v132
    %v890 = vunpack.c.l.b16 %v133
    %v891 = vunpack.c.h.b16 %v133
    %v892 = vunpack.c.l.b16 %v134
    %v893 = vunpack.c.h.b16 %v134
    %v894 = vunpack.c.l.b16 %v135
    %v895 = vunpack.c.h.b16 %v135
    %v896 = vunpack.c.l.b16 %v136
    %v897 = vunpack.c.h.b16 %v136
    %v898 = vunpack.c.l.b16 %v137
    %v899 = vunpack.c.h.b16 %v137
    %v900 = vunpack.c.l.b16 %v138
    %v901 = vunpack.c.h.b16 %v138
    %v902 = vunpack.c.l.b16 %v139
    %v903 = vunpack.c.h.b16 %v139
    %v904 = vunpack.c.l.b16 %v140
    %v905 = vunpack.c.h.b16 %v140
    %v906 = vunpack.c.l.b16 %v141
    %v907 = vunpack.c.h.b16 %v141
    %v908 = vunpack.c.l.b16 %v142
    %v909 = vunpack.c.h.b16 %v142
    %v910 = vunpack.c.l.b16 %v143
    %v911 = vunpack.c.h.b16 %v143
    %v912 = vunpack.c.l.b16 %v144
    %v913 = vunpack.c.h.b16 %v144
    %v914 = vunpack.c.l.b16 %v145
    %v915 = vunpack.c.h.b16 %v145
    %v916 = vunpack.c.l.b16 %v146
    %v917 = vunpack.c.h.b16 %v146
    %v918 = vunpack.c.l.b16 %v147
    %v919 = vunpack.c.h.b16 %v147
    %v920 = vunpack.c.l.b16 %v148
    %v921 = vunpack.c.h.b16 %v148
    %v922 = vunpack.c.l.b16 %v149
    %v923 = vunpack.c.h.b16 %v149
    %v924 = vunpack.c.l.b16 %v150
    %v925 = vunpack.c.h.b16 %v150
    %v926 = vunpack.c.l.b16 %v151
    %v927 = vunpack.c.h.b16 %v151
    %v928 = vunpack.c.l.b16 %v152
    %v929 = vunpack.c.h.b16 %v152
    %v930 = vunpack.c.l.b16 %v153
    %v931 = vunpack.c.h.b16 %v153
    %v932 = vunpack.c.l.b16 %v154
    %v933 = vunpack.c.h.b16 %v154
    %v934 = vunpack.c.l.b16 %v155
    %v935 = vunpack.c.h.b16 %v155
    %v936 = vunpack.c.l.b16 %v156
    %v937 = vunpack.c.h.b16 %v156
    %v938 = vunpack.c.l.b16 %v157
    %v939 = vunpack.c.h.b16 %v157
    %v940 = vunpack.c.l.b16 %v158
    %v941 = vunpack.c.h.b16 %v158
    %v942 = vunpack.c.l.b16 %v159
    %v943 = vunpack.c.h.b16 %v159
    %v944 = vunpack.c.l.b16 %v160
    %v945 = vunpack.c.h.b16 %v160
    %v946 = vunpack.c.l.b16 %v161
    %v947 = vunpack.c.h.b16 %v161
    %v948 = vunpack.c.l.b16 %v162
    %v949 = vunpack.c.h.b16 %v162
    %v950 = vunpack.c.l.b16 %v163
    %v951 = vunpack.c.h.b16 %v163
    %v952 = vunpack.c.l.b16 %v164
    %v953 = vunpack.c.h.b16 %v164
    %v954 = vunpack.c.l.b16 %v165
    %v955 = vunpack.c.h.b16 %v165
    %v956 = vunpack.c.l.b16 %v166
    %v957 = vunpack.c.h.b16 %v166
    %v958 = vunpack.c.l.b16 %v167
    %v959 = vunpack.c.h.b16 %v167
    %v960 = vunpack.c.l.b16 %v168
    %v961 = vunpack.c.h.b16 %v168
    %v962 = vunpack.c.l.b16 %v169
    %v963 = vunpack.c.h.b16 %v169
    %v964 = vunpack.c.l.b16 %v170
    %v965 = vunpack.c.h.b16 %v170
    %v966 = vunpack.c.l.b16 %v171
    %v967 = vunpack.c.h.b16 %v171
    %v968 = vunpack.c.l.b16 %v172
    %v969 = vunpack.c.h.b16 %v172
    %v970 = vunpack.c.l.b16 %v173
    %v971 = vunpack.c.h.b16 %v173
    %v972 = vunpack.c.l.b16 %v174
    %v973 = vunpack.c.h.b16 %v174
    %v974 = vunpack.c.l.b16 %v175
    %v975 = vunpack.c.h.b16 %v175
    %v976 = vunpack.c.l.b16 %v176
    %v977 = vunpack.c.h.b16 %v176
    %v978 = vunpack.c.l.b16 %v177
    %v979 = vunpack.c.h.b16 %v177
    %v980 = vunpack.c.l.b16 %v178
    %v981 = vunpack.c.h.b16 %v178
    %v982 = vunpack.c.l.b16 %v179
    %v983 = vunpack.c.h.b16 %v179
    %v984 = vunpack.c.l.b16 %v180
    %v985 = vunpack.c.h.b16 %v180
    %v986 = vunpack.c.l.b16 %v181
    %v987 = vunpack.c.h.b16 %v181
    %v988 = vunpack.c.l.b16 %v182
    %v989 = vunpack.c.h.b16 %v182
    %v990 = vunpack.c.l.b16 %v183
    %v991 = vunpack.c.h.b16 %v183
    %v992 = vunpack.c.l.b16 %v184
    %v993 = vunpack.c.h.b16 %v184
    %v994 = vunpack.c.l.b16 %v185
    %v995 = vunpack.c.h.b16 %v185
    %v996 = vunpack.c.l.b16 %v186
    %v997 = vunpack.c.h.b16 %v186
    %v998 = vunpack.c.l.b16 %v187
    %v999 = vunpack.c.h.b16 %v187
    %v1000 = vunpack.c.l.b16 %v188
    %v1001 = vunpack.c.h.b16 %v188
    %v1002 = vunpack.c.l.b16 %v189
    %v1003 = vunpack.c.h.b16 %v189
    %v1004 = vunpack.c.l.b16 %v190
    %v1005 = vunpack.c.h.b16 %v190
    %v1006 = vunpack.c.l.b16 %v191
    %v1007 = vunpack.c.h.b16 %v191
    %v1008 = vunpack.c.l.b16 %v192
    %v1009 = vunpack.c.h.b16 %v192
    %v1010 = vunpack.c.l.b16 %v193
    %v1011 = vunpack.c.h.b16 %v193
    %v1012 = vunpack.c.l.b16 %v194
    %v1013 = vunpack.c.h.b16 %v194
    %v1014 = vunpack.c.l.b16 %v195
    %v1015 = vunpack.c.h.b16 %v195
    %v1016 = vunpack.c.l.b16 %v196
    %v1017 = vunpack.c.h.b16 %v196
    %v1018 = vunpack.c.l.b16 %v197
    %v1019 = vunpack.c.h.b16 %v197
    %v1020 = vunpack.c.l.b16 %v198
    %v1021 = vunpack.c.h.b16 %v198
    %v1022 = vunpack.c.l.b16 %v199
    %v1023 = vunpack.c.h.b16 %v199
    %v1024 = vunpack.c.l.b16 %v200
    %v1025 = vunpack.c.h.b16 %v200
    %v1026 = vunpack.c.l.b16 %v201
    %v1027 = vunpack.c.h.b16 %v201
    %v1028 = vunpack.c.l.b16 %v202
    %v1029 = vunpack.c.h.b16 %v202
    %v1030 = vunpack.c.l.b16 %v203
    %v1031 = vunpack.c.h.b16 %v203
    %v1032 = vunpack.c.l.b16 %v204
    %v1033 = vunpack.c.h.b16 %v204
    %v1034 = vunpack.c.l.b16 %v205
    %v1035 = vunpack.c.h.b16 %v205
    %v1036 = vunpack.c.l.b16 %v206
    %v1037 = vunpack.c.h.b16 %v206
    %v1038 = vunpack.c.l.b16 %v207
    %v1039 = vunpack.c.h.b16 %v207
    %v1040 = vunpack.c.l.b16 %v208
    %v1041 = vunpack.c.h.b16 %v208
    %v1042 = vunpack.c.l.b16 %v209
    %v1043 = vunpack.c.h.b16 %v209
    %v1044 = vunpack.c.l.b16 %v210
    %v1045 = vunpack.c.h.b16 %v210
    %v1046 = vunpack.c.l.b16 %v211
    %v1047 = vunpack.c.h.b16 %v211
    %v1048 = vunpack.c.l.b16 %v212
    %v1049 = vunpack.c.h.b16 %v212
    %v1050 = vunpack.c.l.b16 %v213
    %v1051 = vunpack.c.h.b16 %v213
    %v1052 = vunpack.c.l.b16 %v214
    %v1053 = vunpack.c.h.b16 %v214
    %v1054 = vunpack.c.l.b16 %v215
    %v1055 = vunpack.c.h.b16 %v215
    %v1056 = vunpack.c.l.b16 %v216
    %v1057 = vunpack.c.h.b16 %v216
    %v1058 = vunpack.c.l.b16 %v217
    %v1059 = vunpack.c.h.b16 %v217
    %v1060 = vunpack.c.l.b16 %v218
    %v1061 = vunpack.c.h.b16 %v218
    %v1062 = vunpack.c.l.b16 %v219
    %v1063 = vunpack.c.h.b16 %v219
    %v1064 = vunpack.c.l.b16 %v220
    %v1065 = vunpack.c.h.b16 %v220
    %v1066 = vunpack.c.l.b16 %v221
    %v1067 = vunpack.c.h.b16 %v221
    %v1068 = vunpack.c.l.b16 %v222
    %v1069 = vunpack.c.h.b16 %v222
    %v1070 = vunpack.c.l.b16 %v223
    %v1071 = vunpack.c.h.b16 %v223
    %v1072 = vunpack.c.l.b16 %v224
    %v1073 = vunpack.c.h.b16 %v224
    %v1074 = vunpack.c.l.b16 %v225
    %v1075 = vunpack.c.h.b16 %v225
    %v1076 = vunpack.c.l.b16 %v226
    %v1077 = vunpack.c.h.b16 %v226
    %v1078 = vunpack.c.l.b16 %v227
    %v1079 = vunpack.c.h.b16 %v227
    %v1080 = vunpack.c.l.b16 %v228
    %v1081 = vunpack.c.h.b16 %v228
    %v1082 = vunpack.c.l.b16 %v229
    %v1083 = vunpack.c.h.b16 %v229
    %v1084 = vunpack.c.l.b16 %v230
    %v1085 = vunpack.c.h.b16 %v230
    %v1086 = vunpack.c.l.b16 %v231
    %v1087 = vunpack.c.h.b16 %v231
    %v1088 = vunpack.c.l.b16 %v232
    %v1089 = vunpack.c.h.b16 %v232
    %v1090 = vunpack.c.l.b16 %v233
    %v1091 = vunpack.c.h.b16 %v233
    %v1092 = vunpack.c.l.b16 %v234
    %v1093 = vunpack.c.h.b16 %v234
    %v1094 = vunpack.c.l.b16 %v235
    %v1095 = vunpack.c.h.b16 %v235
    %v1096 = vunpack.c.l.b16 %v236
    %v1097 = vunpack.c.h.b16 %v236
    %v1098 = vunpack.c.l.b16 %v237
    %v1099 = vunpack.c.h.b16 %v237
    %v1100 = vunpack.c.l.b16 %v238
    %v1101 = vunpack.c.h.b16 %v238
    %v1102 = vunpack.c.l.b16 %v239
    %v1103 = vunpack.c.h.b16 %v239
    %v1104 = vunpack.c.l.b16 %v240
    %v1105 = vunpack.c.h.b16 %v240
    %v1106 = vunpack.c.l.b16 %v241
    %v1107 = vunpack.c.h.b16 %v241
    %v1108 = vunpack.c.l.b16 %v242
    %v1109 = vunpack.c.h.b16 %v242
    %v1110 = vunpack.c.l.b16 %v243
    %v1111 = vunpack.c.h.b16 %v243
    %v1112 = vunpack.c.l.b16 %v244
    %v1113 = vunpack.c.h.b16 %v244
    %v1114 = vunpack.c.l.b16 %v245
    %v1115 = vunpack.c.h.b16 %v245
    %v1116 = vunpack.c.l.b16 %v246
    %v1117 = vunpack.c.h.b16 %v246
    %v1118 = vunpack.c.l.b16 %v247
    %v1119 = vunpack.c.h.b16 %v247
    %v1120 = vunpack.c.l.b16 %v248
    %v1121 = vunpack.c.h.b16 %v248
    %v1122 = vunpack.c.l.b16 %v249
    %v1123 = vunpack.c.h.b16 %v249
    %v1124 = vunpack.c.l.b16 %v250
    %v1125 = vunpack.c.h.b16 %v250
    %v1126 = vunpack.c.l.b16 %v251
    %v1127 = vunpack.c.h.b16 %v251
    %v1128 = vunpack.c.l.b16 %v252
    %v1129 = vunpack.c.h.b16 %v252
    %v1130 = vunpack.c.l.b16 %v253
    %v1131 = vunpack.c.h.b16 %v253
    %v1132 = vunpack.c.l.b16 %v254
    %v1133 = vunpack.c.h.b16 %v254
    %v1134 = vunpack.c.l.b16 %v255
    %v1135 = vunpack.c.h.b16 %v255
    %v1136 = vunpack.c.l.b16 %v256
    %v1137 = vunpack.c.h.b16 %v256
    %v1138 = vunpack.c.l.b16 %v257
    %v1139 = vunpack.c.h.b16 %v257
    %v1140 = vunpack.c.l.b16 %v258
    %v1141 = vunpack.c.h.b16 %v258
    %v1142 = vunpack.c.l.b16 %v259
    %v1143 = vunpack.c.h.b16 %v259
    %v1144 = vunpack.c.l.b16 %v260
    %v1145 = vunpack.c.h.b16 %v260
    %v1146 = vunpack.c.l.b16 %v261
    %v1147 = vunpack.c.h.b16 %v261
    %v1148 = vunpack.c.l.b16 %v262
    %v1149 = vunpack.c.h.b16 %v262
    %v1150 = vunpack.c.l.b16 %v263
    %v1151 = vunpack.c.h.b16 %v263
    %v1152 = vunpack.c.l.b16 %v264
    %v1153 = vunpack.c.h.b16 %v264
    %v1154 = vunpack.c.l.b16 %v265
    %v1155 = vunpack.c.h.b16 %v265
    %v1156 = vunpack.c.l.b16 %v266
    %v1157 = vunpack.c.h.b16 %v266
    %v1158 = vunpack.c.l.b16 %v267
    %v1159 = vunpack.c.h.b16 %v267
    %v1160 = vunpack.c.l.b16 %v268
    %v1161 = vunpack.c.h.b16 %v268
    %v1162 = vunpack.c.l.b16 %v269
    %v1163 = vunpack.c.h.b16 %v269
    %v1164 = vunpack.c.l.b16 %v270
    %v1165 = vunpack.c.h.b16 %v270
    %v1166 = vunpack.c.l.b16 %v271
    %v1167 = vunpack.c.h.b16 %v271
    %v1168 = vunpack.c.l.b16 %v272
    %v1169 = vunpack.c.h.b16 %v272
    %v1170 = vunpack.c.l.b16 %v273
    %v1171 = vunpack.c.h.b16 %v273
    %v1172 = vunpack.c.l.b16 %v274
    %v1173 = vunpack.c.h.b16 %v274
    %v1174 = vunpack.c.l.b16 %v275
    %v1175 = vunpack.c.h.b16 %v275
    %v1176 = vunpack.c.l.b16 %v276
    %v1177 = vunpack.c.h.b16 %v276
    %v1178 = vunpack.c.l.b16 %v277
    %v1179 = vunpack.c.h.b16 %v277
    %v1180 = vunpack.c.l.b16 %v278
    %v1181 = vunpack.c.h.b16 %v278
    %v1182 = vunpack.c.l.b16 %v279
    %v1183 = vunpack.c.h.b16 %v279
    %v1184 = vunpack.c.l.b16 %v280
    %v1185 = vunpack.c.h.b16 %v280
    %v1186 = vunpack.c.l.b16 %v281
    %v1187 = vunpack.c.h.b16 %v281
    %v1188 = vunpack.c.l.b16 %v282
    %v1189 = vunpack.c.h.b16 %v282
    %v1190 = vunpack.c.l.b16 %v283
    %v1191 = vunpack.c.h.b16 %v283
    %v1192 = vunpack.c.l.b16 %v284
    %v1193 = vunpack.c.h.b16 %v284
    %v1194 = vunpack.c.l.b16 %v285
    %v1195 = vunpack.c.h.b16 %v285
    %v1196 = vunpack.c.l.b16 %v286
    %v1197 = vunpack.c.h.b16 %v286
    %v1198 = vunpack.c.l.b16 %v287
    %v1199 = vunpack.c.h.b16 %v287
    %v1200 = vunpack.c.l.b16 %v288
    %v1201 = vunpack.c.h.b16 %v288
    %v1202 = vunpack.c.l.b16 %v289
    %v1203 = vunpack.c.h.b16 %v289
    %v1204 = vunpack.c.l.b16 %v290
    %v1205 = vunpack.c.h.b16 %v290
    %v1206 = vunpack.c.l.b16 %v291
    %v1207 = vunpack.c.h.b16 %v291
    %v1208 = vunpack.c.l.b16 %v292
    %v1209 = vunpack.c.h.b16 %v292
    %v1210 = vunpack.c.l.b16 %v293
    %v1211 = vunpack.c.h.b16 %v293
    %v1212 = vunpack.c.l.b16 %v294
    %v1213 = vunpack.c.h.b16 %v294
    %v1214 = vunpack.c.l.b16 %v295
    %v1215 = vunpack.c.h.b16 %v295
    %v1216 = vunpack.c.l.b16 %v296
    %v1217 = vunpack.c.h.b16 %v296
    %v1218 = vunpack.c.l.b16 %v297
    %v1219 = vunpack.c.h.b16 %v297
    %v1220 = vunpack.c.l.b16 %v298
    %v1221 = vunpack.c.h.b16 %v298
    %v1222 = vunpack.c.l.b16 %v299
    %v1223 = vunpack.c.h.b16 %v299
    %v1224 = vunpack.c.l.b16 %v300
    %v1225 = vunpack.c.h.b16 %v300
    %v1226 = vunpack.c.l.b16 %v301
    %v1227 = vunpack.c.h.b16 %v301
    %v1228 = vunpack.c.l.b16 %v302
    %v1229 = vunpack.c.h.b16 %v302
    %v1230 = vunpack.c.l.b16 %v303
    %v1231 = vunpack.c.h.b16 %v303
    %v1232 = vunpack.c.l.b16 %v304
    %v1233 = vunpack.c.h.b16 %v304
    %v1234 = vunpack.c.l.b16 %v305
    %v1235 = vunpack.c.h.b16 %v305
    %v1236 = vunpack.c.l.b16 %v306
    %v1237 = vunpack.c.h.b16 %v306
    %v1238 = vunpack.c.l.b16 %v307
    %v1239 = vunpack.c.h.b16 %v307
    %v1240 = vunpack.c.l.b16 %v308
    %v1241 = vunpack.c.h.b16 %v308
    %v1242 = vunpack.c.l.b16 %v309
    %v1243 = vunpack.c.h.b16 %v309
    %v1244 = vunpack.c.l.b16 %v310
    %v1245 = vunpack.c.h.b16 %v310
    %v1246 = vunpack.c.l.b16 %v311
    %v1247 = vunpack.c.h.b16 %v311
    %v1248 = vunpack.c.l.b16 %v312
    %v1249 = vunpack.c.h.b16 %v312
    %v1250 = vunpack.c.l.b16 %v313
    %v1251 = vunpack.c.h.b16 %v313
    %v1252 = vunpack.c.l.b16 %v314
    %v1253 = vunpack.c.h.b16 %v314
    %v1254 = vunpack.c.l.b16 %v315
    %v1255 = vunpack.c.h.b16 %v315
    %v1256 = vunpack.c.l.b16 %v316
    %v1257 = vunpack.c.h.b16 %v316
    %v1258 = vunpack.c.l.b16 %v317
    %v1259 = vunpack.c.h.b16 %v317
    %v1260 = vunpack.c.l.b16 %v318
    %v1261 = vunpack.c.h.b16 %v318
    %v1262 = vunpack.c.l.b16 %v319
    %v1263 = vunpack.c.h.b16 %v319
    %v1264 = vunpack.c.l.b16 %v320
    %v1265 = vunpack.c.h.b16 %v320
    %v1266 = vunpack.c.l.b16 %v321
    %v1267 = vunpack.c.h.b16 %v321
    %v1268 = vunpack.c.l.b16 %v322
    %v1269 = vunpack.c.h.b16 %v322
    %v1270 = vunpack.c.l.b16 %v323
    %v1271 = vunpack.c.h.b16 %v323
    %v1272 = vunpack.c.l.b16 %v324
    %v1273 = vunpack.c.h.b16 %v324
    %v1274 = vunpack.c.l.b16 %v325
    %v1275 = vunpack.c.h.b16 %v325
    %v1276 = vpack.c.b16 %v768, %v764
    %v1277 = vpack.c.b16 %v769, %v765
    %v1278 = vpack.c.b16 %v770, %v766
    %v1279 = vpack.c.b16 %v771, %v767
    %v1280 = vpack.c.b16 %v776, %v772
    %v1281 = vpack.c.b16 %v777, %v773
    %v1282 = vpack.c.b16 %v778, %v774
    %v1283 = vpack.c.b16 %v779, %v775
    %v1284 = vpack.c.b16 %v784, %v780
    %v1285 = vpack.c.b16 %v785, %v781
    %v1286 = vpack.c.b16 %v786, %v782
    %v1287 = vpack.c.b16 %v787, %v783
    %v1288 = vpack.c.b16 %v792, %v788
    %v1289 = vpack.c.b16 %v793, %v789
    %v1290 = vpack.c.b16 %v794, %v790
    %v1291 = vpack.c.b16 %v795, %v791
    %v1292 = vpack.c.b16 %v800, %v796
    %v1293 = vpack.c.b16 %v801, %v797
    %v1294 = vpack.c.b16 %v802, %v798
    %v1295 = vpack.c.b16 %v803, %v799
    %v1296 = vpack.c.b16 %v808, %v804
    %v1297 = vpack.c.b16 %v809, %v805
    %v1298 = vpack.c.b16 %v810, %v806
    %v1299 = vpack.c.b16 %v811, %v807
    %v1300 = vpack.c.b16 %v816, %v812
    %v1301 = vpack.c.b16 %v817, %v813
    %v1302 = vpack.c.b16 %v818, %v814
    %v1303 = vpack.c.b16 %v819, %v815
    %v1304 = vpack.c.b16 %v824, %v820
    %v1305 = vpack.c.b16 %v825, %v821
    %v1306 = vpack.c.b16 %v826, %v822
    %v1307 = vpack.c.b16 %v827, %v823
    %v1308 = vpack.c.b16 %v832, %v828
    %v1309 = vpack.c.b16 %v833, %v829
    %v1310 = vpack.c.b16 %v834, %v830
    %v1311 = vpack.c.b16 %v835, %v831
    %v1312 = vpack.c.b16 %v840, %v836
    %v1313 = vpack.c.b16 %v841, %v837
    %v1314 = vpack.c.b16 %v842, %v838
    %v1315 = vpack.c.b16 %v843, %v839
    %v1316 = vpack.c.b16 %v848, %v844
    %v1317 = vpack.c.b16 %v849, %v845
    %v1318 = vpack.c.b16 %v850, %v846
    %v1319 = vpack.c.b16 %v851, %v847
    %v1320 = vpack.c.b16 %v856, %v852
    %v1321 = vpack.c.b16 %v857, %v853
    %v1322 = vpack.c.b16 %v858, %v854
    %v1323 = vpack.c.b16 %v859, %v855
    %v1324 = vpack.c.b16 %v864, %v860
    %v1325 = vpack.c.b16 %v865, %v861
    %v1326 = vpack.c.b16 %v866, %v862
    %v1327 = vpack.c.b16 %v867, %v863
    %v1328 = vpack.c.b16 %v872, %v868
    %v1329 = vpack.c.b16 %v873, %v869
    %v1330 = vpack.c.b16 %v874, %v870
    %v1331 = vpack.c.b16 %v875, %v871
    %v1332 = vpack.c.b16 %v880, %v876
    %v1333 = vpack.c.b16 %v881, %v877
    %v1334 = vpack.c.b16 %v882, %v878
    %v1335 = vpack.c.b16 %v883, %v879
    %v1336 = vpack.c.b16 %v888, %v884
    %v1337 = vpack.c.b16 %v889, %v885
    %v1338 = vpack.c.b16 %v890, %v886
    %v1339 = vpack.c.b16 %v891, %v887
    %v1340 = vpack.c.b16 %v896, %v892
    %v1341 = vpack.c.b16 %v897, %v893
    %v1342 = vpack.c.b16 %v898, %v894
    %v1343 = vpack.c.b16 %v899, %v895
    %v1344 = vpack.c.b16 %v904, %v900
    %v1345 = vpack.c.b16 %v905, %v901
    %v1346 = vpack.c.b16 %v906, %v902
    %v1347 = vpack.c.b16 %v907, %v903
    %v1348 = vpack.c.b16 %v912, %v908
    %v1349 = vpack.c.b16 %v913, %v909
    %v1350 = vpack.c.b16 %v914, %v910
    %v1351 = vpack.c.b16 %v915, %v911
    %v1352 = vpack.c.b16 %v920, %v916
    %v1353 = vpack.c.b16 %v921, %v917
    %v1354 = vpack.c.b16 %v922, %v918
    %v1355 = vpack.c.b16 %v923, %v919
    %v1356 = vpack.c.b16 %v928, %v924
    %v1357 = vpack.c.b16 %v929, %v925
    %v1358 = vpack.c.b16 %v930, %v926
    %v1359 = vpack.c.b16 %v931, %v927
    %v1360 = vpack.c.b16 %v936, %v932
    %v1361 = vpack.c.b16 %v937, %v933
    %v1362 = vpack.c.b16 %v938, %v934
    %v1363 = vpack.c.b16 %v939, %v935
    %v1364 = vpack.c.b16 %v944, %v940
    %v1365 = vpack.c.b16 %v945, %v941
    %v1366 = vpack.c.b16 %v946, %v942
    %v1367 = vpack.c.b16 %v947, %v943
    %v1368 = vpack.c.b16 %v952, %v948
    %v1369 = vpack.c.b16 %v953, %v949
    %v1370 = vpack.c.b16 %v954, %v950
    %v1371 = vpack.c.b16 %v955, %v951
    %v1372 = vpack.c.b16 %v960, %v956
    %v1373 = vpack.c.b16 %v961, %v957
    %v1374 = vpack.c.b16 %v962, %v958
    %v1375 = vpack.c.b16 %v963, %v959
    %v1376 = vpack.c.b16 %v968, %v964
    %v1377 = vpack.c.b16 %v969, %v965
    %v1378 = vpack.c.b16 %v970, %v966
    %v1379 = vpack.c.b16 %v971, %v967
    %v1380 = vpack.c.b16 %v976, %v972
    %v1381 = vpack.c.b16 %v977, %v973
    %v1382 = vpack.c.b16 %v978, %v974
    %v1383 = vpack.c.b16 %v979, %v975
    %v1384 = vpack.c.b16 %v984, %v980
    %v1385 = vpack.c.b16 %v985, %v981
    %v1386 = vpack.c.b16 %v986, %v982
    %v1387 = vpack.c.b16 %v987, %v983
    %v1388 = vpack.c.b16 %v992, %v988
    %v1389 = vpack.c.b16 %v993, %v989
    %v1390 = vpack.c.b16 %v994, %v990
    %v1391 = vpack.c.b16 %v995, %v991
    %v1392 = vpack.c.b16 %v1000, %v996
    %v1393 = vpack.c.b16 %v1001, %v997
    %v1394 = vpack.c.b16 %v1002, %v998
    %v1395 = vpack.c.b16 %v1003, %v999
    %v1396 = vpack.c.b16 %v1008, %v1004
    %v1397 = vpack.c.b16 %v1009, %v1005
    %v1398 = vpack.c.b16 %v1010, %v1006
    %v1399 = vpack.c.b16 %v1011, %v1007
    %v1400 = vpack.c.b16 %v1016, %v1012
    %v1401 = vpack.c.b16 %v1017, %v1013
    %v1402 = vpack.c.b16 %v1018, %v1014
    %v1403 = vpack.c.b16 %v1019, %v1015
    %v1404 = vpack.c.b16 %v1024, %v1020
    %v1405 = vpack.c.b16 %v1025, %v1021
    %v1406 = vpack.c.b16 %v1026, %v1022
    %v1407 = vpack.c.b16 %v1027, %v1023
    %v1408 = vpack.c.b16 %v1032, %v1028
    %v1409 = vpack.c.b16 %v1033, %v1029
    %v1410 = vpack.c.b16 %v1034, %v1030
    %v1411 = vpack.c.b16 %v1035, %v1031
    %v1412 = vpack.c.b16 %v1040, %v1036
    %v1413 = vpack.c.b16 %v1041, %v1037
    %v1414 = vpack.c.b16 %v1042, %v1038
    %v1415 = vpack.c.b16 %v1043, %v1039
    %v1416 = vpack.c.b16 %v1048, %v1044
    %v1417 = vpack.c.b16 %v1049, %v1045
    %v1418 = vpack.c.b16 %v1050, %v1046
    %v1419 = vpack.c.b16 %v1051, %v1047
    %v1420 = vpack.c.b16 %v1056, %v1052
    %v1421 = vpack.c.b16 %v1057, %v1053
    %v1422 = vpack.c.b16 %v1058, %v1054
    %v1423 = vpack.c.b16 %v1059, %v1055
    %v1424 = vpack.c.b16 %v1064, %v1060
    %v1425 = vpack.c.b16 %v1065, %v1061
    %v1426 = vpack.c.b16 %v1066, %v1062
    %v1427 = vpack.c.b16 %v1067, %v1063
    %v1428 = vpack.c.b16 %v1072, %v1068
    %v1429 = vpack.c.b16 %v1073, %v1069
    %v1430 = vpack.c.b16 %v1074, %v1070
    %v1431 = vpack.c.b16 %v1075, %v1071
    %v1432 = vpack.c.b16 %v1080, %v1076
    %v1433 = vpack.c.b16 %v1081, %v1077
    %v1434 = vpack.c.b16 %v1082, %v1078
    %v1435 = vpack.c.b16 %v1083, %v1079
    %v1436 = vpack.c.b16 %v1088, %v1084
    %v1437 = vpack.c.b16 %v1089, %v1085
    %v1438 = vpack.c.b16 %v1090, %v1086
    %v1439 = vpack.c.b16 %v1091, %v1087
    %v1440 = vpack.c.b16 %v1096, %v1092
    %v1441 = vpack.c.b16 %v1097, %v1093
    %v1442 = vpack.c.b16 %v1098, %v1094
    %v1443 = vpack.c.b16 %v1099, %v1095
    %v1444 = vpack.c.b16 %v1104, %v1100
    %v1445 = vpack.c.b16 %v1105, %v1101
    %v1446 = vpack.c.b16 %v1106, %v1102
    %v1447 = vpack.c.b16 %v1107, %v1103
    %v1448 = vpack.c.b16 %v1112, %v1108
    %v1449 = vpack.c.b16 %v1113, %v1109
    %v1450 = vpack.c.b16 %v1114, %v1110
    %v1451 = vpack.c.b16 %v1115, %v1111
    %v1452 = vpack.c.b16 %v1120, %v1116
    %v1453 = vpack.c.b16 %v1121, %v1117
    %v1454 = vpack.c.b16 %v1122, %v1118
    %v1455 = vpack.c.b16 %v1123, %v1119
    %v1456 = vpack.c.b16 %v1128, %v1124
    %v1457 = vpack.c.b16 %v1129, %v1125
    %v1458 = vpack.c.b16 %v1130, %v1126
    %v1459 = vpack.c.b16 %v1131, %v1127
    %v1460 = vpack.c.b16 %v1136, %v1132
    %v1461 = vpack.c.b16 %v1137, %v1133
    %v1462 = vpack.c.b16 %v1138, %v1134
    %v1463 = vpack.c.b16 %v1139, %v1135
    %v1464 = vpack.c.b16 %v1144, %v1140
    %v1465 = vpack.c.b16 %v1145, %v1141
    %v1466 = vpack.c.b16 %v1146, %v1142
    %v1467 = vpack.c.b16 %v1147, %v1143
    %v1468 = vpack.c.b16 %v1152, %v1148
    %v1469 = vpack.c.b16 %v1153, %v1149
    %v1470 = vpack.c.b16 %v1154, %v1150
    %v1471 = vpack.c.b16 %v1155, %v1151
    %v1472 = vpack.c.b16 %v1160, %v1156
    %v1473 = vpack.c.b16 %v1161, %v1157
    %v1474 = vpack.c.b16 %v1162, %v1158
    %v1475 = vpack.c.b16 %v1163, %v1159
    %v1476 = vpack.c.b16 %v1168, %v1164
    %v1477 = vpack.c.b16 %v1169, %v1165
    %v1478 = vpack.c.b16 %v1170, %v1166
    %v1479 = vpack.c.b16 %v1171, %v1167
    %v1480 = vpack.c.b16 %v1176, %v1172
    %v1481 = vpack.c.b16 %v1177, %v1173
    %v1482 = vpack.c.b16 %v1178, %v1174
    %v1483 = vpack.c.b16 %v1179, %v1175
    %v1484 = vpack.c.b16 %v1184, %v1180
    %v1485 = vpack.c.b16 %v1185, %v1181
    %v1486 = vpack.c.b16 %v1186, %v1182
    %v1487 = vpack.c.b16 %v1187, %v1183
    %v1488 = vpack.c.b16 %v1192, %v1188
    %v1489 = vpack.c.b16 %v1193, %v1189
    %v1490 = vpack.c.b16 %v1194, %v1190
    %v1491 = vpack.c.b16 %v1195, %v1191
    %v1492 = vpack.c.b16 %v1200, %v1196
    %v1493 = vpack.c.b16 %v1201, %v1197
    %v1494 = vpack.c.b16 %v1202, %v1198
    %v1495 = vpack.c.b16 %v1203, %v1199
    %v1496 = vpack.c.b16 %v1208, %v1204
    %v1497 = vpack.c.b16 %v1209, %v1205
    %v1498 = vpack.c.b16 %v1210, %v1206
    %v1499 = vpack.c.b16 %v1211, %v1207
    %v1500 = vpack.c.b16 %v1216, %v1212
    %v1501 = vpack.c.b16 %v1217, %v1213
    %v1502 = vpack.c.b16 %v1218, %v1214
    %v1503 = vpack.c.b16 %v1219, %v1215
    %v1504 = vpack.c.b16 %v1224, %v1220
    %v1505 = vpack.c.b16 %v1225, %v1221
    %v1506 = vpack.c.b16 %v1226, %v1222
    %v1507 = vpack.c.b16 %v1227, %v1223
    %v1508 = vpack.c.b16 %v1232, %v1228
    %v1509 = vpack.c.b16 %v1233, %v1229
    %v1510 = vpack.c.b16 %v1234, %v1230
    %v1511 = vpack.c.b16 %v1235, %v1231
    %v1512 = vpack.c.b16 %v1240, %v1236
    %v1513 = vpack.c.b16 %v1241, %v1237
    %v1514 = vpack.c.b16 %v1242, %v1238
    %v1515 = vpack.c.b16 %v1243, %v1239
    %v1516 = vpack.c.b16 %v1248, %v1244
    %v1517 = vpack.c.b16 %v1249, %v1245
    %v1518 = vpack.c.b16 %v1250, %v1246
    %v1519 = vpack.c.b16 %v1251, %v1247
    %v1520 = vpack.c.b16 %v1256, %v1252
    %v1521 = vpack.c.b16 %v1257, %v1253
    %v1522 = vpack.c.b16 %v1258, %v1254
    %v1523 = vpack.c.b16 %v1259, %v1255
    %v1524 = vpack.c.b16 %v1264, %v1260
    %v1525 = vpack.c.b16 %v1265, %v1261
    %v1526 = vpack.c.b16 %v1266, %v1262
    %v1527 = vpack.c.b16 %v1267, %v1263
    %v1528 = vpack.c.b16 %v1272, %v1268
    %v1529 = vpack.c.b16 %v1273, %v1269
    %v1530 = vpack.c.b16 %v1274, %v1270
    %v1531 = vpack.c.b16 %v1275, %v1271
    %1788 = vmatprep.subr.bf16.mxu0 %v1277
    %1789 = vmatpush1.bf16.msra.mxu0 %v1276
    %1790 = vmatprep.subr.bf16.mxu0 %v1281
    %1791 = vmatpush1.bf16.msra.mxu0 %v1280
    %1792 = vmatprep.subr.bf16.mxu0 %v1285
    %1793 = vmatpush1.bf16.msra.mxu0 %v1284
    %1794 = vmatprep.subr.bf16.mxu0 %v1289
    %1795 = vmatpush1.bf16.msra.mxu0 %v1288
    %1796 = vmatprep.subr.bf16.mxu0 %v1293
    %1797 = vmatpush1.bf16.msra.mxu0 %v1292
    %1798 = vmatprep.subr.bf16.mxu0 %v1297
    %1799 = vmatpush1.bf16.msra.mxu0 %v1296
    %1800 = vmatprep.subr.bf16.mxu0 %v1301
    %1801 = vmatpush1.bf16.msra.mxu0 %v1300
    %1802 = vmatprep.subr.bf16.mxu0 %v1305
    %1803 = vmatpush1.bf16.msra.mxu0 %v1304
    %1804 = vmatprep.subr.bf16.mxu0 %v1309
    %1805 = vmatpush1.bf16.msra.mxu0 %v1308
    %1806 = vmatprep.subr.bf16.mxu0 %v1313
    %1807 = vmatpush1.bf16.msra.mxu0 %v1312
    %1808 = vmatprep.subr.bf16.mxu0 %v1317
    %1809 = vmatpush1.bf16.msra.mxu0 %v1316
    %1810 = vmatprep.subr.bf16.mxu0 %v1321
    %1811 = vmatpush1.bf16.msra.mxu0 %v1320
    %1812 = vmatprep.subr.bf16.mxu0 %v1325
    %1813 = vmatpush1.bf16.msra.mxu0 %v1324
    %1814 = vmatprep.subr.bf16.mxu0 %v1329
    %1815 = vmatpush1.bf16.msra.mxu0 %v1328
    %1816 = vmatprep.subr.bf16.mxu0 %v1333
    %1817 = vmatpush1.bf16.msra.mxu0 %v1332
    %1818 = vmatprep.subr.bf16.mxu0 %v1337
    %1819 = vmatpush1.bf16.msra.mxu0 %v1336
    %1820 = vmatprep.mubr.bf16.mxu0 %v445
    %1821 = vmatmul.mubr.bf16.gmra.mrb[0].mxu0 %v444
    %v1822 = vpop.f32.mrb[0].mxu0
    %v1823 = vadd.f32 %v331, %v1822
    %v1824 = vpop.f32.mrb[0].mxu0
    %v1825 = vadd.f32 %v335, %v1824
    %v1826 = vpop.f32.mrb[0].mxu0
    %v1827 = vadd.f32 %v331, %v1826
    %v1828 = vpop.f32.mrb[0].mxu0
    %v1829 = vadd.f32 %v335, %v1828
    %1830 = vmatprep.mubr.bf16.mxu0 %v453
    %1831 = vmatmul.mubr.bf16.gmra.mrb[0].mxu0 %v452
    %v1832 = vpop.f32.mrb[0].mxu0
    %v1833 = vadd.f32 %v331, %v1832
    %v1834 = vpop.f32.mrb[0].mxu0
    %v1835 = vadd.f32 %v335, %v1834
    %v1836 = vpop.f32.mrb[0].mxu0
    %v1837 = vadd.f32 %v331, %v1836
    %v1838 = vpop.f32.mrb[0].mxu0
    %v1839 = vadd.f32 %v335, %v1838
    %1840 = vmatprep.mubr.bf16.mxu0 %v461
    %1841 = vmatmul.mubr.bf16.gmra.mrb[0].mxu0 %v460
    %v1842 = vpop.f32.mrb[0].mxu0
    %v1843 = vadd.f32 %v331, %v1842
    %v1844 = vpop.f32.mrb[0].mxu0
    %v1845 = vadd.f32 %v335, %v1844
    %v1846 = vpop.f32.mrb[0].mxu0
    %v1847 = vadd.f32 %v331, %v1846
    %v1848 = vpop.f32.mrb[0].mxu0
    %v1849 = vadd.f32 %v335, %v1848
    %1850 = vmatprep.mubr.bf16.mxu0 %v469
    %1851 = vmatmul.mubr.bf16.gmra.mrb[0].mxu0 %v468
    %v1852 = vpop.f32.mrb[0].mxu0
    %v1853 = vadd.f32 %v331, %v1852
    %v1854 = vpop.f32.mrb[0].mxu0
    %v1855 = vadd.f32 %v335, %v1854
    %v1856 = vpop.f32.mrb[0].mxu0
    %v1857 = vadd.f32 %v331, %v1856
    %v1858 = vpop.f32.mrb[0].mxu0
    %v1859 = vadd.f32 %v335, %v1858
    %1860 = vdwg.mxu0
    %1861 = vmatprep.subr.bf16.mxu0 %v1341
    %1862 = vmatpush1.bf16.msra.mxu0 %v1340
    %1863 = vmatprep.subr.bf16.mxu0 %v1345
    %1864 = vmatpush1.bf16.msra.mxu0 %v1344
    %1865 = vmatprep.subr.bf16.mxu0 %v1349
    %1866 = vmatpush1.bf16.msra.mxu0 %v1348
    %1867 = vmatprep.subr.bf16.mxu0 %v1353
    %1868 = vmatpush1.bf16.msra.mxu0 %v1352
    %1869 = vmatprep.subr.bf16.mxu0 %v1357
    %1870 = vmatpush1.bf16.msra.mxu0 %v1356
    %1871 = vmatprep.subr.bf16.mxu0 %v1361
    %1872 = vmatpush1.bf16.msra.mxu0 %v1360
    %1873 = vmatprep.subr.bf16.mxu0 %v1365
    %1874 = vmatpush1.bf16.msra.mxu0 %v1364
    %1875 = vmatprep.subr.bf16.mxu0 %v1369
    %1876 = vmatpush1.bf16.msra.mxu0 %v1368
    %1877 = vmatprep.subr.bf16.mxu0 %v1373
    %1878 = vmatpush1.bf16.msra.mxu0 %v1372
    %1879 = vmatprep.subr.bf16.mxu0 %v1377
    %1880 = vmatpush1.bf16.msra.mxu0 %v1376
    %1881 = vmatprep.subr.bf16.mxu0 %v1381
    %1882 = vmatpush1.bf16.msra.mxu0 %v1380
    %1883 = vmatprep.subr.bf16.mxu0 %v1385
    %1884 = vmatpush1.bf16.msra.mxu0 %v1384
    %1885 = vmatprep.subr.bf16.mxu0 %v1389
    %1886 = vmatpush1.bf16.msra.mxu0 %v1388
    %1887 = vmatprep.subr.bf16.mxu0 %v1393
    %1888 = vmatpush1.bf16.msra.mxu0 %v1392
    %1889 = vmatprep.subr.bf16.mxu0 %v1397
    %1890 = vmatpush1.bf16.msra.mxu0 %v1396
    %1891 = vmatprep.subr.bf16.mxu0 %v1401
    %1892 = vmatpush1.bf16.msra.mxu0 %v1400
    %1893 = vmatprep.mubr.bf16.mxu0 %v447
    %1894 = vmatmul.mubr.bf16.gmra.mrb[0].mxu0 %v446
    %v1895 = vpop.f32.mrb[0].mxu0
    %v1896 = vadd.f32 %v1823, %v1895
    %v1897 = vpop.f32.mrb[0].mxu0
    %v1898 = vadd.f32 %v1825, %v1897
    %v1899 = vpop.f32.mrb[0].mxu0
    %v1900 = vadd.f32 %v1827, %v1899
    %v1901 = vpop.f32.mrb[0].mxu0
    %v1902 = vadd.f32 %v1829, %v1901
    %1903 = vmatprep.mubr.bf16.mxu0 %v455
    %1904 = vmatmul.mubr.bf16.gmra.mrb[0].mxu0 %v454
    %v1905 = vpop.f32.mrb[0].mxu0
    %v1906 = vadd.f32 %v1833, %v1905
    %v1907 = vpop.f32.mrb[0].mxu0
    %v1908 = vadd.f32 %v1835, %v1907
    %v1909 = vpop.f32.mrb[0].mxu0
    %v1910 = vadd.f32 %v1837, %v1909
    %v1911 = vpop.f32.mrb[0].mxu0
    %v1912 = vadd.f32 %v1839, %v1911
    %1913 = vmatprep.mubr.bf16.mxu0 %v463
    %1914 = vmatmul.mubr.bf16.gmra.mrb[0].mxu0 %v462
    %v1915 = vpop.f32.mrb[0].mxu0
    %v1916 = vadd.f32 %v1843, %v1915
    %v1917 = vpop.f32.mrb[0].mxu0
    %v1918 = vadd.f32 %v1845, %v1917
    %v1919 = vpop.f32.mrb[0].mxu0
    %v1920 = vadd.f32 %v1847, %v1919
    %v1921 = vpop.f32.mrb[0].mxu0
    %v1922 = vadd.f32 %v1849, %v1921
    %1923 = vmatprep.mubr.bf16.mxu0 %v471
    %1924 = vmatmul.mubr.bf16.gmra.mrb[0].mxu0 %v470
    %v1925 = vpop.f32.mrb[0].mxu0
    %v1926 = vadd.f32 %v1853, %v1925
    %v1927 = vpop.f32.mrb[0].mxu0
    %v1928 = vadd.f32 %v1855, %v1927
    %v1929 = vpop.f32.mrb[0].mxu0
    %v1930 = vadd.f32 %v1857, %v1929
    %v1931 = vpop.f32.mrb[0].mxu0
    %v1932 = vadd.f32 %v1859, %v1931
    %1933 = vdwg.mxu0
    %1934 = vmatprep.subr.bf16.mxu0 %v1405
    %1935 = vmatpush1.bf16.msra.mxu0 %v1404
    %1936 = vmatprep.subr.bf16.mxu0 %v1409
    %1937 = vmatpush1.bf16.msra.mxu0 %v1408
    %1938 = vmatprep.subr.bf16.mxu0 %v1413
    %1939 = vmatpush1.bf16.msra.mxu0 %v1412
    %1940 = vmatprep.subr.bf16.mxu0 %v1417
    %1941 = vmatpush1.bf16.msra.mxu0 %v1416
    %1942 = vmatprep.subr.bf16.mxu0 %v1421
    %1943 = vmatpush1.bf16.msra.mxu0 %v1420
    %1944 = vmatprep.subr.bf16.mxu0 %v1425
    %1945 = vmatpush1.bf16.msra.mxu0 %v1424
    %1946 = vmatprep.subr.bf16.mxu0 %v1429
    %1947 = vmatpush1.bf16.msra.mxu0 %v1428
    %1948 = vmatprep.subr.bf16.mxu0 %v1433
    %1949 = vmatpush1.bf16.msra.mxu0 %v1432
    %1950 = vmatprep.subr.bf16.mxu0 %v1437
    %1951 = vmatpush1.bf16.msra.mxu0 %v1436
    %1952 = vmatprep.subr.bf16.mxu0 %v1441
    %1953 = vmatpush1.bf16.msra.mxu0 %v1440
    %1954 = vmatprep.subr.bf16.mxu0 %v1445
    %1955 = vmatpush1.bf16.msra.mxu0 %v1444
    %1956 = vmatprep.subr.bf16.mxu0 %v1449
    %1957 = vmatpush1.bf16.msra.mxu0 %v1448
    %1958 = vmatprep.subr.bf16.mxu0 %v1453
    %1959 = vmatpush1.bf16.msra.mxu0 %v1452
    %1960 = vmatprep.subr.bf16.mxu0 %v1457
    %1961 = vmatpush1.bf16.msra.mxu0 %v1456
    %1962 = vmatprep.subr.bf16.mxu0 %v1461
    %1963 = vmatpush1.bf16.msra.mxu0 %v1460
    %1964 = vmatprep.subr.bf16.mxu0 %v1465
    %1965 = vmatpush1.bf16.msra.mxu0 %v1464
    %1966 = vmatprep.mubr.bf16.mxu0 %v449
    %1967 = vmatmul.mubr.bf16.gmra.mrb[0].mxu0 %v448
    %v1968 = vpop.f32.mrb[0].mxu0
    %v1969 = vadd.f32 %v1896, %v1968
    %v1970 = vpop.f32.mrb[0].mxu0
    %v1971 = vadd.f32 %v1898, %v1970
    %v1972 = vpop.f32.mrb[0].mxu0
    %v1973 = vadd.f32 %v1900, %v1972
    %v1974 = vpop.f32.mrb[0].mxu0
    %v1975 = vadd.f32 %v1902, %v1974
    %1976 = vmatprep.mubr.bf16.mxu0 %v457
    %1977 = vmatmul.mubr.bf16.gmra.mrb[0].mxu0 %v456
    %v1978 = vpop.f32.mrb[0].mxu0
    %v1979 = vadd.f32 %v1906, %v1978
    %v1980 = vpop.f32.mrb[0].mxu0
    %v1981 = vadd.f32 %v1908, %v1980
    %v1982 = vpop.f32.mrb[0].mxu0
    %v1983 = vadd.f32 %v1910, %v1982
    %v1984 = vpop.f32.mrb[0].mxu0
    %v1985 = vadd.f32 %v1912, %v1984
    %1986 = vmatprep.mubr.bf16.mxu0 %v465
    %1987 = vmatmul.mubr.bf16.gmra.mrb[0].mxu0 %v464
    %v1988 = vpop.f32.mrb[0].mxu0
    %v1989 = vadd.f32 %v1916, %v1988
    %v1990 = vpop.f32.mrb[0].mxu0
    %v1991 = vadd.f32 %v1918, %v1990
    %v1992 = vpop.f32.mrb[0].mxu0
    %v1993 = vadd.f32 %v1920, %v1992
    %v1994 = vpop.f32.mrb[0].mxu0
    %v1995 = vadd.f32 %v1922, %v1994
    %1996 = vmatprep.mubr.bf16.mxu0 %v473
    %1997 = vmatmul.mubr.bf16.gmra.mrb[0].mxu0 %v472
    %v1998 = vpop.f32.mrb[0].mxu0
    %v1999 = vadd.f32 %v1926, %v1998
    %v2000 = vpop.f32.mrb[0].mxu0
    %v2001 = vadd.f32 %v1928, %v2000
    %v2002 = vpop.f32.mrb[0].mxu0
    %v2003 = vadd.f32 %v1930, %v2002
    %v2004 = vpop.f32.mrb[0].mxu0
    %v2005 = vadd.f32 %v1932, %v2004
    %2006 = vdwg.mxu0
    %2007 = vmatprep.subr.bf16.mxu0 %v1469
    %2008 = vmatpush1.bf16.msra.mxu0 %v1468
    %2009 = vmatprep.subr.bf16.mxu0 %v1473
    %2010 = vmatpush1.bf16.msra.mxu0 %v1472
    %2011 = vmatprep.subr.bf16.mxu0 %v1477
    %2012 = vmatpush1.bf16.msra.mxu0 %v1476
    %2013 = vmatprep.subr.bf16.mxu0 %v1481
    %2014 = vmatpush1.bf16.msra.mxu0 %v1480
    %2015 = vmatprep.subr.bf16.mxu0 %v1485
    %2016 = vmatpush1.bf16.msra.mxu0 %v1484
    %2017 = vmatprep.subr.bf16.mxu0 %v1489
    %2018 = vmatpush1.bf16.msra.mxu0 %v1488
    %2019 = vmatprep.subr.bf16.mxu0 %v1493
    %2020 = vmatpush1.bf16.msra.mxu0 %v1492
    %2021 = vmatprep.subr.bf16.mxu0 %v1497
    %2022 = vmatpush1.bf16.msra.mxu0 %v1496
    %2023 = vmatprep.subr.bf16.mxu0 %v1501
    %2024 = vmatpush1.bf16.msra.mxu0 %v1500
    %2025 = vmatprep.subr.bf16.mxu0 %v1505
    %2026 = vmatpush1.bf16.msra.mxu0 %v1504
    %2027 = vmatprep.subr.bf16.mxu0 %v1509
    %2028 = vmatpush1.bf16.msra.mxu0 %v1508
    %2029 = vmatprep.subr.bf16.mxu0 %v1513
    %2030 = vmatpush1.bf16.msra.mxu0 %v1512
    %2031 = vmatprep.subr.bf16.mxu0 %v1517
    %2032 = vmatpush1.bf16.msra.mxu0 %v1516
    %2033 = vmatprep.subr.bf16.mxu0 %v1521
    %2034 = vmatpush1.bf16.msra.mxu0 %v1520
    %2035 = vmatprep.subr.bf16.mxu0 %v1525
    %2036 = vmatpush1.bf16.msra.mxu0 %v1524
    %2037 = vmatprep.subr.bf16.mxu0 %v1529
    %2038 = vmatpush1.bf16.msra.mxu0 %v1528
    %2039 = vmatprep.mubr.bf16.mxu0 %v451
    %2040 = vmatmul.mubr.bf16.gmra.mrb[0].mxu0 %v450
    %v2041 = vpop.f32.mrb[0].mxu0
    %v2042 = vadd.f32 %v1969, %v2041
    %v2043 = vpop.f32.mrb[0].mxu0
    %v2044 = vadd.f32 %v1971, %v2043
    %v2045 = vpop.f32.mrb[0].mxu0
    %v2046 = vadd.f32 %v1973, %v2045
    %v2047 = vpop.f32.mrb[0].mxu0
    %v2048 = vadd.f32 %v1975, %v2047
    %2049 = vmatprep.mubr.bf16.mxu0 %v459
    %2050 = vmatmul.mubr.bf16.gmra.mrb[0].mxu0 %v458
    %v2051 = vpop.f32.mrb[0].mxu0
    %v2052 = vadd.f32 %v1979, %v2051
    %v2053 = vpop.f32.mrb[0].mxu0
    %v2054 = vadd.f32 %v1981, %v2053
    %v2055 = vpop.f32.mrb[0].mxu0
    %v2056 = vadd.f32 %v1983, %v2055
    %v2057 = vpop.f32.mrb[0].mxu0
    %v2058 = vadd.f32 %v1985, %v2057
    %2059 = vmatprep.mubr.bf16.mxu0 %v467
    %2060 = vmatmul.mubr.bf16.gmra.mrb[0].mxu0 %v466
    %v2061 = vpop.f32.mrb[0].mxu0
    %v2062 = vadd.f32 %v1989, %v2061
    %v2063 = vpop.f32.mrb[0].mxu0
    %v2064 = vadd.f32 %v1991, %v2063
    %v2065 = vpop.f32.mrb[0].mxu0
    %v2066 = vadd.f32 %v1993, %v2065
    %v2067 = vpop.f32.mrb[0].mxu0
    %v2068 = vadd.f32 %v1995, %v2067
    %2069 = vmatprep.mubr.bf16.mxu0 %v475
    %2070 = vmatmul.mubr.bf16.gmra.mrb[0].mxu0 %v474
    %v2071 = vpop.f32.mrb[0].mxu0
    %v2072 = vadd.f32 %v1999, %v2071
    %v2073 = vpop.f32.mrb[0].mxu0
    %v2074 = vadd.f32 %v2001, %v2073
    %v2075 = vpop.f32.mrb[0].mxu0
    %v2076 = vadd.f32 %v2003, %v2075
    %v2077 = vpop.f32.mrb[0].mxu0
    %v2078 = vadd.f32 %v2005, %v2077
    %2079 = vdwg.mxu0
    %2080 = vmatprep.subr.bf16.mxu0 %v1279
    %2081 = vmatpush1.bf16.msra.mxu0 %v1278
    %2082 = vmatprep.subr.bf16.mxu0 %v1283
    %2083 = vmatpush1.bf16.msra.mxu0 %v1282
    %2084 = vmatprep.subr.bf16.mxu0 %v1287
    %2085 = vmatpush1.bf16.msra.mxu0 %v1286
    %2086 = vmatprep.subr.bf16.mxu0 %v1291
    %2087 = vmatpush1.bf16.msra.mxu0 %v1290
    %2088 = vmatprep.subr.bf16.mxu0 %v1295
    %2089 = vmatpush1.bf16.msra.mxu0 %v1294
    %2090 = vmatprep.subr.bf16.mxu0 %v1299
    %2091 = vmatpush1.bf16.msra.mxu0 %v1298
    %2092 = vmatprep.subr.bf16.mxu0 %v1303
    %2093 = vmatpush1.bf16.msra.mxu0 %v1302
    %2094 = vmatprep.subr.bf16.mxu0 %v1307
    %2095 = vmatpush1.bf16.msra.mxu0 %v1306
    %2096 = vmatprep.subr.bf16.mxu0 %v1311
    %2097 = vmatpush1.bf16.msra.mxu0 %v1310
    %2098 = vmatprep.subr.bf16.mxu0 %v1315
    %2099 = vmatpush1.bf16.msra.mxu0 %v1314
    %2100 = vmatprep.subr.bf16.mxu0 %v1319
    %2101 = vmatpush1.bf16.msra.mxu0 %v1318
    %2102 = vmatprep.subr.bf16.mxu0 %v1323
    %2103 = vmatpush1.bf16.msra.mxu0 %v1322
    %2104 = vmatprep.subr.bf16.mxu0 %v1327
    %2105 = vmatpush1.bf16.msra.mxu0 %v1326
    %2106 = vmatprep.subr.bf16.mxu0 %v1331
    %2107 = vmatpush1.bf16.msra.mxu0 %v1330
    %2108 = vmatprep.subr.bf16.mxu0 %v1335
    %2109 = vmatpush1.bf16.msra.mxu0 %v1334
    %2110 = vmatprep.subr.bf16.mxu0 %v1339
    %2111 = vmatpush1.bf16.msra.mxu0 %v1338
    %2112 = vmatprep.mubr.bf16.mxu0 %v445
    %2113 = vmatmul.mubr.bf16.gmra.mrb[0].mxu0 %v444
    %v2114 = vpop.f32.mrb[0].mxu0
    %v2115 = vadd.f32 %v339, %v2114
    %v2116 = vpop.f32.mrb[0].mxu0
    %v2117 = vadd.f32 %v343, %v2116
    %v2118 = vpop.f32.mrb[0].mxu0
    %v2119 = vadd.f32 %v339, %v2118
    %v2120 = vpop.f32.mrb[0].mxu0
    %v2121 = vadd.f32 %v343, %v2120
    %2122 = vmatprep.mubr.bf16.mxu0 %v453
    %2123 = vmatmul.mubr.bf16.gmra.mrb[0].mxu0 %v452
    %v2124 = vpop.f32.mrb[0].mxu0
    %v2125 = vadd.f32 %v339, %v2124
    %v2126 = vpop.f32.mrb[0].mxu0
    %v2127 = vadd.f32 %v343, %v2126
    %v2128 = vpop.f32.mrb[0].mxu0
    %v2129 = vadd.f32 %v339, %v2128
    %v2130 = vpop.f32.mrb[0].mxu0
    %v2131 = vadd.f32 %v343, %v2130
    %2132 = vmatprep.mubr.bf16.mxu0 %v461
    %2133 = vmatmul.mubr.bf16.gmra.mrb[0].mxu0 %v460
    %v2134 = vpop.f32.mrb[0].mxu0
    %v2135 = vadd.f32 %v339, %v2134
    %v2136 = vpop.f32.mrb[0].mxu0
    %v2137 = vadd.f32 %v343, %v2136
    %v2138 = vpop.f32.mrb[0].mxu0
    %v2139 = vadd.f32 %v339, %v2138
    %v2140 = vpop.f32.mrb[0].mxu0
    %v2141 = vadd.f32 %v343, %v2140
    %2142 = vmatprep.mubr.bf16.mxu0 %v469
    %2143 = vmatmul.mubr.bf16.gmra.mrb[0].mxu0 %v468
    %v2144 = vpop.f32.mrb[0].mxu0
    %v2145 = vadd.f32 %v339, %v2144
    %v2146 = vpop.f32.mrb[0].mxu0
    %v2147 = vadd.f32 %v343, %v2146
    %v2148 = vpop.f32.mrb[0].mxu0
    %v2149 = vadd.f32 %v339, %v2148
    %v2150 = vpop.f32.mrb[0].mxu0
    %v2151 = vadd.f32 %v343, %v2150
    %2152 = vdwg.mxu0
    %2153 = vmatprep.subr.bf16.mxu0 %v1343
    %2154 = vmatpush1.bf16.msra.mxu0 %v1342
    %2155 = vmatprep.subr.bf16.mxu0 %v1347
    %2156 = vmatpush1.bf16.msra.mxu0 %v1346
    %2157 = vmatprep.subr.bf16.mxu0 %v1351
    %2158 = vmatpush1.bf16.msra.mxu0 %v1350
    %2159 = vmatprep.subr.bf16.mxu0 %v1355
    %2160 = vmatpush1.bf16.msra.mxu0 %v1354
    %2161 = vmatprep.subr.bf16.mxu0 %v1359
    %2162 = vmatpush1.bf16.msra.mxu0 %v1358
    %2163 = vmatprep.subr.bf16.mxu0 %v1363
    %2164 = vmatpush1.bf16.msra.mxu0 %v1362
    %2165 = vmatprep.subr.bf16.mxu0 %v1367
    %2166 = vmatpush1.bf16.msra.mxu0 %v1366
    %2167 = vmatprep.subr.bf16.mxu0 %v1371
    %2168 = vmatpush1.bf16.msra.mxu0 %v1370
    %2169 = vmatprep.subr.bf16.mxu0 %v1375
    %2170 = vmatpush1.bf16.msra.mxu0 %v1374
    %2171 = vmatprep.subr.bf16.mxu0 %v1379
    %2172 = vmatpush1.bf16.msra.mxu0 %v1378
    %2173 = vmatprep.subr.bf16.mxu0 %v1383
    %2174 = vmatpush1.bf16.msra.mxu0 %v1382
    %2175 = vmatprep.subr.bf16.mxu0 %v1387
    %2176 = vmatpush1.bf16.msra.mxu0 %v1386
    %2177 = vmatprep.subr.bf16.mxu0 %v1391
    %2178 = vmatpush1.bf16.msra.mxu0 %v1390
    %2179 = vmatprep.subr.bf16.mxu0 %v1395
    %2180 = vmatpush1.bf16.msra.mxu0 %v1394
    %2181 = vmatprep.subr.bf16.mxu0 %v1399
    %2182 = vmatpush1.bf16.msra.mxu0 %v1398
    %2183 = vmatprep.subr.bf16.mxu0 %v1403
    %2184 = vmatpush1.bf16.msra.mxu0 %v1402
    %2185 = vmatprep.mubr.bf16.mxu0 %v447
    %2186 = vmatmul.mubr.bf16.gmra.mrb[0].mxu0 %v446
    %v2187 = vpop.f32.mrb[0].mxu0
    %v2188 = vadd.f32 %v2115, %v2187
    %v2189 = vpop.f32.mrb[0].mxu0
    %v2190 = vadd.f32 %v2117, %v2189
    %v2191 = vpop.f32.mrb[0].mxu0
    %v2192 = vadd.f32 %v2119, %v2191
    %v2193 = vpop.f32.mrb[0].mxu0
    %v2194 = vadd.f32 %v2121, %v2193
    %2195 = vmatprep.mubr.bf16.mxu0 %v455
    %2196 = vmatmul.mubr.bf16.gmra.mrb[0].mxu0 %v454
    %v2197 = vpop.f32.mrb[0].mxu0
    %v2198 = vadd.f32 %v2125, %v2197
    %v2199 = vpop.f32.mrb[0].mxu0
    %v2200 = vadd.f32 %v2127, %v2199
    %v2201 = vpop.f32.mrb[0].mxu0
    %v2202 = vadd.f32 %v2129, %v2201
    %v2203 = vpop.f32.mrb[0].mxu0
    %v2204 = vadd.f32 %v2131, %v2203
    %2205 = vmatprep.mubr.bf16.mxu0 %v463
    %2206 = vmatmul.mubr.bf16.gmra.mrb[0].mxu0 %v462
    %v2207 = vpop.f32.mrb[0].mxu0
    %v2208 = vadd.f32 %v2135, %v2207
    %v2209 = vpop.f32.mrb[0].mxu0
    %v2210 = vadd.f32 %v2137, %v2209
    %v2211 = vpop.f32.mrb[0].mxu0
    %v2212 = vadd.f32 %v2139, %v2211
    %v2213 = vpop.f32.mrb[0].mxu0
    %v2214 = vadd.f32 %v2141, %v2213
    %2215 = vmatprep.mubr.bf16.mxu0 %v471
    %2216 = vmatmul.mubr.bf16.gmra.mrb[0].mxu0 %v470
    %v2217 = vpop.f32.mrb[0].mxu0
    %v2218 = vadd.f32 %v2145, %v2217
    %v2219 = vpop.f32.mrb[0].mxu0
    %v2220 = vadd.f32 %v2147, %v2219
    %v2221 = vpop.f32.mrb[0].mxu0
    %v2222 = vadd.f32 %v2149, %v2221
    %v2223 = vpop.f32.mrb[0].mxu0
    %v2224 = vadd.f32 %v2151, %v2223
    %2225 = vdwg.mxu0
    %2226 = vmatprep.subr.bf16.mxu0 %v1407
    %2227 = vmatpush1.bf16.msra.mxu0 %v1406
    %2228 = vmatprep.subr.bf16.mxu0 %v1411
    %2229 = vmatpush1.bf16.msra.mxu0 %v1410
    %2230 = vmatprep.subr.bf16.mxu0 %v1415
    %2231 = vmatpush1.bf16.msra.mxu0 %v1414
    %2232 = vmatprep.subr.bf16.mxu0 %v1419
    %2233 = vmatpush1.bf16.msra.mxu0 %v1418
    %2234 = vmatprep.subr.bf16.mxu0 %v1423
    %2235 = vmatpush1.bf16.msra.mxu0 %v1422
    %2236 = vmatprep.subr.bf16.mxu0 %v1427
    %2237 = vmatpush1.bf16.msra.mxu0 %v1426
    %2238 = vmatprep.subr.bf16.mxu0 %v1431
    %2239 = vmatpush1.bf16.msra.mxu0 %v1430
    %2240 = vmatprep.subr.bf16.mxu0 %v1435
    %2241 = vmatpush1.bf16.msra.mxu0 %v1434
    %2242 = vmatprep.subr.bf16.mxu0 %v1439
    %2243 = vmatpush1.bf16.msra.mxu0 %v1438
    %2244 = vmatprep.subr.bf16.mxu0 %v1443
    %2245 = vmatpush1.bf16.msra.mxu0 %v1442
    %2246 = vmatprep.subr.bf16.mxu0 %v1447
    %2247 = vmatpush1.bf16.msra.mxu0 %v1446
    %2248 = vmatprep.subr.bf16.mxu0 %v1451
    %2249 = vmatpush1.bf16.msra.mxu0 %v1450
    %2250 = vmatprep.subr.bf16.mxu0 %v1455
    %2251 = vmatpush1.bf16.msra.mxu0 %v1454
    %2252 = vmatprep.subr.bf16.mxu0 %v1459
    %2253 = vmatpush1.bf16.msra.mxu0 %v1458
    %2254 = vmatprep.subr.bf16.mxu0 %v1463
    %2255 = vmatpush1.bf16.msra.mxu0 %v1462
    %2256 = vmatprep.subr.bf16.mxu0 %v1467
    %2257 = vmatpush1.bf16.msra.mxu0 %v1466
    %2258 = vmatprep.mubr.bf16.mxu0 %v449
    %2259 = vmatmul.mubr.bf16.gmra.mrb[0].mxu0 %v448
    %v2260 = vpop.f32.mrb[0].mxu0
    %v2261 = vadd.f32 %v2188, %v2260
    %v2262 = vpop.f32.mrb[0].mxu0
    %v2263 = vadd.f32 %v2190, %v2262
    %v2264 = vpop.f32.mrb[0].mxu0
    %v2265 = vadd.f32 %v2192, %v2264
    %v2266 = vpop.f32.mrb[0].mxu0
    %v2267 = vadd.f32 %v2194, %v2266
    %2268 = vmatprep.mubr.bf16.mxu0 %v457
    %2269 = vmatmul.mubr.bf16.gmra.mrb[0].mxu0 %v456
    %v2270 = vpop.f32.mrb[0].mxu0
    %v2271 = vadd.f32 %v2198, %v2270
    %v2272 = vpop.f32.mrb[0].mxu0
    %v2273 = vadd.f32 %v2200, %v2272
    %v2274 = vpop.f32.mrb[0].mxu0
    %v2275 = vadd.f32 %v2202, %v2274
    %v2276 = vpop.f32.mrb[0].mxu0
    %v2277 = vadd.f32 %v2204, %v2276
    %2278 = vmatprep.mubr.bf16.mxu0 %v465
    %2279 = vmatmul.mubr.bf16.gmra.mrb[0].mxu0 %v464
    %v2280 = vpop.f32.mrb[0].mxu0
    %v2281 = vadd.f32 %v2208, %v2280
    %v2282 = vpop.f32.mrb[0].mxu0
    %v2283 = vadd.f32 %v2210, %v2282
    %v2284 = vpop.f32.mrb[0].mxu0
    %v2285 = vadd.f32 %v2212, %v2284
    %v2286 = vpop.f32.mrb[0].mxu0
    %v2287 = vadd.f32 %v2214, %v2286
    %2288 = vmatprep.mubr.bf16.mxu0 %v473
    %2289 = vmatmul.mubr.bf16.gmra.mrb[0].mxu0 %v472
    %v2290 = vpop.f32.mrb[0].mxu0
    %v2291 = vadd.f32 %v2218, %v2290
    %v2292 = vpop.f32.mrb[0].mxu0
    %v2293 = vadd.f32 %v2220, %v2292
    %v2294 = vpop.f32.mrb[0].mxu0
    %v2295 = vadd.f32 %v2222, %v2294
    %v2296 = vpop.f32.mrb[0].mxu0
    %v2297 = vadd.f32 %v2224, %v2296
    %2298 = vdwg.mxu0
    %2299 = vmatprep.subr.bf16.mxu0 %v1471
    %2300 = vmatpush1.bf16.msra.mxu0 %v1470
    %2301 = vmatprep.subr.bf16.mxu0 %v1475
    %2302 = vmatpush1.bf16.msra.mxu0 %v1474
    %2303 = vmatprep.subr.bf16.mxu0 %v1479
    %2304 = vmatpush1.bf16.msra.mxu0 %v1478
    %2305 = vmatprep.subr.bf16.mxu0 %v1483
    %2306 = vmatpush1.bf16.msra.mxu0 %v1482
    %2307 = vmatprep.subr.bf16.mxu0 %v1487
    %2308 = vmatpush1.bf16.msra.mxu0 %v1486
    %2309 = vmatprep.subr.bf16.mxu0 %v1491
    %2310 = vmatpush1.bf16.msra.mxu0 %v1490
    %2311 = vmatprep.subr.bf16.mxu0 %v1495
    %2312 = vmatpush1.bf16.msra.mxu0 %v1494
    %2313 = vmatprep.subr.bf16.mxu0 %v1499
    %2314 = vmatpush1.bf16.msra.mxu0 %v1498
    %2315 = vmatprep.subr.bf16.mxu0 %v1503
    %2316 = vmatpush1.bf16.msra.mxu0 %v1502
    %2317 = vmatprep.subr.bf16.mxu0 %v1507
    %2318 = vmatpush1.bf16.msra.mxu0 %v1506
    %2319 = vmatprep.subr.bf16.mxu0 %v1511
    %2320 = vmatpush1.bf16.msra.mxu0 %v1510
    %2321 = vmatprep.subr.bf16.mxu0 %v1515
    %2322 = vmatpush1.bf16.msra.mxu0 %v1514
    %2323 = vmatprep.subr.bf16.mxu0 %v1519
    %2324 = vmatpush1.bf16.msra.mxu0 %v1518
    %2325 = vmatprep.subr.bf16.mxu0 %v1523
    %2326 = vmatpush1.bf16.msra.mxu0 %v1522
    %2327 = vmatprep.subr.bf16.mxu0 %v1527
    %2328 = vmatpush1.bf16.msra.mxu0 %v1526
    %2329 = vmatprep.subr.bf16.mxu0 %v1531
    %2330 = vmatpush1.bf16.msra.mxu0 %v1530
    %2331 = vmatprep.mubr.bf16.mxu0 %v451
    %2332 = vmatmul.mubr.bf16.gmra.mrb[0].mxu0 %v450
    %v2333 = vpop.f32.mrb[0].mxu0
    %v2334 = vadd.f32 %v2261, %v2333
    %v2335 = vpop.f32.mrb[0].mxu0
    %v2336 = vadd.f32 %v2263, %v2335
    %v2337 = vpop.f32.mrb[0].mxu0
    %v2338 = vadd.f32 %v2265, %v2337
    %v2339 = vpop.f32.mrb[0].mxu0
    %v2340 = vadd.f32 %v2267, %v2339
    %2341 = vmatprep.mubr.bf16.mxu0 %v459
    %2342 = vmatmul.mubr.bf16.gmra.mrb[0].mxu0 %v458
    %v2343 = vpop.f32.mrb[0].mxu0
    %v2344 = vadd.f32 %v2271, %v2343
    %v2345 = vpop.f32.mrb[0].mxu0
    %v2346 = vadd.f32 %v2273, %v2345
    %v2347 = vpop.f32.mrb[0].mxu0
    %v2348 = vadd.f32 %v2275, %v2347
    %v2349 = vpop.f32.mrb[0].mxu0
    %v2350 = vadd.f32 %v2277, %v2349
    %2351 = vmatprep.mubr.bf16.mxu0 %v467
    %2352 = vmatmul.mubr.bf16.gmra.mrb[0].mxu0 %v466
    %v2353 = vpop.f32.mrb[0].mxu0
    %v2354 = vadd.f32 %v2281, %v2353
    %v2355 = vpop.f32.mrb[0].mxu0
    %v2356 = vadd.f32 %v2283, %v2355
    %v2357 = vpop.f32.mrb[0].mxu0
    %v2358 = vadd.f32 %v2285, %v2357
    %v2359 = vpop.f32.mrb[0].mxu0
    %v2360 = vadd.f32 %v2287, %v2359
    %2361 = vmatprep.mubr.bf16.mxu0 %v475
    %2362 = vmatmul.mubr.bf16.gmra.mrb[0].mxu0 %v474
    %v2363 = vpop.f32.mrb[0].mxu0
    %v2364 = vadd.f32 %v2291, %v2363
    %v2365 = vpop.f32.mrb[0].mxu0
    %v2366 = vadd.f32 %v2293, %v2365
    %v2367 = vpop.f32.mrb[0].mxu0
    %v2368 = vadd.f32 %v2295, %v2367
    %v2369 = vpop.f32.mrb[0].mxu0
    %v2370 = vadd.f32 %v2297, %v2369
    %2371 = vdwg.mxu0
    %v2372 = vld [vmem:[%s2] sm:$0xff]
    %v2373 = vld [vmem:[%s2 + $0x8] sm:$0xff]
    %v2374 = vld [vmem:[%s2 + $0x10] sm:$0xff]
    %v2375 = vld [vmem:[%s2 + $0x18] sm:$0xff]
    %v2376 = vld [vmem:[%s2 + $0x20] sm:$0xff]
    %v2377 = vld [vmem:[%s2 + $0x28] sm:$0xff]
    %v2378 = vld [vmem:[%s2 + $0x30] sm:$0xff]
    %v2379 = vld [vmem:[%s2 + $0x38] sm:$0xff]
    %v2380 = vld [vmem:[%s2 + $0x40] sm:$0xff]
    %v2381 = vld [vmem:[%s2 + $0x48] sm:$0xff]
    %v2382 = vld [vmem:[%s2 + $0x50] sm:$0xff]
    %v2383 = vld [vmem:[%s2 + $0x58] sm:$0xff]
    %v2384 = vld [vmem:[%s2 + $0x60] sm:$0xff]
    %v2385 = vld [vmem:[%s2 + $0x68] sm:$0xff]
    %v2386 = vld [vmem:[%s2 + $0x70] sm:$0xff]
    %v2387 = vld [vmem:[%s2 + $0x78] sm:$0xff]
    %v2388 = vld [vmem:[%s2 + $0x80] sm:$0xff]
    %v2389 = vld [vmem:[%s2 + $0x88] sm:$0xff]
    %v2390 = vld [vmem:[%s2 + $0x90] sm:$0xff]
    %v2391 = vld [vmem:[%s2 + $0x98] sm:$0xff]
    %v2392 = vld [vmem:[%s2 + $0xa0] sm:$0xff]
    %v2393 = vld [vmem:[%s2 + $0xa8] sm:$0xff]
    %v2394 = vld [vmem:[%s2 + $0xb0] sm:$0xff]
    %v2395 = vld [vmem:[%s2 + $0xb8] sm:$0xff]
    %v2396 = vld [vmem:[%s2 + $0xc0] sm:$0xff]
    %v2397 = vld [vmem:[%s2 + $0xc8] sm:$0xff]
    %v2398 = vld [vmem:[%s2 + $0xd0] sm:$0xff]
    %v2399 = vld [vmem:[%s2 + $0xd8] sm:$0xff]
    %v2400 = vld [vmem:[%s2 + $0xe0] sm:$0xff]
    %v2401 = vld [vmem:[%s2 + $0xe8] sm:$0xff]
    %v2402 = vld [vmem:[%s2 + $0xf0] sm:$0xff]
    %v2403 = vld [vmem:[%s2 + $0xf8] sm:$0xff]
    %v2436 = vunpack.c.l.b16 %v2372
    %v2437 = vunpack.c.h.b16 %v2372
    %v2438 = vunpack.c.l.b16 %v2373
    %v2439 = vunpack.c.h.b16 %v2373
    %v2440 = vunpack.c.l.b16 %v2374
    %v2441 = vunpack.c.h.b16 %v2374
    %v2442 = vunpack.c.l.b16 %v2375
    %v2443 = vunpack.c.h.b16 %v2375
    %v2444 = vunpack.c.l.b16 %v2376
    %v2445 = vunpack.c.h.b16 %v2376
    %v2446 = vunpack.c.l.b16 %v2377
    %v2447 = vunpack.c.h.b16 %v2377
    %v2448 = vunpack.c.l.b16 %v2378
    %v2449 = vunpack.c.h.b16 %v2378
    %v2450 = vunpack.c.l.b16 %v2379
    %v2451 = vunpack.c.h.b16 %v2379
    %v2452 = vunpack.c.l.b16 %v2380
    %v2453 = vunpack.c.h.b16 %v2380
    %v2454 = vunpack.c.l.b16 %v2381
    %v2455 = vunpack.c.h.b16 %v2381
    %v2456 = vunpack.c.l.b16 %v2382
    %v2457 = vunpack.c.h.b16 %v2382
    %v2458 = vunpack.c.l.b16 %v2383
    %v2459 = vunpack.c.h.b16 %v2383
    %v2460 = vunpack.c.l.b16 %v2384
    %v2461 = vunpack.c.h.b16 %v2384
    %v2462 = vunpack.c.l.b16 %v2385
    %v2463 = vunpack.c.h.b16 %v2385
    %v2464 = vunpack.c.l.b16 %v2386
    %v2465 = vunpack.c.h.b16 %v2386
    %v2466 = vunpack.c.l.b16 %v2387
    %v2467 = vunpack.c.h.b16 %v2387
    %v2468 = vunpack.c.l.b16 %v2388
    %v2469 = vunpack.c.h.b16 %v2388
    %v2470 = vunpack.c.l.b16 %v2389
    %v2471 = vunpack.c.h.b16 %v2389
    %v2472 = vunpack.c.l.b16 %v2390
    %v2473 = vunpack.c.h.b16 %v2390
    %v2474 = vunpack.c.l.b16 %v2391
    %v2475 = vunpack.c.h.b16 %v2391
    %v2476 = vunpack.c.l.b16 %v2392
    %v2477 = vunpack.c.h.b16 %v2392
    %v2478 = vunpack.c.l.b16 %v2393
    %v2479 = vunpack.c.h.b16 %v2393
    %v2480 = vunpack.c.l.b16 %v2394
    %v2481 = vunpack.c.h.b16 %v2394
    %v2482 = vunpack.c.l.b16 %v2395
    %v2483 = vunpack.c.h.b16 %v2395
    %v2484 = vunpack.c.l.b16 %v2396
    %v2485 = vunpack.c.h.b16 %v2396
    %v2486 = vunpack.c.l.b16 %v2397
    %v2487 = vunpack.c.h.b16 %v2397
    %v2488 = vunpack.c.l.b16 %v2398
    %v2489 = vunpack.c.h.b16 %v2398
    %v2490 = vunpack.c.l.b16 %v2399
    %v2491 = vunpack.c.h.b16 %v2399
    %v2492 = vunpack.c.l.b16 %v2400
    %v2493 = vunpack.c.h.b16 %v2400
    %v2494 = vunpack.c.l.b16 %v2401
    %v2495 = vunpack.c.h.b16 %v2401
    %v2496 = vunpack.c.l.b16 %v2402
    %v2497 = vunpack.c.h.b16 %v2402
    %v2498 = vunpack.c.l.b16 %v2403
    %v2499 = vunpack.c.h.b16 %v2403
    %v2500 = vpack.c.b16 %v2440, %v2436
    %v2501 = vpack.c.b16 %v2441, %v2437
    %v2502 = vpack.c.b16 %v2442, %v2438
    %v2503 = vpack.c.b16 %v2443, %v2439
    %v2504 = vpack.c.b16 %v2448, %v2444
    %v2505 = vpack.c.b16 %v2449, %v2445
    %v2506 = vpack.c.b16 %v2450, %v2446
    %v2507 = vpack.c.b16 %v2451, %v2447
    %v2508 = vpack.c.b16 %v2456, %v2452
    %v2509 = vpack.c.b16 %v2457, %v2453
    %v2510 = vpack.c.b16 %v2458, %v2454
    %v2511 = vpack.c.b16 %v2459, %v2455
    %v2512 = vpack.c.b16 %v2464, %v2460
    %v2513 = vpack.c.b16 %v2465, %v2461
    %v2514 = vpack.c.b16 %v2466, %v2462
    %v2515 = vpack.c.b16 %v2467, %v2463
    %v2516 = vpack.c.b16 %v2472, %v2468
    %v2517 = vpack.c.b16 %v2473, %v2469
    %v2518 = vpack.c.b16 %v2474, %v2470
    %v2519 = vpack.c.b16 %v2475, %v2471
    %v2520 = vpack.c.b16 %v2480, %v2476
    %v2521 = vpack.c.b16 %v2481, %v2477
    %v2522 = vpack.c.b16 %v2482, %v2478
    %v2523 = vpack.c.b16 %v2483, %v2479
    %v2524 = vpack.c.b16 %v2488, %v2484
    %v2525 = vpack.c.b16 %v2489, %v2485
    %v2526 = vpack.c.b16 %v2490, %v2486
    %v2527 = vpack.c.b16 %v2491, %v2487
    %v2528 = vpack.c.b16 %v2496, %v2492
    %v2529 = vpack.c.b16 %v2497, %v2493
    %v2530 = vpack.c.b16 %v2498, %v2494
    %v2531 = vpack.c.b16 %v2499, %v2495
    %2564 = vmatprep.subr.bf16.mxu0 %v2501
    %2565 = vmatpush1.bf16.msra.mxu0 %v2500
    %2566 = vmatprep.subr.bf16.mxu0 %v2505
    %2567 = vmatpush1.bf16.msra.mxu0 %v2504
    %2568 = vmatprep.subr.bf16.mxu0 %v2509
    %2569 = vmatpush1.bf16.msra.mxu0 %v2508
    %2570 = vmatprep.subr.bf16.mxu0 %v2513
    %2571 = vmatpush1.bf16.msra.mxu0 %v2512
    %2572 = vmatprep.subr.bf16.mxu0 %v2517
    %2573 = vmatpush1.bf16.msra.mxu0 %v2516
    %2574 = vmatprep.subr.bf16.mxu0 %v2521
    %2575 = vmatpush1.bf16.msra.mxu0 %v2520
    %2576 = vmatprep.subr.bf16.mxu0 %v2525
    %2577 = vmatpush1.bf16.msra.mxu0 %v2524
    %2578 = vmatprep.subr.bf16.mxu0 %v2529
    %2579 = vmatpush1.bf16.msra.mxu0 %v2528
    %2580 = vmatprep.subr.bf16.mxu0 0
    %2581 = vmatpush1.bf16.msra.mxu0 0
    %2582 = vmatprep.subr.bf16.mxu0 0
    %2583 = vmatpush1.bf16.msra.mxu0 0
    %2584 = vmatprep.subr.bf16.mxu0 0
    %2585 = vmatpush1.bf16.msra.mxu0 0
    %2586 = vmatprep.subr.bf16.mxu0 0
    %2587 = vmatpush1.bf16.msra.mxu0 0
    %2588 = vmatprep.subr.bf16.mxu0 0
    %2589 = vmatpush1.bf16.msra.mxu0 0
    %2590 = vmatprep.subr.bf16.mxu0 0
    %2591 = vmatpush1.bf16.msra.mxu0 0
    %2592 = vmatprep.subr.bf16.mxu0 0
    %2593 = vmatpush1.bf16.msra.mxu0 0
    %2594 = vmatprep.subr.bf16.mxu0 0
    %2595 = vmatpush1.bf16.msra.mxu0 0
    %2596 = vmatprep.mubr.bf16.mxu0 0
    %2597 = vmatmul.mubr.bf16.gmra.mrb[0].mxu0 0
    %v2598 = vpop.f32.mrb[0].mxu0
    %v2599 = vadd.f32 0.0, %v2598
    %v2600 = vpop.f32.mrb[0].mxu0
    %v2601 = vadd.f32 0.0, %v2600
    %v2602 = vpop.f32.mrb[0].mxu0
    %v2603 = vpop.f32.mrb[0].mxu0
    %2604 = vdwg.mxu0
    %2605 = vmatprep.subr.bf16.mxu0 %v2503
    %2606 = vmatpush1.bf16.msra.mxu0 %v2502
    %2607 = vmatprep.subr.bf16.mxu0 %v2507
    %2608 = vmatpush1.bf16.msra.mxu0 %v2506
    %2609 = vmatprep.subr.bf16.mxu0 %v2511
    %2610 = vmatpush1.bf16.msra.mxu0 %v2510
    %2611 = vmatprep.subr.bf16.mxu0 %v2515
    %2612 = vmatpush1.bf16.msra.mxu0 %v2514
    %2613 = vmatprep.subr.bf16.mxu0 %v2519
    %2614 = vmatpush1.bf16.msra.mxu0 %v2518
    %2615 = vmatprep.subr.bf16.mxu0 %v2523
    %2616 = vmatpush1.bf16.msra.mxu0 %v2522
    %2617 = vmatprep.subr.bf16.mxu0 %v2527
    %2618 = vmatpush1.bf16.msra.mxu0 %v2526
    %2619 = vmatprep.subr.bf16.mxu0 %v2531
    %2620 = vmatpush1.bf16.msra.mxu0 %v2530
    %2621 = vmatprep.subr.bf16.mxu0 0
    %2622 = vmatpush1.bf16.msra.mxu0 0
    %2623 = vmatprep.subr.bf16.mxu0 0
    %2624 = vmatpush1.bf16.msra.mxu0 0
    %2625 = vmatprep.subr.bf16.mxu0 0
    %2626 = vmatpush1.bf16.msra.mxu0 0
    %2627 = vmatprep.subr.bf16.mxu0 0
    %2628 = vmatpush1.bf16.msra.mxu0 0
    %2629 = vmatprep.subr.bf16.mxu0 0
    %2630 = vmatpush1.bf16.msra.mxu0 0
    %2631 = vmatprep.subr.bf16.mxu0 0
    %2632 = vmatpush1.bf16.msra.mxu0 0
    %2633 = vmatprep.subr.bf16.mxu0 0
    %2634 = vmatpush1.bf16.msra.mxu0 0
    %2635 = vmatprep.subr.bf16.mxu0 0
    %2636 = vmatpush1.bf16.msra.mxu0 0
    %2637 = vmatprep.mubr.bf16.mxu0 0
    %2638 = vmatmul.mubr.bf16.gmra.mrb[0].mxu0 0
    %v2639 = vpop.f32.mrb[0].mxu0
    %v2640 = vadd.f32 0.0, %v2639
    %v2641 = vpop.f32.mrb[0].mxu0
    %v2642 = vadd.f32 0.0, %v2641
    %v2643 = vpop.f32.mrb[0].mxu0
    %v2644 = vpop.f32.mrb[0].mxu0
    %2645 = vdwg.mxu0
    %v2646 = vadd.f32 %v2042, %v2599
    %v2647 = vadd.f32 %v2044, %v2601
    %v2648 = vadd.f32 %v2334, %v2640
    %v2649 = vadd.f32 %v2336, %v2642
    %v2650 = vxor.u32 %v2646, 2147483648
    %v2651 = vxor.u32 %v2647, 2147483648
    %v2652 = vxor.u32 %v2648, 2147483648
    %v2653 = vxor.u32 %v2649, 2147483648
    %v2654 = vmul.f32 %v2650, 1.442695
    %v2655 = vpow.pop %v2654
    %v2656 = vmul.f32 %v2651, 1.442695
    %v2657 = vpow.pop %v2656
    %v2658 = vmul.f32 %v2652, 1.442695
    %v2659 = vpow.pop %v2658
    %v2660 = vmul.f32 %v2653, 1.442695
    %v2661 = vpow.pop %v2660
    %v2662 = vadd.f32 %v2655, 1.0
    %v2663 = vadd.f32 %v2657, 1.0
    %v2664 = vadd.f32 %v2659, 1.0
    %v2665 = vadd.f32 %v2661, 1.0
    %v2666 = vrcp.pop %v2662
    %v2667 = vmul.f32 1.0, %v2666
    %v2668 = vrcp.pop %v2663
    %v2669 = vmul.f32 1.0, %v2668
    %v2670 = vrcp.pop %v2664
    %v2671 = vmul.f32 1.0, %v2670
    %v2672 = vrcp.pop %v2665
    %v2673 = vmul.f32 1.0, %v2672
    %v2674 = vmul.f32 %v2671, 2.0
    %v2675 = vsub.f32 %v2674, 1.0
    %v2676 = vmul.f32 %v2669, 0.0
    %v2677 = vmul.f32 %v2667, %v2675
    %v2678 = vadd.f32 %v2676, %v2677
    %v2679 = vtanh.pop %v2678
    %v2680 = vmul.f32 %v2673, %v2679
    %v2681 = vadd.f32 %v2680, 0.0
    %v2682 = vpack.c.bf16 %v2680, %v2680
    %2683 = vmatprep.subr.bf16.mxu0 %v2501
    %2684 = vmatpush1.bf16.msra.mxu0 %v2500
    %2685 = vmatprep.subr.bf16.mxu0 %v2505
    %2686 = vmatpush1.bf16.msra.mxu0 %v2504
    %2687 = vmatprep.subr.bf16.mxu0 %v2509
    %2688 = vmatpush1.bf16.msra.mxu0 %v2508
    %2689 = vmatprep.subr.bf16.mxu0 %v2513
    %2690 = vmatpush1.bf16.msra.mxu0 %v2512
    %2691 = vmatprep.subr.bf16.mxu0 %v2517
    %2692 = vmatpush1.bf16.msra.mxu0 %v2516
    %2693 = vmatprep.subr.bf16.mxu0 %v2521
    %2694 = vmatpush1.bf16.msra.mxu0 %v2520
    %2695 = vmatprep.subr.bf16.mxu0 %v2525
    %2696 = vmatpush1.bf16.msra.mxu0 %v2524
    %2697 = vmatprep.subr.bf16.mxu0 %v2529
    %2698 = vmatpush1.bf16.msra.mxu0 %v2528
    %2699 = vmatprep.subr.bf16.mxu0 0
    %2700 = vmatpush1.bf16.msra.mxu0 0
    %2701 = vmatprep.subr.bf16.mxu0 0
    %2702 = vmatpush1.bf16.msra.mxu0 0
    %2703 = vmatprep.subr.bf16.mxu0 0
    %2704 = vmatpush1.bf16.msra.mxu0 0
    %2705 = vmatprep.subr.bf16.mxu0 0
    %2706 = vmatpush1.bf16.msra.mxu0 0
    %2707 = vmatprep.subr.bf16.mxu0 0
    %2708 = vmatpush1.bf16.msra.mxu0 0
    %2709 = vmatprep.subr.bf16.mxu0 0
    %2710 = vmatpush1.bf16.msra.mxu0 0
    %2711 = vmatprep.subr.bf16.mxu0 0
    %2712 = vmatpush1.bf16.msra.mxu0 0
    %2713 = vmatprep.subr.bf16.mxu0 0
    %2714 = vmatpush1.bf16.msra.mxu0 0
    %2715 = vmatprep.mubr.bf16.mxu0 0
    %2716 = vmatmul.mubr.bf16.gmra.mrb[0].mxu0 %v2682
    %v2717 = vpop.f32.mrb[0].mxu0
    %v2718 = vadd.f32 0.0, %v2717
    %v2719 = vpop.f32.mrb[0].mxu0
    %v2720 = vadd.f32 0.0, %v2719
    %v2721 = vpop.f32.mrb[0].mxu0
    %v2722 = vpop.f32.mrb[0].mxu0
    %2723 = vdwg.mxu0
    %2724 = vmatprep.subr.bf16.mxu0 %v2503
    %2725 = vmatpush1.bf16.msra.mxu0 %v2502
    %2726 = vmatprep.subr.bf16.mxu0 %v2507
    %2727 = vmatpush1.bf16.msra.mxu0 %v2506
    %2728 = vmatprep.subr.bf16.mxu0 %v2511
    %2729 = vmatpush1.bf16.msra.mxu0 %v2510
    %2730 = vmatprep.subr.bf16.mxu0 %v2515
    %2731 = vmatpush1.bf16.msra.mxu0 %v2514
    %2732 = vmatprep.subr.bf16.mxu0 %v2519
    %2733 = vmatpush1.bf16.msra.mxu0 %v2518
    %2734 = vmatprep.subr.bf16.mxu0 %v2523
    %2735 = vmatpush1.bf16.msra.mxu0 %v2522
    %2736 = vmatprep.subr.bf16.mxu0 %v2527
    %2737 = vmatpush1.bf16.msra.mxu0 %v2526
    %2738 = vmatprep.subr.bf16.mxu0 %v2531
    %2739 = vmatpush1.bf16.msra.mxu0 %v2530
    %2740 = vmatprep.subr.bf16.mxu0 0
    %2741 = vmatpush1.bf16.msra.mxu0 0
    %2742 = vmatprep.subr.bf16.mxu0 0
    %2743 = vmatpush1.bf16.msra.mxu0 0
    %2744 = vmatprep.subr.bf16.mxu0 0
    %2745 = vmatpush1.bf16.msra.mxu0 0
    %2746 = vmatprep.subr.bf16.mxu0 0
    %2747 = vmatpush1.bf16.msra.mxu0 0
    %2748 = vmatprep.subr.bf16.mxu0 0
    %2749 = vmatpush1.bf16.msra.mxu0 0
    %2750 = vmatprep.subr.bf16.mxu0 0
    %2751 = vmatpush1.bf16.msra.mxu0 0
    %2752 = vmatprep.subr.bf16.mxu0 0
    %2753 = vmatpush1.bf16.msra.mxu0 0
    %2754 = vmatprep.subr.bf16.mxu0 0
    %2755 = vmatpush1.bf16.msra.mxu0 0
    %2756 = vmatprep.mubr.bf16.mxu0 0
    %2757 = vmatmul.mubr.bf16.gmra.mrb[0].mxu0 %v2682
    %v2758 = vpop.f32.mrb[0].mxu0
    %v2759 = vadd.f32 0.0, %v2758
    %v2760 = vpop.f32.mrb[0].mxu0
    %v2761 = vadd.f32 0.0, %v2760
    %v2762 = vpop.f32.mrb[0].mxu0
    %v2763 = vpop.f32.mrb[0].mxu0
    %2764 = vdwg.mxu0
    %v2765 = vadd.f32 %v2046, %v2718
    %v2766 = vadd.f32 %v2048, %v2720
    %v2767 = vadd.f32 %v2338, %v2759
    %v2768 = vadd.f32 %v2340, %v2761
    %v2769 = vxor.u32 %v2765, 2147483648
    %v2770 = vxor.u32 %v2766, 2147483648
    %v2771 = vxor.u32 %v2767, 2147483648
    %v2772 = vxor.u32 %v2768, 2147483648
    %v2773 = vmul.f32 %v2769, 1.442695
    %v2774 = vpow.pop %v2773
    %v2775 = vmul.f32 %v2770, 1.442695
    %v2776 = vpow.pop %v2775
    %v2777 = vmul.f32 %v2771, 1.442695
    %v2778 = vpow.pop %v2777
    %v2779 = vmul.f32 %v2772, 1.442695
    %v2780 = vpow.pop %v2779
    %v2781 = vadd.f32 %v2774, 1.0
    %v2782 = vadd.f32 %v2776, 1.0
    %v2783 = vadd.f32 %v2778, 1.0
    %v2784 = vadd.f32 %v2780, 1.0
    %v2785 = vrcp.pop %v2781
    %v2786 = vmul.f32 1.0, %v2785
    %v2787 = vrcp.pop %v2782
    %v2788 = vmul.f32 1.0, %v2787
    %v2789 = vrcp.pop %v2783
    %v2790 = vmul.f32 1.0, %v2789
    %v2791 = vrcp.pop %v2784
    %v2792 = vmul.f32 1.0, %v2791
    %v2793 = vmul.f32 %v2790, 2.0
    %v2794 = vsub.f32 %v2793, 1.0
    %v2795 = vmul.f32 %v2788, %v2678
    %v2796 = vmul.f32 %v2786, %v2794
    %v2797 = vadd.f32 %v2795, %v2796
    %v2798 = vtanh.pop %v2797
    %v2799 = vmul.f32 %v2792, %v2798
    %v2800 = vadd.f32 %v2681, %v2799
    %v2801 = vpack.c.bf16 %v2799, %v2799
    %2802 = vmatprep.subr.bf16.mxu0 %v2501
    %2803 = vmatpush1.bf16.msra.mxu0 %v2500
    %2804 = vmatprep.subr.bf16.mxu0 %v2505
    %2805 = vmatpush1.bf16.msra.mxu0 %v2504
    %2806 = vmatprep.subr.bf16.mxu0 %v2509
    %2807 = vmatpush1.bf16.msra.mxu0 %v2508
    %2808 = vmatprep.subr.bf16.mxu0 %v2513
    %2809 = vmatpush1.bf16.msra.mxu0 %v2512
    %2810 = vmatprep.subr.bf16.mxu0 %v2517
    %2811 = vmatpush1.bf16.msra.mxu0 %v2516
    %2812 = vmatprep.subr.bf16.mxu0 %v2521
    %2813 = vmatpush1.bf16.msra.mxu0 %v2520
    %2814 = vmatprep.subr.bf16.mxu0 %v2525
    %2815 = vmatpush1.bf16.msra.mxu0 %v2524
    %2816 = vmatprep.subr.bf16.mxu0 %v2529
    %2817 = vmatpush1.bf16.msra.mxu0 %v2528
    %2818 = vmatprep.subr.bf16.mxu0 0
    %2819 = vmatpush1.bf16.msra.mxu0 0
    %2820 = vmatprep.subr.bf16.mxu0 0
    %2821 = vmatpush1.bf16.msra.mxu0 0
    %2822 = vmatprep.subr.bf16.mxu0 0
    %2823 = vmatpush1.bf16.msra.mxu0 0
    %2824 = vmatprep.subr.bf16.mxu0 0
    %2825 = vmatpush1.bf16.msra.mxu0 0
    %2826 = vmatprep.subr.bf16.mxu0 0
    %2827 = vmatpush1.bf16.msra.mxu0 0
    %2828 = vmatprep.subr.bf16.mxu0 0
    %2829 = vmatpush1.bf16.msra.mxu0 0
    %2830 = vmatprep.subr.bf16.mxu0 0
    %2831 = vmatpush1.bf16.msra.mxu0 0
    %2832 = vmatprep.subr.bf16.mxu0 0
    %2833 = vmatpush1.bf16.msra.mxu0 0
    %2834 = vmatprep.mubr.bf16.mxu0 0
    %2835 = vmatmul.mubr.bf16.gmra.mrb[0].mxu0 %v2801
    %v2836 = vpop.f32.mrb[0].mxu0
    %v2837 = vadd.f32 0.0, %v2836
    %v2838 = vpop.f32.mrb[0].mxu0
    %v2839 = vadd.f32 0.0, %v2838
    %v2840 = vpop.f32.mrb[0].mxu0
    %v2841 = vpop.f32.mrb[0].mxu0
    %2842 = vdwg.mxu0
    %2843 = vmatprep.subr.bf16.mxu0 %v2503
    %2844 = vmatpush1.bf16.msra.mxu0 %v2502
    %2845 = vmatprep.subr.bf16.mxu0 %v2507
    %2846 = vmatpush1.bf16.msra.mxu0 %v2506
    %2847 = vmatprep.subr.bf16.mxu0 %v2511
    %2848 = vmatpush1.bf16.msra.mxu0 %v2510
    %2849 = vmatprep.subr.bf16.mxu0 %v2515
    %2850 = vmatpush1.bf16.msra.mxu0 %v2514
    %2851 = vmatprep.subr.bf16.mxu0 %v2519
    %2852 = vmatpush1.bf16.msra.mxu0 %v2518
    %2853 = vmatprep.subr.bf16.mxu0 %v2523
    %2854 = vmatpush1.bf16.msra.mxu0 %v2522
    %2855 = vmatprep.subr.bf16.mxu0 %v2527
    %2856 = vmatpush1.bf16.msra.mxu0 %v2526
    %2857 = vmatprep.subr.bf16.mxu0 %v2531
    %2858 = vmatpush1.bf16.msra.mxu0 %v2530
    %2859 = vmatprep.subr.bf16.mxu0 0
    %2860 = vmatpush1.bf16.msra.mxu0 0
    %2861 = vmatprep.subr.bf16.mxu0 0
    %2862 = vmatpush1.bf16.msra.mxu0 0
    %2863 = vmatprep.subr.bf16.mxu0 0
    %2864 = vmatpush1.bf16.msra.mxu0 0
    %2865 = vmatprep.subr.bf16.mxu0 0
    %2866 = vmatpush1.bf16.msra.mxu0 0
    %2867 = vmatprep.subr.bf16.mxu0 0
    %2868 = vmatpush1.bf16.msra.mxu0 0
    %2869 = vmatprep.subr.bf16.mxu0 0
    %2870 = vmatpush1.bf16.msra.mxu0 0
    %2871 = vmatprep.subr.bf16.mxu0 0
    %2872 = vmatpush1.bf16.msra.mxu0 0
    %2873 = vmatprep.subr.bf16.mxu0 0
    %2874 = vmatpush1.bf16.msra.mxu0 0
    %2875 = vmatprep.mubr.bf16.mxu0 0
    %2876 = vmatmul.mubr.bf16.gmra.mrb[0].mxu0 %v2801
    %v2877 = vpop.f32.mrb[0].mxu0
    %v2878 = vadd.f32 0.0, %v2877
    %v2879 = vpop.f32.mrb[0].mxu0
    %v2880 = vadd.f32 0.0, %v2879
    %v2881 = vpop.f32.mrb[0].mxu0
    %v2882 = vpop.f32.mrb[0].mxu0
    %2883 = vdwg.mxu0
    %v2884 = vadd.f32 %v2052, %v2837
    %v2885 = vadd.f32 %v2054, %v2839
    %v2886 = vadd.f32 %v2344, %v2878
    %v2887 = vadd.f32 %v2346, %v2880
    %v2888 = vxor.u32 %v2884, 2147483648
    %v2889 = vxor.u32 %v2885, 2147483648
    %v2890 = vxor.u32 %v2886, 2147483648
    %v2891 = vxor.u32 %v2887, 2147483648
    %v2892 = vmul.f32 %v2888, 1.442695
    %v2893 = vpow.pop %v2892
    %v2894 = vmul.f32 %v2889, 1.442695
    %v2895 = vpow.pop %v2894
    %v2896 = vmul.f32 %v2890, 1.442695
    %v2897 = vpow.pop %v2896
    %v2898 = vmul.f32 %v2891, 1.442695
    %v2899 = vpow.pop %v2898
    %v2900 = vadd.f32 %v2893, 1.0
    %v2901 = vadd.f32 %v2895, 1.0
    %v2902 = vadd.f32 %v2897, 1.0
    %v2903 = vadd.f32 %v2899, 1.0
    %v2904 = vrcp.pop %v2900
    %v2905 = vmul.f32 1.0, %v2904
    %v2906 = vrcp.pop %v2901
    %v2907 = vmul.f32 1.0, %v2906
    %v2908 = vrcp.pop %v2902
    %v2909 = vmul.f32 1.0, %v2908
    %v2910 = vrcp.pop %v2903
    %v2911 = vmul.f32 1.0, %v2910
    %v2912 = vmul.f32 %v2909, 2.0
    %v2913 = vsub.f32 %v2912, 1.0
    %v2914 = vmul.f32 %v2907, %v2797
    %v2915 = vmul.f32 %v2905, %v2913
    %v2916 = vadd.f32 %v2914, %v2915
    %v2917 = vtanh.pop %v2916
    %v2918 = vmul.f32 %v2911, %v2917
    %v2919 = vadd.f32 %v2800, %v2918
    %v2920 = vpack.c.bf16 %v2918, %v2918
    %2921 = vmatprep.subr.bf16.mxu0 %v2501
    %2922 = vmatpush1.bf16.msra.mxu0 %v2500
    %2923 = vmatprep.subr.bf16.mxu0 %v2505
    %2924 = vmatpush1.bf16.msra.mxu0 %v2504
    %2925 = vmatprep.subr.bf16.mxu0 %v2509
    %2926 = vmatpush1.bf16.msra.mxu0 %v2508
    %2927 = vmatprep.subr.bf16.mxu0 %v2513
    %2928 = vmatpush1.bf16.msra.mxu0 %v2512
    %2929 = vmatprep.subr.bf16.mxu0 %v2517
    %2930 = vmatpush1.bf16.msra.mxu0 %v2516
    %2931 = vmatprep.subr.bf16.mxu0 %v2521
    %2932 = vmatpush1.bf16.msra.mxu0 %v2520
    %2933 = vmatprep.subr.bf16.mxu0 %v2525
    %2934 = vmatpush1.bf16.msra.mxu0 %v2524
    %2935 = vmatprep.subr.bf16.mxu0 %v2529
    %2936 = vmatpush1.bf16.msra.mxu0 %v2528
    %2937 = vmatprep.subr.bf16.mxu0 0
    %2938 = vmatpush1.bf16.msra.mxu0 0
    %2939 = vmatprep.subr.bf16.mxu0 0
    %2940 = vmatpush1.bf16.msra.mxu0 0
    %2941 = vmatprep.subr.bf16.mxu0 0
    %2942 = vmatpush1.bf16.msra.mxu0 0
    %2943 = vmatprep.subr.bf16.mxu0 0
    %2944 = vmatpush1.bf16.msra.mxu0 0
    %2945 = vmatprep.subr.bf16.mxu0 0
    %2946 = vmatpush1.bf16.msra.mxu0 0
    %2947 = vmatprep.subr.bf16.mxu0 0
    %2948 = vmatpush1.bf16.msra.mxu0 0
    %2949 = vmatprep.subr.bf16.mxu0 0
    %2950 = vmatpush1.bf16.msra.mxu0 0
    %2951 = vmatprep.subr.bf16.mxu0 0
    %2952 = vmatpush1.bf16.msra.mxu0 0
    %2953 = vmatprep.mubr.bf16.mxu0 0
    %2954 = vmatmul.mubr.bf16.gmra.mrb[0].mxu0 %v2920
    %v2955 = vpop.f32.mrb[0].mxu0
    %v2956 = vadd.f32 0.0, %v2955
    %v2957 = vpop.f32.mrb[0].mxu0
    %v2958 = vadd.f32 0.0, %v2957
    %v2959 = vpop.f32.mrb[0].mxu0
    %v2960 = vpop.f32.mrb[0].mxu0
    %2961 = vdwg.mxu0
    %2962 = vmatprep.subr.bf16.mxu0 %v2503
    %2963 = vmatpush1.bf16.msra.mxu0 %v2502
    %2964 = vmatprep.subr.bf16.mxu0 %v2507
    %2965 = vmatpush1.bf16.msra.mxu0 %v2506
    %2966 = vmatprep.subr.bf16.mxu0 %v2511
    %2967 = vmatpush1.bf16.msra.mxu0 %v2510
    %2968 = vmatprep.subr.bf16.mxu0 %v2515
    %2969 = vmatpush1.bf16.msra.mxu0 %v2514
    %2970 = vmatprep.subr.bf16.mxu0 %v2519
    %2971 = vmatpush1.bf16.msra.mxu0 %v2518
    %2972 = vmatprep.subr.bf16.mxu0 %v2523
    %2973 = vmatpush1.bf16.msra.mxu0 %v2522
    %2974 = vmatprep.subr.bf16.mxu0 %v2527
    %2975 = vmatpush1.bf16.msra.mxu0 %v2526
    %2976 = vmatprep.subr.bf16.mxu0 %v2531
    %2977 = vmatpush1.bf16.msra.mxu0 %v2530
    %2978 = vmatprep.subr.bf16.mxu0 0
    %2979 = vmatpush1.bf16.msra.mxu0 0
    %2980 = vmatprep.subr.bf16.mxu0 0
    %2981 = vmatpush1.bf16.msra.mxu0 0
    %2982 = vmatprep.subr.bf16.mxu0 0
    %2983 = vmatpush1.bf16.msra.mxu0 0
    %2984 = vmatprep.subr.bf16.mxu0 0
    %2985 = vmatpush1.bf16.msra.mxu0 0
    %2986 = vmatprep.subr.bf16.mxu0 0
    %2987 = vmatpush1.bf16.msra.mxu0 0
    %2988 = vmatprep.subr.bf16.mxu0 0
    %2989 = vmatpush1.bf16.msra.mxu0 0
    %2990 = vmatprep.subr.bf16.mxu0 0
    %2991 = vmatpush1.bf16.msra.mxu0 0
    %2992 = vmatprep.subr.bf16.mxu0 0
    %2993 = vmatpush1.bf16.msra.mxu0 0
    %2994 = vmatprep.mubr.bf16.mxu0 0
    %2995 = vmatmul.mubr.bf16.gmra.mrb[0].mxu0 %v2920
    %v2996 = vpop.f32.mrb[0].mxu0
    %v2997 = vadd.f32 0.0, %v2996
    %v2998 = vpop.f32.mrb[0].mxu0
    %v2999 = vadd.f32 0.0, %v2998
    %v3000 = vpop.f32.mrb[0].mxu0
    %v3001 = vpop.f32.mrb[0].mxu0
    %3002 = vdwg.mxu0
    %v3003 = vadd.f32 %v2056, %v2956
    %v3004 = vadd.f32 %v2058, %v2958
    %v3005 = vadd.f32 %v2348, %v2997
    %v3006 = vadd.f32 %v2350, %v2999
    %v3007 = vxor.u32 %v3003, 2147483648
    %v3008 = vxor.u32 %v3004, 2147483648
    %v3009 = vxor.u32 %v3005, 2147483648
    %v3010 = vxor.u32 %v3006, 2147483648
    %v3011 = vmul.f32 %v3007, 1.442695
    %v3012 = vpow.pop %v3011
    %v3013 = vmul.f32 %v3008, 1.442695
    %v3014 = vpow.pop %v3013
    %v3015 = vmul.f32 %v3009, 1.442695
    %v3016 = vpow.pop %v3015
    %v3017 = vmul.f32 %v3010, 1.442695
    %v3018 = vpow.pop %v3017
    %v3019 = vadd.f32 %v3012, 1.0
    %v3020 = vadd.f32 %v3014, 1.0
    %v3021 = vadd.f32 %v3016, 1.0
    %v3022 = vadd.f32 %v3018, 1.0
    %v3023 = vrcp.pop %v3019
    %v3024 = vmul.f32 1.0, %v3023
    %v3025 = vrcp.pop %v3020
    %v3026 = vmul.f32 1.0, %v3025
    %v3027 = vrcp.pop %v3021
    %v3028 = vmul.f32 1.0, %v3027
    %v3029 = vrcp.pop %v3022
    %v3030 = vmul.f32 1.0, %v3029
    %v3031 = vmul.f32 %v3028, 2.0
    %v3032 = vsub.f32 %v3031, 1.0
    %v3033 = vmul.f32 %v3026, %v2916
    %v3034 = vmul.f32 %v3024, %v3032
    %v3035 = vadd.f32 %v3033, %v3034
    %v3036 = vtanh.pop %v3035
    %v3037 = vmul.f32 %v3030, %v3036
    %v3038 = vadd.f32 %v2919, %v3037
    %v3039 = vpack.c.bf16 %v3037, %v3037
    %3040 = vmatprep.subr.bf16.mxu0 %v2501
    %3041 = vmatpush1.bf16.msra.mxu0 %v2500
    %3042 = vmatprep.subr.bf16.mxu0 %v2505
    %3043 = vmatpush1.bf16.msra.mxu0 %v2504
    %3044 = vmatprep.subr.bf16.mxu0 %v2509
    %3045 = vmatpush1.bf16.msra.mxu0 %v2508
    %3046 = vmatprep.subr.bf16.mxu0 %v2513
    %3047 = vmatpush1.bf16.msra.mxu0 %v2512
    %3048 = vmatprep.subr.bf16.mxu0 %v2517
    %3049 = vmatpush1.bf16.msra.mxu0 %v2516
    %3050 = vmatprep.subr.bf16.mxu0 %v2521
    %3051 = vmatpush1.bf16.msra.mxu0 %v2520
    %3052 = vmatprep.subr.bf16.mxu0 %v2525
    %3053 = vmatpush1.bf16.msra.mxu0 %v2524
    %3054 = vmatprep.subr.bf16.mxu0 %v2529
    %3055 = vmatpush1.bf16.msra.mxu0 %v2528
    %3056 = vmatprep.subr.bf16.mxu0 0
    %3057 = vmatpush1.bf16.msra.mxu0 0
    %3058 = vmatprep.subr.bf16.mxu0 0
    %3059 = vmatpush1.bf16.msra.mxu0 0
    %3060 = vmatprep.subr.bf16.mxu0 0
    %3061 = vmatpush1.bf16.msra.mxu0 0
    %3062 = vmatprep.subr.bf16.mxu0 0
    %3063 = vmatpush1.bf16.msra.mxu0 0
    %3064 = vmatprep.subr.bf16.mxu0 0
    %3065 = vmatpush1.bf16.msra.mxu0 0
    %3066 = vmatprep.subr.bf16.mxu0 0
    %3067 = vmatpush1.bf16.msra.mxu0 0
    %3068 = vmatprep.subr.bf16.mxu0 0
    %3069 = vmatpush1.bf16.msra.mxu0 0
    %3070 = vmatprep.subr.bf16.mxu0 0
    %3071 = vmatpush1.bf16.msra.mxu0 0
    %3072 = vmatprep.mubr.bf16.mxu0 0
    %3073 = vmatmul.mubr.bf16.gmra.mrb[0].mxu0 %v3039
    %v3074 = vpop.f32.mrb[0].mxu0
    %v3075 = vadd.f32 0.0, %v3074
    %v3076 = vpop.f32.mrb[0].mxu0
    %v3077 = vadd.f32 0.0, %v3076
    %v3078 = vpop.f32.mrb[0].mxu0
    %v3079 = vpop.f32.mrb[0].mxu0
    %3080 = vdwg.mxu0
    %3081 = vmatprep.subr.bf16.mxu0 %v2503
    %3082 = vmatpush1.bf16.msra.mxu0 %v2502
    %3083 = vmatprep.subr.bf16.mxu0 %v2507
    %3084 = vmatpush1.bf16.msra.mxu0 %v2506
    %3085 = vmatprep.subr.bf16.mxu0 %v2511
    %3086 = vmatpush1.bf16.msra.mxu0 %v2510
    %3087 = vmatprep.subr.bf16.mxu0 %v2515
    %3088 = vmatpush1.bf16.msra.mxu0 %v2514
    %3089 = vmatprep.subr.bf16.mxu0 %v2519
    %3090 = vmatpush1.bf16.msra.mxu0 %v2518
    %3091 = vmatprep.subr.bf16.mxu0 %v2523
    %3092 = vmatpush1.bf16.msra.mxu0 %v2522
    %3093 = vmatprep.subr.bf16.mxu0 %v2527
    %3094 = vmatpush1.bf16.msra.mxu0 %v2526
    %3095 = vmatprep.subr.bf16.mxu0 %v2531
    %3096 = vmatpush1.bf16.msra.mxu0 %v2530
    %3097 = vmatprep.subr.bf16.mxu0 0
    %3098 = vmatpush1.bf16.msra.mxu0 0
    %3099 = vmatprep.subr.bf16.mxu0 0
    %3100 = vmatpush1.bf16.msra.mxu0 0
    %3101 = vmatprep.subr.bf16.mxu0 0
    %3102 = vmatpush1.bf16.msra.mxu0 0
    %3103 = vmatprep.subr.bf16.mxu0 0
    %3104 = vmatpush1.bf16.msra.mxu0 0
    %3105 = vmatprep.subr.bf16.mxu0 0
    %3106 = vmatpush1.bf16.msra.mxu0 0
    %3107 = vmatprep.subr.bf16.mxu0 0
    %3108 = vmatpush1.bf16.msra.mxu0 0
    %3109 = vmatprep.subr.bf16.mxu0 0
    %3110 = vmatpush1.bf16.msra.mxu0 0
    %3111 = vmatprep.subr.bf16.mxu0 0
    %3112 = vmatpush1.bf16.msra.mxu0 0
    %3113 = vmatprep.mubr.bf16.mxu0 0
    %3114 = vmatmul.mubr.bf16.gmra.mrb[0].mxu0 %v3039
    %v3115 = vpop.f32.mrb[0].mxu0
    %v3116 = vadd.f32 0.0, %v3115
    %v3117 = vpop.f32.mrb[0].mxu0
    %v3118 = vadd.f32 0.0, %v3117
    %v3119 = vpop.f32.mrb[0].mxu0
    %v3120 = vpop.f32.mrb[0].mxu0
    %3121 = vdwg.mxu0
    %v3122 = vadd.f32 %v2062, %v3075
    %v3123 = vadd.f32 %v2064, %v3077
    %v3124 = vadd.f32 %v2354, %v3116
    %v3125 = vadd.f32 %v2356, %v3118
    %v3126 = vxor.u32 %v3122, 2147483648
    %v3127 = vxor.u32 %v3123, 2147483648
    %v3128 = vxor.u32 %v3124, 2147483648
    %v3129 = vxor.u32 %v3125, 2147483648
    %v3130 = vmul.f32 %v3126, 1.442695
    %v3131 = vpow.pop %v3130
    %v3132 = vmul.f32 %v3127, 1.442695
    %v3133 = vpow.pop %v3132
    %v3134 = vmul.f32 %v3128, 1.442695
    %v3135 = vpow.pop %v3134
    %v3136 = vmul.f32 %v3129, 1.442695
    %v3137 = vpow.pop %v3136
    %v3138 = vadd.f32 %v3131, 1.0
    %v3139 = vadd.f32 %v3133, 1.0
    %v3140 = vadd.f32 %v3135, 1.0
    %v3141 = vadd.f32 %v3137, 1.0
    %v3142 = vrcp.pop %v3138
    %v3143 = vmul.f32 1.0, %v3142
    %v3144 = vrcp.pop %v3139
    %v3145 = vmul.f32 1.0, %v3144
    %v3146 = vrcp.pop %v3140
    %v3147 = vmul.f32 1.0, %v3146
    %v3148 = vrcp.pop %v3141
    %v3149 = vmul.f32 1.0, %v3148
    %v3150 = vmul.f32 %v3147, 2.0
    %v3151 = vsub.f32 %v3150, 1.0
    %v3152 = vmul.f32 %v3145, %v3035
    %v3153 = vmul.f32 %v3143, %v3151
    %v3154 = vadd.f32 %v3152, %v3153
    %v3155 = vtanh.pop %v3154
    %v3156 = vmul.f32 %v3149, %v3155
    %v3157 = vadd.f32 %v3038, %v3156
    %v3158 = vpack.c.bf16 %v3156, %v3156
    %3159 = vmatprep.subr.bf16.mxu0 %v2501
    %3160 = vmatpush1.bf16.msra.mxu0 %v2500
    %3161 = vmatprep.subr.bf16.mxu0 %v2505
    %3162 = vmatpush1.bf16.msra.mxu0 %v2504
    %3163 = vmatprep.subr.bf16.mxu0 %v2509
    %3164 = vmatpush1.bf16.msra.mxu0 %v2508
    %3165 = vmatprep.subr.bf16.mxu0 %v2513
    %3166 = vmatpush1.bf16.msra.mxu0 %v2512
    %3167 = vmatprep.subr.bf16.mxu0 %v2517
    %3168 = vmatpush1.bf16.msra.mxu0 %v2516
    %3169 = vmatprep.subr.bf16.mxu0 %v2521
    %3170 = vmatpush1.bf16.msra.mxu0 %v2520
    %3171 = vmatprep.subr.bf16.mxu0 %v2525
    %3172 = vmatpush1.bf16.msra.mxu0 %v2524
    %3173 = vmatprep.subr.bf16.mxu0 %v2529
    %3174 = vmatpush1.bf16.msra.mxu0 %v2528
    %3175 = vmatprep.subr.bf16.mxu0 0
    %3176 = vmatpush1.bf16.msra.mxu0 0
    %3177 = vmatprep.subr.bf16.mxu0 0
    %3178 = vmatpush1.bf16.msra.mxu0 0
    %3179 = vmatprep.subr.bf16.mxu0 0
    %3180 = vmatpush1.bf16.msra.mxu0 0
    %3181 = vmatprep.subr.bf16.mxu0 0
    %3182 = vmatpush1.bf16.msra.mxu0 0
    %3183 = vmatprep.subr.bf16.mxu0 0
    %3184 = vmatpush1.bf16.msra.mxu0 0
    %3185 = vmatprep.subr.bf16.mxu0 0
    %3186 = vmatpush1.bf16.msra.mxu0 0
    %3187 = vmatprep.subr.bf16.mxu0 0
    %3188 = vmatpush1.bf16.msra.mxu0 0
    %3189 = vmatprep.subr.bf16.mxu0 0
    %3190 = vmatpush1.bf16.msra.mxu0 0
    %3191 = vmatprep.mubr.bf16.mxu0 0
    %3192 = vmatmul.mubr.bf16.gmra.mrb[0].mxu0 %v3158
    %v3193 = vpop.f32.mrb[0].mxu0
    %v3194 = vadd.f32 0.0, %v3193
    %v3195 = vpop.f32.mrb[0].mxu0
    %v3196 = vadd.f32 0.0, %v3195
    %v3197 = vpop.f32.mrb[0].mxu0
    %v3198 = vpop.f32.mrb[0].mxu0
    %3199 = vdwg.mxu0
    %3200 = vmatprep.subr.bf16.mxu0 %v2503
    %3201 = vmatpush1.bf16.msra.mxu0 %v2502
    %3202 = vmatprep.subr.bf16.mxu0 %v2507
    %3203 = vmatpush1.bf16.msra.mxu0 %v2506
    %3204 = vmatprep.subr.bf16.mxu0 %v2511
    %3205 = vmatpush1.bf16.msra.mxu0 %v2510
    %3206 = vmatprep.subr.bf16.mxu0 %v2515
    %3207 = vmatpush1.bf16.msra.mxu0 %v2514
    %3208 = vmatprep.subr.bf16.mxu0 %v2519
    %3209 = vmatpush1.bf16.msra.mxu0 %v2518
    %3210 = vmatprep.subr.bf16.mxu0 %v2523
    %3211 = vmatpush1.bf16.msra.mxu0 %v2522
    %3212 = vmatprep.subr.bf16.mxu0 %v2527
    %3213 = vmatpush1.bf16.msra.mxu0 %v2526
    %3214 = vmatprep.subr.bf16.mxu0 %v2531
    %3215 = vmatpush1.bf16.msra.mxu0 %v2530
    %3216 = vmatprep.subr.bf16.mxu0 0
    %3217 = vmatpush1.bf16.msra.mxu0 0
    %3218 = vmatprep.subr.bf16.mxu0 0
    %3219 = vmatpush1.bf16.msra.mxu0 0
    %3220 = vmatprep.subr.bf16.mxu0 0
    %3221 = vmatpush1.bf16.msra.mxu0 0
    %3222 = vmatprep.subr.bf16.mxu0 0
    %3223 = vmatpush1.bf16.msra.mxu0 0
    %3224 = vmatprep.subr.bf16.mxu0 0
    %3225 = vmatpush1.bf16.msra.mxu0 0
    %3226 = vmatprep.subr.bf16.mxu0 0
    %3227 = vmatpush1.bf16.msra.mxu0 0
    %3228 = vmatprep.subr.bf16.mxu0 0
    %3229 = vmatpush1.bf16.msra.mxu0 0
    %3230 = vmatprep.subr.bf16.mxu0 0
    %3231 = vmatpush1.bf16.msra.mxu0 0
    %3232 = vmatprep.mubr.bf16.mxu0 0
    %3233 = vmatmul.mubr.bf16.gmra.mrb[0].mxu0 %v3158
    %v3234 = vpop.f32.mrb[0].mxu0
    %v3235 = vadd.f32 0.0, %v3234
    %v3236 = vpop.f32.mrb[0].mxu0
    %v3237 = vadd.f32 0.0, %v3236
    %v3238 = vpop.f32.mrb[0].mxu0
    %v3239 = vpop.f32.mrb[0].mxu0
    %3240 = vdwg.mxu0
    %v3241 = vadd.f32 %v2066, %v3194
    %v3242 = vadd.f32 %v2068, %v3196
    %v3243 = vadd.f32 %v2358, %v3235
    %v3244 = vadd.f32 %v2360, %v3237
    %v3245 = vxor.u32 %v3241, 2147483648
    %v3246 = vxor.u32 %v3242, 2147483648
    %v3247 = vxor.u32 %v3243, 2147483648
    %v3248 = vxor.u32 %v3244, 2147483648
    %v3249 = vmul.f32 %v3245, 1.442695
    %v3250 = vpow.pop %v3249
    %v3251 = vmul.f32 %v3246, 1.442695
    %v3252 = vpow.pop %v3251
    %v3253 = vmul.f32 %v3247, 1.442695
    %v3254 = vpow.pop %v3253
    %v3255 = vmul.f32 %v3248, 1.442695
    %v3256 = vpow.pop %v3255
    %v3257 = vadd.f32 %v3250, 1.0
    %v3258 = vadd.f32 %v3252, 1.0
    %v3259 = vadd.f32 %v3254, 1.0
    %v3260 = vadd.f32 %v3256, 1.0
    %v3261 = vrcp.pop %v3257
    %v3262 = vmul.f32 1.0, %v3261
    %v3263 = vrcp.pop %v3258
    %v3264 = vmul.f32 1.0, %v3263
    %v3265 = vrcp.pop %v3259
    %v3266 = vmul.f32 1.0, %v3265
    %v3267 = vrcp.pop %v3260
    %v3268 = vmul.f32 1.0, %v3267
    %v3269 = vmul.f32 %v3266, 2.0
    %v3270 = vsub.f32 %v3269, 1.0
    %v3271 = vmul.f32 %v3264, %v3154
    %v3272 = vmul.f32 %v3262, %v3270
    %v3273 = vadd.f32 %v3271, %v3272
    %v3274 = vtanh.pop %v3273
    %v3275 = vmul.f32 %v3268, %v3274
    %v3276 = vadd.f32 %v3157, %v3275
    %v3277 = vpack.c.bf16 %v3275, %v3275
    %3278 = vmatprep.subr.bf16.mxu0 %v2501
    %3279 = vmatpush1.bf16.msra.mxu0 %v2500
    %3280 = vmatprep.subr.bf16.mxu0 %v2505
    %3281 = vmatpush1.bf16.msra.mxu0 %v2504
    %3282 = vmatprep.subr.bf16.mxu0 %v2509
    %3283 = vmatpush1.bf16.msra.mxu0 %v2508
    %3284 = vmatprep.subr.bf16.mxu0 %v2513
    %3285 = vmatpush1.bf16.msra.mxu0 %v2512
    %3286 = vmatprep.subr.bf16.mxu0 %v2517
    %3287 = vmatpush1.bf16.msra.mxu0 %v2516
    %3288 = vmatprep.subr.bf16.mxu0 %v2521
    %3289 = vmatpush1.bf16.msra.mxu0 %v2520
    %3290 = vmatprep.subr.bf16.mxu0 %v2525
    %3291 = vmatpush1.bf16.msra.mxu0 %v2524
    %3292 = vmatprep.subr.bf16.mxu0 %v2529
    %3293 = vmatpush1.bf16.msra.mxu0 %v2528
    %3294 = vmatprep.subr.bf16.mxu0 0
    %3295 = vmatpush1.bf16.msra.mxu0 0
    %3296 = vmatprep.subr.bf16.mxu0 0
    %3297 = vmatpush1.bf16.msra.mxu0 0
    %3298 = vmatprep.subr.bf16.mxu0 0
    %3299 = vmatpush1.bf16.msra.mxu0 0
    %3300 = vmatprep.subr.bf16.mxu0 0
    %3301 = vmatpush1.bf16.msra.mxu0 0
    %3302 = vmatprep.subr.bf16.mxu0 0
    %3303 = vmatpush1.bf16.msra.mxu0 0
    %3304 = vmatprep.subr.bf16.mxu0 0
    %3305 = vmatpush1.bf16.msra.mxu0 0
    %3306 = vmatprep.subr.bf16.mxu0 0
    %3307 = vmatpush1.bf16.msra.mxu0 0
    %3308 = vmatprep.subr.bf16.mxu0 0
    %3309 = vmatpush1.bf16.msra.mxu0 0
    %3310 = vmatprep.mubr.bf16.mxu0 0
    %3311 = vmatmul.mubr.bf16.gmra.mrb[0].mxu0 %v3277
    %v3312 = vpop.f32.mrb[0].mxu0
    %v3313 = vadd.f32 0.0, %v3312
    %v3314 = vpop.f32.mrb[0].mxu0
    %v3315 = vadd.f32 0.0, %v3314
    %v3316 = vpop.f32.mrb[0].mxu0
    %v3317 = vpop.f32.mrb[0].mxu0
    %3318 = vdwg.mxu0
    %3319 = vmatprep.subr.bf16.mxu0 %v2503
    %3320 = vmatpush1.bf16.msra.mxu0 %v2502
    %3321 = vmatprep.subr.bf16.mxu0 %v2507
    %3322 = vmatpush1.bf16.msra.mxu0 %v2506
    %3323 = vmatprep.subr.bf16.mxu0 %v2511
    %3324 = vmatpush1.bf16.msra.mxu0 %v2510
    %3325 = vmatprep.subr.bf16.mxu0 %v2515
    %3326 = vmatpush1.bf16.msra.mxu0 %v2514
    %3327 = vmatprep.subr.bf16.mxu0 %v2519
    %3328 = vmatpush1.bf16.msra.mxu0 %v2518
    %3329 = vmatprep.subr.bf16.mxu0 %v2523
    %3330 = vmatpush1.bf16.msra.mxu0 %v2522
    %3331 = vmatprep.subr.bf16.mxu0 %v2527
    %3332 = vmatpush1.bf16.msra.mxu0 %v2526
    %3333 = vmatprep.subr.bf16.mxu0 %v2531
    %3334 = vmatpush1.bf16.msra.mxu0 %v2530
    %3335 = vmatprep.subr.bf16.mxu0 0
    %3336 = vmatpush1.bf16.msra.mxu0 0
    %3337 = vmatprep.subr.bf16.mxu0 0
    %3338 = vmatpush1.bf16.msra.mxu0 0
    %3339 = vmatprep.subr.bf16.mxu0 0
    %3340 = vmatpush1.bf16.msra.mxu0 0
    %3341 = vmatprep.subr.bf16.mxu0 0
    %3342 = vmatpush1.bf16.msra.mxu0 0
    %3343 = vmatprep.subr.bf16.mxu0 0
    %3344 = vmatpush1.bf16.msra.mxu0 0
    %3345 = vmatprep.subr.bf16.mxu0 0
    %3346 = vmatpush1.bf16.msra.mxu0 0
    %3347 = vmatprep.subr.bf16.mxu0 0
    %3348 = vmatpush1.bf16.msra.mxu0 0
    %3349 = vmatprep.subr.bf16.mxu0 0
    %3350 = vmatpush1.bf16.msra.mxu0 0
    %3351 = vmatprep.mubr.bf16.mxu0 0
    %3352 = vmatmul.mubr.bf16.gmra.mrb[0].mxu0 %v3277
    %v3353 = vpop.f32.mrb[0].mxu0
    %v3354 = vadd.f32 0.0, %v3353
    %v3355 = vpop.f32.mrb[0].mxu0
    %v3356 = vadd.f32 0.0, %v3355
    %v3357 = vpop.f32.mrb[0].mxu0
    %v3358 = vpop.f32.mrb[0].mxu0
    %3359 = vdwg.mxu0
    %v3360 = vadd.f32 %v2072, %v3313
    %v3361 = vadd.f32 %v2074, %v3315
    %v3362 = vadd.f32 %v2364, %v3354
    %v3363 = vadd.f32 %v2366, %v3356
    %v3364 = vxor.u32 %v3360, 2147483648
    %v3365 = vxor.u32 %v3361, 2147483648
    %v3366 = vxor.u32 %v3362, 2147483648
    %v3367 = vxor.u32 %v3363, 2147483648
    %v3368 = vmul.f32 %v3364, 1.442695
    %v3369 = vpow.pop %v3368
    %v3370 = vmul.f32 %v3365, 1.442695
    %v3371 = vpow.pop %v3370
    %v3372 = vmul.f32 %v3366, 1.442695
    %v3373 = vpow.pop %v3372
    %v3374 = vmul.f32 %v3367, 1.442695
    %v3375 = vpow.pop %v3374
    %v3376 = vadd.f32 %v3369, 1.0
    %v3377 = vadd.f32 %v3371, 1.0
    %v3378 = vadd.f32 %v3373, 1.0
    %v3379 = vadd.f32 %v3375, 1.0
    %v3380 = vrcp.pop %v3376
    %v3381 = vmul.f32 1.0, %v3380
    %v3382 = vrcp.pop %v3377
    %v3383 = vmul.f32 1.0, %v3382
    %v3384 = vrcp.pop %v3378
    %v3385 = vmul.f32 1.0, %v3384
    %v3386 = vrcp.pop %v3379
    %v3387 = vmul.f32 1.0, %v3386
    %v3388 = vmul.f32 %v3385, 2.0
    %v3389 = vsub.f32 %v3388, 1.0
    %v3390 = vmul.f32 %v3383, %v3273
    %v3391 = vmul.f32 %v3381, %v3389
    %v3392 = vadd.f32 %v3390, %v3391
    %v3393 = vtanh.pop %v3392
    %v3394 = vmul.f32 %v3387, %v3393
    %v3395 = vadd.f32 %v3276, %v3394
    %v3396 = vpack.c.bf16 %v3394, %v3394
    %3397 = vmatprep.subr.bf16.mxu0 %v2501
    %3398 = vmatpush1.bf16.msra.mxu0 %v2500
    %3399 = vmatprep.subr.bf16.mxu0 %v2505
    %3400 = vmatpush1.bf16.msra.mxu0 %v2504
    %3401 = vmatprep.subr.bf16.mxu0 %v2509
    %3402 = vmatpush1.bf16.msra.mxu0 %v2508
    %3403 = vmatprep.subr.bf16.mxu0 %v2513
    %3404 = vmatpush1.bf16.msra.mxu0 %v2512
    %3405 = vmatprep.subr.bf16.mxu0 %v2517
    %3406 = vmatpush1.bf16.msra.mxu0 %v2516
    %3407 = vmatprep.subr.bf16.mxu0 %v2521
    %3408 = vmatpush1.bf16.msra.mxu0 %v2520
    %3409 = vmatprep.subr.bf16.mxu0 %v2525
    %3410 = vmatpush1.bf16.msra.mxu0 %v2524
    %3411 = vmatprep.subr.bf16.mxu0 %v2529
    %3412 = vmatpush1.bf16.msra.mxu0 %v2528
    %3413 = vmatprep.subr.bf16.mxu0 0
    %3414 = vmatpush1.bf16.msra.mxu0 0
    %3415 = vmatprep.subr.bf16.mxu0 0
    %3416 = vmatpush1.bf16.msra.mxu0 0
    %3417 = vmatprep.subr.bf16.mxu0 0
    %3418 = vmatpush1.bf16.msra.mxu0 0
    %3419 = vmatprep.subr.bf16.mxu0 0
    %3420 = vmatpush1.bf16.msra.mxu0 0
    %3421 = vmatprep.subr.bf16.mxu0 0
    %3422 = vmatpush1.bf16.msra.mxu0 0
    %3423 = vmatprep.subr.bf16.mxu0 0
    %3424 = vmatpush1.bf16.msra.mxu0 0
    %3425 = vmatprep.subr.bf16.mxu0 0
    %3426 = vmatpush1.bf16.msra.mxu0 0
    %3427 = vmatprep.subr.bf16.mxu0 0
    %3428 = vmatpush1.bf16.msra.mxu0 0
    %3429 = vmatprep.mubr.bf16.mxu0 0
    %3430 = vmatmul.mubr.bf16.gmra.mrb[0].mxu0 %v3396
    %v3431 = vpop.f32.mrb[0].mxu0
    %v3432 = vadd.f32 0.0, %v3431
    %v3433 = vpop.f32.mrb[0].mxu0
    %v3434 = vadd.f32 0.0, %v3433
    %v3435 = vpop.f32.mrb[0].mxu0
    %v3436 = vpop.f32.mrb[0].mxu0
    %3437 = vdwg.mxu0
    %3438 = vmatprep.subr.bf16.mxu0 %v2503
    %3439 = vmatpush1.bf16.msra.mxu0 %v2502
    %3440 = vmatprep.subr.bf16.mxu0 %v2507
    %3441 = vmatpush1.bf16.msra.mxu0 %v2506
    %3442 = vmatprep.subr.bf16.mxu0 %v2511
    %3443 = vmatpush1.bf16.msra.mxu0 %v2510
    %3444 = vmatprep.subr.bf16.mxu0 %v2515
    %3445 = vmatpush1.bf16.msra.mxu0 %v2514
    %3446 = vmatprep.subr.bf16.mxu0 %v2519
    %3447 = vmatpush1.bf16.msra.mxu0 %v2518
    %3448 = vmatprep.subr.bf16.mxu0 %v2523
    %3449 = vmatpush1.bf16.msra.mxu0 %v2522
    %3450 = vmatprep.subr.bf16.mxu0 %v2527
    %3451 = vmatpush1.bf16.msra.mxu0 %v2526
    %3452 = vmatprep.subr.bf16.mxu0 %v2531
    %3453 = vmatpush1.bf16.msra.mxu0 %v2530
    %3454 = vmatprep.subr.bf16.mxu0 0
    %3455 = vmatpush1.bf16.msra.mxu0 0
    %3456 = vmatprep.subr.bf16.mxu0 0
    %3457 = vmatpush1.bf16.msra.mxu0 0
    %3458 = vmatprep.subr.bf16.mxu0 0
    %3459 = vmatpush1.bf16.msra.mxu0 0
    %3460 = vmatprep.subr.bf16.mxu0 0
    %3461 = vmatpush1.bf16.msra.mxu0 0
    %3462 = vmatprep.subr.bf16.mxu0 0
    %3463 = vmatpush1.bf16.msra.mxu0 0
    %3464 = vmatprep.subr.bf16.mxu0 0
    %3465 = vmatpush1.bf16.msra.mxu0 0
    %3466 = vmatprep.subr.bf16.mxu0 0
    %3467 = vmatpush1.bf16.msra.mxu0 0
    %3468 = vmatprep.subr.bf16.mxu0 0
    %3469 = vmatpush1.bf16.msra.mxu0 0
    %3470 = vmatprep.mubr.bf16.mxu0 0
    %3471 = vmatmul.mubr.bf16.gmra.mrb[0].mxu0 %v3396
    %v3472 = vpop.f32.mrb[0].mxu0
    %v3473 = vadd.f32 0.0, %v3472
    %v3474 = vpop.f32.mrb[0].mxu0
    %v3475 = vadd.f32 0.0, %v3474
    %v3476 = vpop.f32.mrb[0].mxu0
    %v3477 = vpop.f32.mrb[0].mxu0
    %3478 = vdwg.mxu0
    %v3479 = vadd.f32 %v2076, %v3432
    %v3480 = vadd.f32 %v2078, %v3434
    %v3481 = vadd.f32 %v2368, %v3473
    %v3482 = vadd.f32 %v2370, %v3475
    %v3483 = vxor.u32 %v3479, 2147483648
    %v3484 = vxor.u32 %v3480, 2147483648
    %v3485 = vxor.u32 %v3481, 2147483648
    %v3486 = vxor.u32 %v3482, 2147483648
    %v3487 = vmul.f32 %v3483, 1.442695
    %v3488 = vpow.pop %v3487
    %v3489 = vmul.f32 %v3484, 1.442695
    %v3490 = vpow.pop %v3489
    %v3491 = vmul.f32 %v3485, 1.442695
    %v3492 = vpow.pop %v3491
    %v3493 = vmul.f32 %v3486, 1.442695
    %v3494 = vpow.pop %v3493
    %v3495 = vadd.f32 %v3488, 1.0
    %v3496 = vadd.f32 %v3490, 1.0
    %v3497 = vadd.f32 %v3492, 1.0
    %v3498 = vadd.f32 %v3494, 1.0
    %v3499 = vrcp.pop %v3495
    %v3500 = vmul.f32 1.0, %v3499
    %v3501 = vrcp.pop %v3496
    %v3502 = vmul.f32 1.0, %v3501
    %v3503 = vrcp.pop %v3497
    %v3504 = vmul.f32 1.0, %v3503
    %v3505 = vrcp.pop %v3498
    %v3506 = vmul.f32 1.0, %v3505
    %v3507 = vmul.f32 %v3504, 2.0
    %v3508 = vsub.f32 %v3507, 1.0
    %v3509 = vmul.f32 %v3502, %v3392
    %v3510 = vmul.f32 %v3500, %v3508
    %v3511 = vadd.f32 %v3509, %v3510
    %v3512 = vtanh.pop %v3511
    %v3513 = vmul.f32 %v3506, %v3512
    %v3514 = vadd.f32 %v3395, %v3513
    %v3515 = vld [vmem:[%s4] sm:$0xff]
    %v3516 = vld [vmem:[%s4 + $0x8] sm:$0xff]
    %v3517 = vld [vmem:[%s4 + $0x10] sm:$0xff]
    %v3518 = vld [vmem:[%s4 + $0x18] sm:$0xff]
    %v3519 = vld [vmem:[%s4 + $0x20] sm:$0xff]
    %v3520 = vld [vmem:[%s4 + $0x28] sm:$0xff]
    %v3521 = vld [vmem:[%s4 + $0x30] sm:$0xff]
    %v3522 = vld [vmem:[%s4 + $0x38] sm:$0xff]
    %v3523 = vld [vmem:[%s4 + $0x40] sm:$0xff]
    %v3524 = vld [vmem:[%s4 + $0x48] sm:$0xff]
    %v3525 = vld [vmem:[%s4 + $0x50] sm:$0xff]
    %v3526 = vld [vmem:[%s4 + $0x58] sm:$0xff]
    %v3527 = vld [vmem:[%s4 + $0x60] sm:$0xff]
    %v3528 = vld [vmem:[%s4 + $0x68] sm:$0xff]
    %v3529 = vld [vmem:[%s4 + $0x70] sm:$0xff]
    %v3530 = vld [vmem:[%s4 + $0x78] sm:$0xff]
    %v3531 = vld [vmem:[%s5] sm:$0x1]
    %v3533 = vlaneseq
    %v3534 = vshrl.u32 %v3533, 7
    %v3535 = vsub.s32 0, %v3534
    %v3536 = vrot.slane %v3531, %v3535
    %3538 = vmatprep.subr.mxu0 0.0
    %3539 = vmatpush1.msra.mxu0 %v3515
    %3540 = vmatprep.subr.mxu0 0.0
    %3541 = vmatpush1.msra.mxu0 %v3516
    %3542 = vmatprep.subr.mxu0 0.0
    %3543 = vmatpush1.msra.mxu0 %v3517
    %3544 = vmatprep.subr.mxu0 0.0
    %3545 = vmatpush1.msra.mxu0 %v3518
    %3546 = vmatprep.subr.mxu0 0.0
    %3547 = vmatpush1.msra.mxu0 %v3519
    %3548 = vmatprep.subr.mxu0 0.0
    %3549 = vmatpush1.msra.mxu0 %v3520
    %3550 = vmatprep.subr.mxu0 0.0
    %3551 = vmatpush1.msra.mxu0 %v3521
    %3552 = vmatprep.subr.mxu0 0.0
    %3553 = vmatpush1.msra.mxu0 %v3522
    %3554 = vmatprep.subr.mxu0 0.0
    %3555 = vmatpush1.msra.mxu0 %v3523
    %3556 = vmatprep.subr.mxu0 0.0
    %3557 = vmatpush1.msra.mxu0 %v3524
    %3558 = vmatprep.subr.mxu0 0.0
    %3559 = vmatpush1.msra.mxu0 %v3525
    %3560 = vmatprep.subr.mxu0 0.0
    %3561 = vmatpush1.msra.mxu0 %v3526
    %3562 = vmatprep.subr.mxu0 0.0
    %3563 = vmatpush1.msra.mxu0 %v3527
    %3564 = vmatprep.subr.mxu0 0.0
    %3565 = vmatpush1.msra.mxu0 %v3528
    %3566 = vmatprep.subr.mxu0 0.0
    %3567 = vmatpush1.msra.mxu0 %v3529
    %3568 = vmatprep.subr.mxu0 0.0
    %3569 = vmatpush1.msra.mxu0 %v3530
    %3570 = vmatprep.subr.mxu0 0.0
    %3571 = vmatpush1.msra.mxu0 0.0
    %3572 = vmatprep.subr.mxu0 0.0
    %3573 = vmatpush1.msra.mxu0 0.0
    %3574 = vmatprep.subr.mxu0 0.0
    %3575 = vmatpush1.msra.mxu0 0.0
    %3576 = vmatprep.subr.mxu0 0.0
    %3577 = vmatpush1.msra.mxu0 0.0
    %3578 = vmatprep.subr.mxu0 0.0
    %3579 = vmatpush1.msra.mxu0 0.0
    %3580 = vmatprep.subr.mxu0 0.0
    %3581 = vmatpush1.msra.mxu0 0.0
    %3582 = vmatprep.subr.mxu0 0.0
    %3583 = vmatpush1.msra.mxu0 0.0
    %3584 = vmatprep.subr.mxu0 0.0
    %3585 = vmatpush1.msra.mxu0 0.0
    %3586 = vmatprep.subr.mxu0 0.0
    %3587 = vmatpush1.msra.mxu0 0.0
    %3588 = vmatprep.subr.mxu0 0.0
    %3589 = vmatpush1.msra.mxu0 0.0
    %3590 = vmatprep.subr.mxu0 0.0
    %3591 = vmatpush1.msra.mxu0 0.0
    %3592 = vmatprep.subr.mxu0 0.0
    %3593 = vmatpush1.msra.mxu0 0.0
    %3594 = vmatprep.subr.mxu0 0.0
    %3595 = vmatpush1.msra.mxu0 0.0
    %3596 = vmatprep.subr.mxu0 0.0
    %3597 = vmatpush1.msra.mxu0 0.0
    %3598 = vmatprep.subr.mxu0 0.0
    %3599 = vmatpush1.msra.mxu0 0.0
    %3600 = vmatprep.subr.mxu0 0.0
    %3601 = vmatpush1.msra.mxu0 0.0
    %3602 = vmatprep.mubr.f32.mxu0 0.0
    %3603 = vmatmul.mubr.f32.gmra.mrb[0].mxu0 %v3514
    %v3604 = vpop.f32.mrb[0].mxu0
    %v3605 = vadd.f32 %v3536, %v3604
    %v3606 = vpop.f32.mrb[0].mxu0
    %3607 = vdwg.mxu0
    %v3608 = vxor.u32 %v3605, 2147483648
    %v3609 = vmul.f32 %v3608, 1.442695
    %v3610 = vpow.pop %v3609
    %v3611 = vadd.f32 %v3610, 1.0
    %v3612 = vrcp.pop %v3611
    %v3613 = vmul.f32 1.0, %v3612
    %vm3614 = vcmask 39936
    %3615 = vst.msk [vmem:[%s6] sm:$0xff] %vm3614, %v3613
    // Predicated region
    $region30: #{lstm_forward.1} parent=1 // pred_check
      _
    $region31: #{lstm_forward.1} parent=1 // pred_check_branch
      %3617 = sbr.rel (0) target = $region33
    $region32: #{lstm_forward.1} parent=1 // pred_region
      _
    $region33: #{lstm_forward.1} parent=1 // pred_fallthru
      _
    // Predicated region
    $region34: #{lstm_forward.1} parent=1 // pred_check
      _
    $region35: #{lstm_forward.1} parent=1 // pred_check_branch
      %3619 = sbr.rel (0) target = $region37
    $region36: #{lstm_forward.1} parent=1 // pred_region
      _
    $region37: #{lstm_forward.1} parent=1 // pred_fallthru
      _
    %3620 = vsyncpa [#allocation3], 1

</llo_original>
